<compile_context>
chip_gen: v6e
topology: v6e:2x2x1
jax: 0.10.0
libtpu: 0.0.40
codegen_flags: <defaults>
</compile_context>

<pallas_src>
import functools

import jax
import jax.numpy as jnp
from jax import lax
from jax.experimental import pallas as pl
from jax.experimental.pallas import tpu as pltpu


_SQRT_HALF = 0.7071067811865476
_GELU_C = 0.7978845608028654  # sqrt(2/pi)


def _gelu(x):
    # exact (erf-based) GELU, matching torch.nn.GELU() default
    return 0.5 * x * (1.0 + lax.erf(x * _SQRT_HALF))


def _gelu_tanh(x):
    # tanh approximation; routes through the EUP instead of a long erf VALU chain
    return 0.5 * x * (1.0 + jnp.tanh(_GELU_C * (x + 0.044715 * (x * x * x))))


def _layernorm(x, gamma, beta, eps=1e-5):
    mu = jnp.mean(x, axis=-1, keepdims=True)
    xc = x - mu
    var = jnp.mean(xc * xc, axis=-1, keepdims=True)
    return xc * lax.rsqrt(var + eps) * gamma + beta


def _dec_layer_kernel(
    # inputs
    hv_ref, he_ref, ma_ref, mv_ref,
    # message MLP params (W3/b3 already carry the 1/scale factor)
    w1a_ref, w1b_ref, b1_ref, w2_ref, b2_ref, w3_ref, b3_ref,
    # norm1
    g1_ref, be1_ref,
    # FFN
    win_ref, bin_ref, wout_ref, bout_ref,
    # norm2
    g2_ref, be2_ref,
    # output
    out_ref,
    *, n_neighbors, approx_gelu,
):
    f32 = jnp.float32
    cdt = w1a_ref.dtype                         # MXU input dtype (bf16 or f32)
    K = n_neighbors
    tm, H = hv_ref.shape

    def act(x):
        if approx_gelu:
            return _gelu_tanh(x.astype(cdt))    # bf16 arithmetic on the fast path
        return _gelu(x)

    hv = hv_ref[...]                            # [tm, H]   f32 (residual precision)
    he = he_ref[...]                            # [tm*K, C] f32 (cast to cdt in-kernel)

    # cat([h_V_expand, h_E], -1) @ W1 + b1 == h_V @ W1[:H] + h_E @ W1[H:] + b1
    # (h_V contribution hoisted out of the neighbor axis)
    hv_part = jnp.dot(hv.astype(cdt), w1a_ref[...],
                      preferred_element_type=f32) + b1_ref[...]          # [tm, H]
    he_part = jnp.dot(he.astype(cdt), w1b_ref[...],
                      preferred_element_type=f32)                        # [tm*K, H]

    m = act((he_part.reshape(tm, K, H) + hv_part[:, None, :]).reshape(tm * K, H))
    m = act(jnp.dot(m, w2_ref[...], preferred_element_type=f32) + b2_ref[...])

    # Mask-weighted neighbor reduction BEFORE W3 (W3 is linear, identical math):
    #   sum_k mask * (m @ W3 + b3) == (sum_k mask * m) @ W3 + (sum_k mask) * b3
    ma = ma_ref[...]                                                     # [tm*K, 1] f32
    msum = jnp.sum((m * ma).reshape(tm, K, H), axis=1)                   # [tm, H]  f32
    mcnt = jnp.sum(ma.reshape(tm, K, 1), axis=1)                         # [tm, 1]
    dh = jnp.dot(msum.astype(cdt), w3_ref[...],
                 preferred_element_type=f32) + mcnt * b3_ref[...]        # [tm, H]

    x = _layernorm(hv + dh, g1_ref[...], be1_ref[...])    # norm1 (dropout = identity)

    # PositionWiseFeedForward
    h = act(jnp.dot(x.astype(cdt), win_ref[...], preferred_element_type=f32)
            + bin_ref[...])
    ff = jnp.dot(h, wout_ref[...], preferred_element_type=f32) + bout_ref[...]

    x2 = _layernorm(x + ff, g2_ref[...], be2_ref[...])    # norm2 (dropout = identity)

    out_ref[...] = (x2 * mv_ref[...]).astype(out_ref.dtype)   # mask_V over hidden dim


def dec_layer_pallas(h_V, h_E, mask_V, mask_attend, params, scale=30.0,
                     tm=None, compute_dtype=jnp.bfloat16):
    B, L, H = h_V.shape
    K, C = h_E.shape[2], h_E.shape[3]
    N = B * L
    f32 = jnp.float32
    isz = jnp.dtype(compute_dtype).itemsize

    # Activations stay f32 end-to-end in HBM; the bf16 cast for the MXU happens
    # in-kernel (no extra wrapper read+write pass over h_E).
    hv = h_V.reshape(N, H).astype(f32)
    he = h_E.reshape(N * K, C).astype(f32)           # sublane-dense slab
    ma = mask_attend.reshape(N * K, 1).astype(f32)    # unscaled; 1/scale is in W3/b3
    mv = mask_V.reshape(N, 1).astype(f32)
    # Note: K % 8 != 0 still works (Mosaic relayouts the (tm*K,H)->(tm,K,H)
    # regroup); pad K to a sublane multiple in production if it isn't one.

    inv_scale = 1.0 / float(scale)
    cw = lambda w: w.astype(compute_dtype)
    # split W1 into the part acting on h_V (first H rows) and on h_E (last C rows)
    weights = [
        cw(params["W1"][:H, :]), cw(params["W1"][H:, :]), params["b1"].astype(f32),
        cw(params["W2"]), params["b2"].astype(f32),
        cw(params["W3"] * inv_scale), (params["b3"] * inv_scale).astype(f32),
        params["g1"].astype(f32), params["be1"].astype(f32),
        cw(params["Win"]), params["bin"].astype(f32),
        cw(params["Wout"]), params["bout"].astype(f32),
        params["g2"].astype(f32), params["be2"].astype(f32),
    ]

    # Per-generation VMEM budget (~20% headroom below physical capacity).
    try:
        vmem_cap = int(pltpu.get_tpu_info().vmem_capacity_bytes)
    except Exception:
        vmem_cap = 64 * 1024 * 1024
    vmem_limit = max(32 * 1024 * 1024, min(int(0.80 * vmem_cap), 112 * 1024 * 1024))

    if tm is None:
        # Rough per-row VMEM footprint: double-buffered pipeline inputs + live
        # f32 intermediates (already counts double buffering — no extra 2x).
        per_row = (2 * K * C * 4            # h_E tile (f32, double-buffered)
                   + 2 * K * 128 * 4        # mask tile (lane-padded), double-buffered
                   + 3 * K * H * 4          # live message-MLP f32 intermediates
                   + 4 * H * 4              # h_V in + out tiles (double-buffered)
                   + 2 * 4 * H * 4          # FFN hidden
                   + 10 * H * 4)            # LayerNorm / misc temporaries
        weight_bytes = 2 * (((H + C) + 2 * H + 8 * H) * H * isz + 16 * H * 4)
        budget = int(0.6 * vmem_limit) - weight_bytes
        tm_cap = max(8, min(512, (budget // per_row) // 8 * 8))
        # >= ~4 row blocks so both v7x TensorCores get work and DMA overlaps compute
        tm = max(8, min(tm_cap, max(8, (pl.cdiv(N, 4) // 8) * 8)))
    assert tm % 8 == 0, "row tile must be a multiple of 8 sublanes"

    grid = (pl.cdiv(N, tm),)   # no input padding: last block is partial, OOB writes masked

    def full_spec(w):
        nd = w.ndim
        return pl.BlockSpec(w.shape, lambda i, _nd=nd: (0,) * _nd)

    in_specs = [
        pl.BlockSpec((tm, H), lambda i: (i, 0)),
        pl.BlockSpec((tm * K, C), lambda i: (i, 0)),
        pl.BlockSpec((tm * K, 1), lambda i: (i, 0)),
        pl.BlockSpec((tm, 1), lambda i: (i, 0)),
    ] + [full_spec(w) for w in weights]

    kernel = functools.partial(
        _dec_layer_kernel,
        n_neighbors=K,
        approx_gelu=(jnp.dtype(compute_dtype) != jnp.dtype(jnp.float32)),
    )

    out = pl.pallas_call(
        kernel,
        out_shape=jax.ShapeDtypeStruct((N, H), f32),
        grid_spec=pltpu.PrefetchScalarGridSpec(
            num_scalar_prefetch=0,
            grid=grid,
            in_specs=in_specs,
            out_specs=pl.BlockSpec((tm, H), lambda i: (i, 0)),
        ),
        compiler_params=pltpu.CompilerParams(
            dimension_semantics=("parallel",),
            vmem_limit_bytes=int(vmem_limit),
        ),
    )(hv, he, ma, mv, *weights)

    return out.reshape(B, L, H)


def dec_layer_ref(h_V, h_E, mask_V, mask_attend, params, scale=30.0):
    """Pure-JAX reference reproducing the PyTorch forward (eval mode)."""
    B, L, H = h_V.shape
    K = h_E.shape[2]
    h_V_expand = jnp.broadcast_to(h_V[:, :, None, :], (B, L, K, H))
    h_EV = jnp.concatenate([h_V_expand, h_E], axis=-1)
    m = _gelu(h_EV @ params["W1"] + params["b1"][0])
    m = _gelu(m @ params["W2"] + params["b2"][0])
    m = m @ params["W3"] + params["b3"][0]
    m = mask_attend[..., None] * m
    dh = jnp.sum(m, axis=-2) / scale
    x = _layernorm(h_V + dh, params["g1"][0], params["be1"][0])
    h = _gelu(x @ params["Win"] + params["bin"][0])
    ff = h @ params["Wout"] + params["bout"][0]
    x2 = _layernorm(x + ff, params["g2"][0], params["be2"][0])
    return mask_V[..., None] * x2


def init_params(key, num_hidden, num_in):
    H, C = num_hidden, num_in
    ks = jax.random.split(key, 10)
    s = 0.05
    return {
        "W1": s * jax.random.normal(ks[0], (H + C, H), jnp.float32),
        "b1": s * jax.random.normal(ks[1], (1, H), jnp.float32),
        "W2": s * jax.random.normal(ks[2], (H, H), jnp.float32),
        "b2": s * jax.random.normal(ks[3], (1, H), jnp.float32),
        "W3": s * jax.random.normal(ks[4], (H, H), jnp.float32),
        "b3": s * jax.random.normal(ks[5], (1, H), jnp.float32),
        "g1": jnp.ones((1, H), jnp.float32),
        "be1": jnp.zeros((1, H), jnp.float32),
        "Win": s * jax.random.normal(ks[6], (H, 4 * H), jnp.float32),
        "bin": s * jax.random.normal(ks[7], (1, 4 * H), jnp.float32),
        "Wout": s * jax.random.normal(ks[8], (4 * H, H), jnp.float32),
        "bout": s * jax.random.normal(ks[9], (1, H), jnp.float32),
        "g2": jnp.ones((1, H), jnp.float32),
        "be2": jnp.zeros((1, H), jnp.float32),
    }


if __name__ == "__main__":
    B, L, K = 2, 100, 8          # batch, residues, neighbors  (N = 200 rows)
    H, C = 32, 32                # num_hidden, num_in
    scale = 30.0

    key = jax.random.PRNGKey(0)
    k_hv, k_he, k_ma, k_mv, k_p = jax.random.split(key, 5)

    h_V = jax.random.normal(k_hv, (B, L, H), jnp.float32)
    h_E = jax.random.normal(k_he, (B, L, K, C), jnp.float32)
    mask_attend = (jax.random.uniform(k_ma, (B, L, K)) > 0.2).astype(jnp.float32)
    mask_V = (jax.random.uniform(k_mv, (B, L)) > 0.1).astype(jnp.float32)

    params = init_params(k_p, H, C)
    ref = dec_layer_ref(h_V, h_E, mask_V, mask_attend, params, scale=scale)

    # fast path: auto tile size, bf16 MXU + bf16 tanh-GELU, f32 accumulation,
    # no input padding (partial last block, OOB writes masked).
    out_bf16 = dec_layer_pallas(h_V, h_E, mask_V, mask_attend, params,
                                scale=scale, tm=None, compute_dtype=jnp.bfloat16)
    out_bf16 = jax.block_until_ready(out_bf16)
    assert out_bf16.shape == (B, L, H)
    err_bf16 = float(jnp.max(jnp.abs(out_bf16 - ref)))
    assert jnp.allclose(out_bf16, ref, atol=1e-1, rtol=1e-1), err_bf16

    # exact path: f32 everywhere, erf GELU, explicit tm=64 to exercise a
    # multi-step grid with a partial tail block (200 = 3*64 + 8).
    out_f32 = dec_layer_pallas(h_V, h_E, mask_V, mask_attend, params,
                               scale=scale, tm=64, compute_dtype=jnp.float32)
    out_f32 = jax.block_until_ready(out_f32)
    err_f32 = float(jnp.max(jnp.abs(out_f32 - ref)))
    assert jnp.allclose(out_f32, ref, atol=5e-4, rtol=5e-4), err_f32

    print("KERNEL_OK")
</pallas_src>

<mosaic_0001>
module attributes {stable_mosaic.version = 11 : i64} {
  func.func @_dec_layer_kernel(%arg0: i32, %arg1: memref<48x32xf32, #tpu.memory_space<vmem>>, %arg2: memref<384x32xf32, #tpu.memory_space<vmem>>, %arg3: memref<384x1xf32, #tpu.memory_space<vmem>>, %arg4: memref<48x1xf32, #tpu.memory_space<vmem>>, %arg5: memref<32x32xbf16, #tpu.memory_space<vmem>>, %arg6: memref<32x32xbf16, #tpu.memory_space<vmem>>, %arg7: memref<1x32xf32, #tpu.memory_space<vmem>>, %arg8: memref<32x32xbf16, #tpu.memory_space<vmem>>, %arg9: memref<1x32xf32, #tpu.memory_space<vmem>>, %arg10: memref<32x32xbf16, #tpu.memory_space<vmem>>, %arg11: memref<1x32xf32, #tpu.memory_space<vmem>>, %arg12: memref<1x32xf32, #tpu.memory_space<vmem>>, %arg13: memref<1x32xf32, #tpu.memory_space<vmem>>, %arg14: memref<32x128xbf16, #tpu.memory_space<vmem>>, %arg15: memref<1x128xf32, #tpu.memory_space<vmem>>, %arg16: memref<128x32xbf16, #tpu.memory_space<vmem>>, %arg17: memref<1x32xf32, #tpu.memory_space<vmem>>, %arg18: memref<1x32xf32, #tpu.memory_space<vmem>>, %arg19: memref<1x32xf32, #tpu.memory_space<vmem>>, %arg20: memref<48x32xf32, #tpu.memory_space<vmem>>) attributes {dimension_semantics = [#tpu.dimension_semantics<parallel>], iteration_bounds = array<i64: 5>, scalar_prefetch = 0 : i64, scratch_operands = 0 : i64, tpu.core_type = #tpu.core_type<tc>, window_params = [{transform_indices = @transform_0, window_bounds = array<i64: 48, 32>}, {transform_indices = @transform_1, window_bounds = array<i64: 384, 32>}, {transform_indices = @transform_2, window_bounds = array<i64: 384, 1>}, {transform_indices = @transform_3, window_bounds = array<i64: 48, 1>}, {pipeline_mode = #tpu.pipeline_mode<synchronous>, transform_indices = @transform_4, window_bounds = array<i64: 32, 32>}, {pipeline_mode = #tpu.pipeline_mode<synchronous>, transform_indices = @transform_5, window_bounds = array<i64: 32, 32>}, {pipeline_mode = #tpu.pipeline_mode<synchronous>, transform_indices = @transform_6, window_bounds = array<i64: 1, 32>}, {pipeline_mode = #tpu.pipeline_mode<synchronous>, transform_indices = @transform_7, window_bounds = array<i64: 32, 32>}, {pipeline_mode = #tpu.pipeline_mode<synchronous>, transform_indices = @transform_8, window_bounds = array<i64: 1, 32>}, {pipeline_mode = #tpu.pipeline_mode<synchronous>, transform_indices = @transform_9, window_bounds = array<i64: 32, 32>}, {pipeline_mode = #tpu.pipeline_mode<synchronous>, transform_indices = @transform_10, window_bounds = array<i64: 1, 32>}, {pipeline_mode = #tpu.pipeline_mode<synchronous>, transform_indices = @transform_11, window_bounds = array<i64: 1, 32>}, {pipeline_mode = #tpu.pipeline_mode<synchronous>, transform_indices = @transform_12, window_bounds = array<i64: 1, 32>}, {pipeline_mode = #tpu.pipeline_mode<synchronous>, transform_indices = @transform_13, window_bounds = array<i64: 32, 128>}, {pipeline_mode = #tpu.pipeline_mode<synchronous>, transform_indices = @transform_14, window_bounds = array<i64: 1, 128>}, {pipeline_mode = #tpu.pipeline_mode<synchronous>, transform_indices = @transform_15, window_bounds = array<i64: 128, 32>}, {pipeline_mode = #tpu.pipeline_mode<synchronous>, transform_indices = @transform_16, window_bounds = array<i64: 1, 32>}, {pipeline_mode = #tpu.pipeline_mode<synchronous>, transform_indices = @transform_17, window_bounds = array<i64: 1, 32>}, {pipeline_mode = #tpu.pipeline_mode<synchronous>, transform_indices = @transform_18, window_bounds = array<i64: 1, 32>}, {transform_indices = @transform_19, window_bounds = array<i64: 48, 32>}]} {
    %c0 = arith.constant 0 : index
    %c0_0 = arith.constant 0 : index
    %0 = vector.load %arg1[%c0, %c0_0] : memref<48x32xf32, #tpu.memory_space<vmem>>, vector<48x32xf32>
    %c0_1 = arith.constant 0 : index
    %c0_2 = arith.constant 0 : index
    %1 = vector.load %arg2[%c0_1, %c0_2] : memref<384x32xf32, #tpu.memory_space<vmem>>, vector<384x32xf32>
    %2 = arith.truncf %0 : vector<48x32xf32> to vector<48x32xbf16>
    %c0_3 = arith.constant 0 : index
    %c0_4 = arith.constant 0 : index
    %3 = vector.load %arg5[%c0_3, %c0_4] : memref<32x32xbf16, #tpu.memory_space<vmem>>, vector<32x32xbf16>
    %cst = arith.constant dense<0.000000e+00> : vector<48x32xf32>
    %4 = tpu.matmul %2, %3, %cst {dimension_numbers = #tpu.dot_dimension_numbers<[1], [0], [0], [1], [0, 0, 1, 1], [], []>} : vector<48x32xbf16>, vector<32x32xbf16>, vector<48x32xf32> -> vector<48x32xf32>
    %c0_5 = arith.constant 0 : index
    %c0_6 = arith.constant 0 : index
    %5 = vector.load %arg7[%c0_5, %c0_6] : memref<1x32xf32, #tpu.memory_space<vmem>>, vector<1x32xf32>
    %6 = vector.broadcast %5 : vector<1x32xf32> to vector<48x32xf32>
    %7 = arith.addf %4, %6 : vector<48x32xf32>
    %8 = arith.truncf %1 : vector<384x32xf32> to vector<384x32xbf16>
    %c0_7 = arith.constant 0 : index
    %c0_8 = arith.constant 0 : index
    %9 = vector.load %arg6[%c0_7, %c0_8] : memref<32x32xbf16, #tpu.memory_space<vmem>>, vector<32x32xbf16>
    %cst_9 = arith.constant dense<0.000000e+00> : vector<384x32xf32>
    %10 = tpu.matmul %8, %9, %cst_9 {dimension_numbers = #tpu.dot_dimension_numbers<[1], [0], [0], [1], [0, 0, 1, 1], [], []>} : vector<384x32xbf16>, vector<32x32xbf16>, vector<384x32xf32> -> vector<384x32xf32>
    %11 = vector.shape_cast %10 : vector<384x32xf32> to vector<48x8x32xf32>
    %12 = vector.shape_cast %7 : vector<48x32xf32> to vector<48x1x32xf32>
    %13 = vector.broadcast %12 : vector<48x1x32xf32> to vector<48x8x32xf32>
    %14 = arith.addf %11, %13 : vector<48x8x32xf32>
    %15 = vector.shape_cast %14 : vector<48x8x32xf32> to vector<384x32xf32>
    %16 = arith.truncf %15 : vector<384x32xf32> to vector<384x32xbf16>
    %cst_10 = arith.constant 5.000000e-01 : bf16
    %17 = vector.broadcast %cst_10 : bf16 to vector<384x32xbf16>
    %18 = arith.mulf %17, %16 : vector<384x32xbf16>
    %19 = arith.mulf %16, %16 : vector<384x32xbf16>
    %20 = arith.mulf %19, %16 : vector<384x32xbf16>
    %cst_11 = arith.constant 4.467770e-02 : bf16
    %21 = vector.broadcast %cst_11 : bf16 to vector<384x32xbf16>
    %22 = arith.mulf %21, %20 : vector<384x32xbf16>
    %23 = arith.addf %16, %22 : vector<384x32xbf16>
    %cst_12 = arith.constant 7.968750e-01 : bf16
    %24 = vector.broadcast %cst_12 : bf16 to vector<384x32xbf16>
    %25 = arith.mulf %24, %23 : vector<384x32xbf16>
    %26 = math.tanh %25 : vector<384x32xbf16>
    %cst_13 = arith.constant 1.000000e+00 : bf16
    %27 = vector.broadcast %cst_13 : bf16 to vector<384x32xbf16>
    %28 = arith.addf %27, %26 : vector<384x32xbf16>
    %29 = arith.mulf %18, %28 : vector<384x32xbf16>
    %c0_14 = arith.constant 0 : index
    %c0_15 = arith.constant 0 : index
    %30 = vector.load %arg8[%c0_14, %c0_15] : memref<32x32xbf16, #tpu.memory_space<vmem>>, vector<32x32xbf16>
    %cst_16 = arith.constant dense<0.000000e+00> : vector<384x32xf32>
    %31 = tpu.matmul %29, %30, %cst_16 {dimension_numbers = #tpu.dot_dimension_numbers<[1], [0], [0], [1], [0, 0, 1, 1], [], []>} : vector<384x32xbf16>, vector<32x32xbf16>, vector<384x32xf32> -> vector<384x32xf32>
    %c0_17 = arith.constant 0 : index
    %c0_18 = arith.constant 0 : index
    %32 = vector.load %arg9[%c0_17, %c0_18] : memref<1x32xf32, #tpu.memory_space<vmem>>, vector<1x32xf32>
    %33 = vector.broadcast %32 : vector<1x32xf32> to vector<384x32xf32>
    %34 = arith.addf %31, %33 : vector<384x32xf32>
    %35 = arith.truncf %34 : vector<384x32xf32> to vector<384x32xbf16>
    %cst_19 = arith.constant 5.000000e-01 : bf16
    %36 = vector.broadcast %cst_19 : bf16 to vector<384x32xbf16>
    %37 = arith.mulf %36, %35 : vector<384x32xbf16>
    %38 = arith.mulf %35, %35 : vector<384x32xbf16>
    %39 = arith.mulf %38, %35 : vector<384x32xbf16>
    %cst_20 = arith.constant 4.467770e-02 : bf16
    %40 = vector.broadcast %cst_20 : bf16 to vector<384x32xbf16>
    %41 = arith.mulf %40, %39 : vector<384x32xbf16>
    %42 = arith.addf %35, %41 : vector<384x32xbf16>
    %cst_21 = arith.constant 7.968750e-01 : bf16
    %43 = vector.broadcast %cst_21 : bf16 to vector<384x32xbf16>
    %44 = arith.mulf %43, %42 : vector<384x32xbf16>
    %45 = math.tanh %44 : vector<384x32xbf16>
    %cst_22 = arith.constant 1.000000e+00 : bf16
    %46 = vector.broadcast %cst_22 : bf16 to vector<384x32xbf16>
    %47 = arith.addf %46, %45 : vector<384x32xbf16>
    %48 = arith.mulf %37, %47 : vector<384x32xbf16>
    %c0_23 = arith.constant 0 : index
    %c0_24 = arith.constant 0 : index
    %49 = vector.load %arg3[%c0_23, %c0_24] : memref<384x1xf32, #tpu.memory_space<vmem>>, vector<384x1xf32>
    %50 = arith.extf %48 : vector<384x32xbf16> to vector<384x32xf32>
    %51 = vector.broadcast %49 : vector<384x1xf32> to vector<384x32xf32>
    %52 = arith.mulf %50, %51 : vector<384x32xf32>
    %53 = vector.shape_cast %52 : vector<384x32xf32> to vector<48x8x32xf32>
    %cst_25 = arith.constant dense<0.000000e+00> : vector<48x32xf32>
    %54 = vector.multi_reduction <add>, %53, %cst_25 [1] : vector<48x8x32xf32> to vector<48x32xf32>
    %55 = vector.shape_cast %49 : vector<384x1xf32> to vector<48x8x1xf32>
    %cst_26 = arith.constant dense<0.000000e+00> : vector<48x1xf32>
    %56 = vector.multi_reduction <add>, %55, %cst_26 [1] : vector<48x8x1xf32> to vector<48x1xf32>
    %57 = arith.truncf %54 : vector<48x32xf32> to vector<48x32xbf16>
    %c0_27 = arith.constant 0 : index
    %c0_28 = arith.constant 0 : index
    %58 = vector.load %arg10[%c0_27, %c0_28] : memref<32x32xbf16, #tpu.memory_space<vmem>>, vector<32x32xbf16>
    %cst_29 = arith.constant dense<0.000000e+00> : vector<48x32xf32>
    %59 = tpu.matmul %57, %58, %cst_29 {dimension_numbers = #tpu.dot_dimension_numbers<[1], [0], [0], [1], [0, 0, 1, 1], [], []>} : vector<48x32xbf16>, vector<32x32xbf16>, vector<48x32xf32> -> vector<48x32xf32>
    %c0_30 = arith.constant 0 : index
    %c0_31 = arith.constant 0 : index
    %60 = vector.load %arg11[%c0_30, %c0_31] : memref<1x32xf32, #tpu.memory_space<vmem>>, vector<1x32xf32>
    %61 = vector.broadcast %56 : vector<48x1xf32> to vector<48x32xf32>
    %62 = vector.broadcast %60 : vector<1x32xf32> to vector<48x32xf32>
    %63 = arith.mulf %61, %62 : vector<48x32xf32>
    %64 = arith.addf %59, %63 : vector<48x32xf32>
    %65 = arith.addf %0, %64 : vector<48x32xf32>
    %c0_32 = arith.constant 0 : index
    %c0_33 = arith.constant 0 : index
    %66 = vector.load %arg12[%c0_32, %c0_33] : memref<1x32xf32, #tpu.memory_space<vmem>>, vector<1x32xf32>
    %c0_34 = arith.constant 0 : index
    %c0_35 = arith.constant 0 : index
    %67 = vector.load %arg13[%c0_34, %c0_35] : memref<1x32xf32, #tpu.memory_space<vmem>>, vector<1x32xf32>
    %cst_36 = arith.constant dense<0.000000e+00> : vector<48xf32>
    %68 = vector.multi_reduction <add>, %65, %cst_36 [1] : vector<48x32xf32> to vector<48xf32>
    %69 = vector.shape_cast %68 : vector<48xf32> to vector<48x1xf32>
    %cst_37 = arith.constant 3.200000e+01 : f32
    %70 = vector.broadcast %cst_37 : f32 to vector<48x1xf32>
    %71 = arith.divf %69, %70 : vector<48x1xf32>
    %72 = vector.broadcast %71 : vector<48x1xf32> to vector<48x32xf32>
    %73 = arith.subf %65, %72 : vector<48x32xf32>
    %74 = arith.mulf %73, %73 : vector<48x32xf32>
    %cst_38 = arith.constant dense<0.000000e+00> : vector<48xf32>
    %75 = vector.multi_reduction <add>, %74, %cst_38 [1] : vector<48x32xf32> to vector<48xf32>
    %76 = vector.shape_cast %75 : vector<48xf32> to vector<48x1xf32>
    %cst_39 = arith.constant 3.200000e+01 : f32
    %77 = vector.broadcast %cst_39 : f32 to vector<48x1xf32>
    %78 = arith.divf %76, %77 : vector<48x1xf32>
    %cst_40 = arith.constant 9.99999974E-6 : f32
    %79 = vector.broadcast %cst_40 : f32 to vector<48x1xf32>
    %80 = arith.addf %78, %79 : vector<48x1xf32>
    %81 = math.rsqrt %80 : vector<48x1xf32>
    %82 = vector.broadcast %81 : vector<48x1xf32> to vector<48x32xf32>
    %83 = arith.mulf %73, %82 : vector<48x32xf32>
    %84 = vector.broadcast %66 : vector<1x32xf32> to vector<48x32xf32>
    %85 = arith.mulf %83, %84 : vector<48x32xf32>
    %86 = vector.broadcast %67 : vector<1x32xf32> to vector<48x32xf32>
    %87 = arith.addf %85, %86 : vector<48x32xf32>
    %88 = arith.truncf %87 : vector<48x32xf32> to vector<48x32xbf16>
    %c0_41 = arith.constant 0 : index
    %c0_42 = arith.constant 0 : index
    %89 = vector.load %arg14[%c0_41, %c0_42] : memref<32x128xbf16, #tpu.memory_space<vmem>>, vector<32x128xbf16>
    %cst_43 = arith.constant dense<0.000000e+00> : vector<48x128xf32>
    %90 = tpu.matmul %88, %89, %cst_43 {dimension_numbers = #tpu.dot_dimension_numbers<[1], [0], [0], [1], [0, 0, 1, 1], [], []>} : vector<48x32xbf16>, vector<32x128xbf16>, vector<48x128xf32> -> vector<48x128xf32>
    %c0_44 = arith.constant 0 : index
    %c0_45 = arith.constant 0 : index
    %91 = vector.load %arg15[%c0_44, %c0_45] : memref<1x128xf32, #tpu.memory_space<vmem>>, vector<1x128xf32>
    %92 = vector.broadcast %91 : vector<1x128xf32> to vector<48x128xf32>
    %93 = arith.addf %90, %92 : vector<48x128xf32>
    %94 = arith.truncf %93 : vector<48x128xf32> to vector<48x128xbf16>
    %cst_46 = arith.constant 5.000000e-01 : bf16
    %95 = vector.broadcast %cst_46 : bf16 to vector<48x128xbf16>
    %96 = arith.mulf %95, %94 : vector<48x128xbf16>
    %97 = arith.mulf %94, %94 : vector<48x128xbf16>
    %98 = arith.mulf %97, %94 : vector<48x128xbf16>
    %cst_47 = arith.constant 4.467770e-02 : bf16
    %99 = vector.broadcast %cst_47 : bf16 to vector<48x128xbf16>
    %100 = arith.mulf %99, %98 : vector<48x128xbf16>
    %101 = arith.addf %94, %100 : vector<48x128xbf16>
    %cst_48 = arith.constant 7.968750e-01 : bf16
    %102 = vector.broadcast %cst_48 : bf16 to vector<48x128xbf16>
    %103 = arith.mulf %102, %101 : vector<48x128xbf16>
    %104 = math.tanh %103 : vector<48x128xbf16>
    %cst_49 = arith.constant 1.000000e+00 : bf16
    %105 = vector.broadcast %cst_49 : bf16 to vector<48x128xbf16>
    %106 = arith.addf %105, %104 : vector<48x128xbf16>
    %107 = arith.mulf %96, %106 : vector<48x128xbf16>
    %c0_50 = arith.constant 0 : index
    %c0_51 = arith.constant 0 : index
    %108 = vector.load %arg16[%c0_50, %c0_51] : memref<128x32xbf16, #tpu.memory_space<vmem>>, vector<128x32xbf16>
    %cst_52 = arith.constant dense<0.000000e+00> : vector<48x32xf32>
    %109 = tpu.matmul %107, %108, %cst_52 {dimension_numbers = #tpu.dot_dimension_numbers<[1], [0], [0], [1], [0, 0, 1, 1], [], []>} : vector<48x128xbf16>, vector<128x32xbf16>, vector<48x32xf32> -> vector<48x32xf32>
    %c0_53 = arith.constant 0 : index
    %c0_54 = arith.constant 0 : index
    %110 = vector.load %arg17[%c0_53, %c0_54] : memref<1x32xf32, #tpu.memory_space<vmem>>, vector<1x32xf32>
    %111 = vector.broadcast %110 : vector<1x32xf32> to vector<48x32xf32>
    %112 = arith.addf %109, %111 : vector<48x32xf32>
    %113 = arith.addf %87, %112 : vector<48x32xf32>
    %c0_55 = arith.constant 0 : index
    %c0_56 = arith.constant 0 : index
    %114 = vector.load %arg18[%c0_55, %c0_56] : memref<1x32xf32, #tpu.memory_space<vmem>>, vector<1x32xf32>
    %c0_57 = arith.constant 0 : index
    %c0_58 = arith.constant 0 : index
    %115 = vector.load %arg19[%c0_57, %c0_58] : memref<1x32xf32, #tpu.memory_space<vmem>>, vector<1x32xf32>
    %cst_59 = arith.constant dense<0.000000e+00> : vector<48xf32>
    %116 = vector.multi_reduction <add>, %113, %cst_59 [1] : vector<48x32xf32> to vector<48xf32>
    %117 = vector.shape_cast %116 : vector<48xf32> to vector<48x1xf32>
    %cst_60 = arith.constant 3.200000e+01 : f32
    %118 = vector.broadcast %cst_60 : f32 to vector<48x1xf32>
    %119 = arith.divf %117, %118 : vector<48x1xf32>
    %120 = vector.broadcast %119 : vector<48x1xf32> to vector<48x32xf32>
    %121 = arith.subf %113, %120 : vector<48x32xf32>
    %122 = arith.mulf %121, %121 : vector<48x32xf32>
    %cst_61 = arith.constant dense<0.000000e+00> : vector<48xf32>
    %123 = vector.multi_reduction <add>, %122, %cst_61 [1] : vector<48x32xf32> to vector<48xf32>
    %124 = vector.shape_cast %123 : vector<48xf32> to vector<48x1xf32>
    %cst_62 = arith.constant 3.200000e+01 : f32
    %125 = vector.broadcast %cst_62 : f32 to vector<48x1xf32>
    %126 = arith.divf %124, %125 : vector<48x1xf32>
    %cst_63 = arith.constant 9.99999974E-6 : f32
    %127 = vector.broadcast %cst_63 : f32 to vector<48x1xf32>
    %128 = arith.addf %126, %127 : vector<48x1xf32>
    %129 = math.rsqrt %128 : vector<48x1xf32>
    %130 = vector.broadcast %129 : vector<48x1xf32> to vector<48x32xf32>
    %131 = arith.mulf %121, %130 : vector<48x32xf32>
    %132 = vector.broadcast %114 : vector<1x32xf32> to vector<48x32xf32>
    %133 = arith.mulf %131, %132 : vector<48x32xf32>
    %134 = vector.broadcast %115 : vector<1x32xf32> to vector<48x32xf32>
    %135 = arith.addf %133, %134 : vector<48x32xf32>
    %c0_64 = arith.constant 0 : index
    %c0_65 = arith.constant 0 : index
    %136 = vector.load %arg4[%c0_64, %c0_65] : memref<48x1xf32, #tpu.memory_space<vmem>>, vector<48x1xf32>
    %137 = vector.broadcast %136 : vector<48x1xf32> to vector<48x32xf32>
    %138 = arith.mulf %135, %137 : vector<48x32xf32>
    %c0_66 = arith.constant 0 : index
    %c0_67 = arith.constant 0 : index
    %139 = vector.load %arg20[%c0_66, %c0_67] : memref<48x32xf32, #tpu.memory_space<vmem>>, vector<48x32xf32>
    tpu.vector_store %arg20[%c0_66, %c0_67], %138 {strides = array<i32>} : memref<48x32xf32, #tpu.memory_space<vmem>>, vector<48x32xf32>,
    return
  }
  func.func @transform_0(%arg0: i32) -> (i32, i32) {
    %c0_i32 = arith.constant 0 : i32
    %c0_i32_0 = arith.constant 0 : i32
    return %arg0, %c0_i32 : i32, i32
  }
  func.func @transform_1(%arg0: i32) -> (i32, i32) {
    %c0_i32 = arith.constant 0 : i32
    %c0_i32_0 = arith.constant 0 : i32
    return %arg0, %c0_i32 : i32, i32
  }
  func.func @transform_2(%arg0: i32) -> (i32, i32) {
    %c0_i32 = arith.constant 0 : i32
    %c0_i32_0 = arith.constant 0 : i32
    return %arg0, %c0_i32 : i32, i32
  }
  func.func @transform_3(%arg0: i32) -> (i32, i32) {
    %c0_i32 = arith.constant 0 : i32
    %c0_i32_0 = arith.constant 0 : i32
    return %arg0, %c0_i32 : i32, i32
  }
  func.func @transform_4(%arg0: i32) -> (i32, i32) {
    %c0_i32 = arith.constant 0 : i32
    %c0_i32_0 = arith.constant 0 : i32
    %c0_i32_1 = arith.constant 0 : i32
    return %c0_i32, %c0_i32_0 : i32, i32
  }
  func.func @transform_5(%arg0: i32) -> (i32, i32) {
    %c0_i32 = arith.constant 0 : i32
    %c0_i32_0 = arith.constant 0 : i32
    %c0_i32_1 = arith.constant 0 : i32
    return %c0_i32, %c0_i32_0 : i32, i32
  }
  func.func @transform_6(%arg0: i32) -> (i32, i32) {
    %c0_i32 = arith.constant 0 : i32
    %c0_i32_0 = arith.constant 0 : i32
    %c0_i32_1 = arith.constant 0 : i32
    return %c0_i32, %c0_i32_0 : i32, i32
  }
  func.func @transform_7(%arg0: i32) -> (i32, i32) {
    %c0_i32 = arith.constant 0 : i32
    %c0_i32_0 = arith.constant 0 : i32
    %c0_i32_1 = arith.constant 0 : i32
    return %c0_i32, %c0_i32_0 : i32, i32
  }
  func.func @transform_8(%arg0: i32) -> (i32, i32) {
    %c0_i32 = arith.constant 0 : i32
    %c0_i32_0 = arith.constant 0 : i32
    %c0_i32_1 = arith.constant 0 : i32
    return %c0_i32, %c0_i32_0 : i32, i32
  }
  func.func @transform_9(%arg0: i32) -> (i32, i32) {
    %c0_i32 = arith.constant 0 : i32
    %c0_i32_0 = arith.constant 0 : i32
    %c0_i32_1 = arith.constant 0 : i32
    return %c0_i32, %c0_i32_0 : i32, i32
  }
  func.func @transform_10(%arg0: i32) -> (i32, i32) {
    %c0_i32 = arith.constant 0 : i32
    %c0_i32_0 = arith.constant 0 : i32
    %c0_i32_1 = arith.constant 0 : i32
    return %c0_i32, %c0_i32_0 : i32, i32
  }
  func.func @transform_11(%arg0: i32) -> (i32, i32) {
    %c0_i32 = arith.constant 0 : i32
    %c0_i32_0 = arith.constant 0 : i32
    %c0_i32_1 = arith.constant 0 : i32
    return %c0_i32, %c0_i32_0 : i32, i32
  }
  func.func @transform_12(%arg0: i32) -> (i32, i32) {
    %c0_i32 = arith.constant 0 : i32
    %c0_i32_0 = arith.constant 0 : i32
    %c0_i32_1 = arith.constant 0 : i32
    return %c0_i32, %c0_i32_0 : i32, i32
  }
  func.func @transform_13(%arg0: i32) -> (i32, i32) {
    %c0_i32 = arith.constant 0 : i32
    %c0_i32_0 = arith.constant 0 : i32
    %c0_i32_1 = arith.constant 0 : i32
    return %c0_i32, %c0_i32_0 : i32, i32
  }
  func.func @transform_14(%arg0: i32) -> (i32, i32) {
    %c0_i32 = arith.constant 0 : i32
    %c0_i32_0 = arith.constant 0 : i32
    %c0_i32_1 = arith.constant 0 : i32
    return %c0_i32, %c0_i32_0 : i32, i32
  }
  func.func @transform_15(%arg0: i32) -> (i32, i32) {
    %c0_i32 = arith.constant 0 : i32
    %c0_i32_0 = arith.constant 0 : i32
    %c0_i32_1 = arith.constant 0 : i32
    return %c0_i32, %c0_i32_0 : i32, i32
  }
  func.func @transform_16(%arg0: i32) -> (i32, i32) {
    %c0_i32 = arith.constant 0 : i32
    %c0_i32_0 = arith.constant 0 : i32
    %c0_i32_1 = arith.constant 0 : i32
    return %c0_i32, %c0_i32_0 : i32, i32
  }
  func.func @transform_17(%arg0: i32) -> (i32, i32) {
    %c0_i32 = arith.constant 0 : i32
    %c0_i32_0 = arith.constant 0 : i32
    %c0_i32_1 = arith.constant 0 : i32
    return %c0_i32, %c0_i32_0 : i32, i32
  }
  func.func @transform_18(%arg0: i32) -> (i32, i32) {
    %c0_i32 = arith.constant 0 : i32
    %c0_i32_0 = arith.constant 0 : i32
    %c0_i32_1 = arith.constant 0 : i32
    return %c0_i32, %c0_i32_0 : i32, i32
  }
  func.func @transform_19(%arg0: i32) -> (i32, i32) {
    %c0_i32 = arith.constant 0 : i32
    %c0_i32_0 = arith.constant 0 : i32
    return %arg0, %c0_i32 : i32, i32
  }
}

</mosaic_0001>

<llo_original>
// kernel: tpu_custom_call.1
$region0: #{tpu_custom_call.1}
  #allocation0 [shape = 'u32[]', space=smem, size = 0x4, offset = 0x4, fixed_abs, tag = 'smem constant byte address 0x4 - core index']
  #allocation1 [shape = 'u32[144,128]{1,0:T(1,128)}', space=vmem, size = 0x12000, scoped, tag = 'internal scratch']
  %s0 = inlined_call_operand.vmem [shape: f32[200,32], index: 0, kind: input, shape index: {}]
  %s1 = inlined_call_operand.vmem [shape: f32[1600,32], index: 1, kind: input, shape index: {}]
  %s2 = inlined_call_operand.vmem [shape: f32[1600,1], index: 2, kind: input, shape index: {}]
  %s3 = inlined_call_operand.vmem [shape: f32[200,1], index: 3, kind: input, shape index: {}]
  %s4 = inlined_call_operand.vmem [shape: bf16[32,32], index: 4, kind: input, shape index: {}]
  %s5 = inlined_call_operand.vmem [shape: bf16[32,32], index: 5, kind: input, shape index: {}]
  %s6 = inlined_call_operand.vmem [shape: f32[1,32], index: 6, kind: input, shape index: {}]
  %s7 = inlined_call_operand.vmem [shape: bf16[32,32], index: 7, kind: input, shape index: {}]
  %s8 = inlined_call_operand.vmem [shape: f32[1,32], index: 8, kind: input, shape index: {}]
  %s9 = inlined_call_operand.vmem [shape: bf16[32,32], index: 9, kind: input, shape index: {}]
  %s10 = inlined_call_operand.vmem [shape: f32[1,32], index: 10, kind: input, shape index: {}]
  %s11 = inlined_call_operand.vmem [shape: f32[1,32], index: 11, kind: input, shape index: {}]
  %s12 = inlined_call_operand.vmem [shape: f32[1,32], index: 12, kind: input, shape index: {}]
  %s13 = inlined_call_operand.vmem [shape: bf16[32,128], index: 13, kind: input, shape index: {}]
  %s14 = inlined_call_operand.vmem [shape: f32[1,128], index: 14, kind: input, shape index: {}]
  %s15 = inlined_call_operand.vmem [shape: bf16[128,32], index: 15, kind: input, shape index: {}]
  %s16 = inlined_call_operand.vmem [shape: f32[1,32], index: 16, kind: input, shape index: {}]
  %s17 = inlined_call_operand.vmem [shape: f32[1,32], index: 17, kind: input, shape index: {}]
  %s18 = inlined_call_operand.vmem [shape: f32[1,32], index: 18, kind: input, shape index: {}]
  %s19 = inlined_call_operand.vmem [shape: f32[200,32], index: 19, kind: output, shape index: {}]
  %s20 = sld [smem:[#allocation0]]
  $region157: #{tpu_custom_call.1} parent=0
    _
  %s22 = ssub.s32 1, %s20
  %s23 = scalar_select 0, %s22, %s20
  $region1: #{tpu_custom_call.1} parent=0
    #allocation2 [shape = 'u8[49152]{0}', space=vmem, size = 0xc000, scoped, tag = 'output window, operand 0']
    loop: start=0, step=1, limit=7
    $region2: #{tpu_custom_call.1} parent=1 // loop_pre_header
      _
    $region3: #{tpu_custom_call.1} parent=1 // loop_header
      %s25 = sphi 0, %s29
      %p26 = scmp.ge.s32.totalorder %s25, 7
      %s35 = sphi 0, %s37
      %s38 = sphi 0, %s35
      %s39 = sphi 0, %s38
      %s55 = sphi 0, %s39
      %s61 = sphi 0, %s63
      %s64 = sphi 0, %s61
      %s65 = sphi 0, %s64
      %s81 = sphi 0, %s65
      %s87 = sphi 0, %s89
      %s90 = sphi 0, %s87
      %s91 = sphi 0, %s90
      %s107 = sphi 0, %s91
      %s113 = sphi 0, %s115
      %s116 = sphi 0, %s113
      %s117 = sphi 0, %s116
      %s133 = sphi 0, %s117
      %s137 = sphi 0, %s137
      %s139 = sphi 0, %s137
      %s140 = sphi 0, %s139
      %s154 = sphi 0, %s140
      %s158 = sphi 0, %s158
      %s160 = sphi 0, %s158
      %s161 = sphi 0, %s160
      %s175 = sphi 0, %s161
      %s179 = sphi 0, %s179
      %s181 = sphi 0, %s179
      %s182 = sphi 0, %s181
      %s196 = sphi 0, %s182
      %s200 = sphi 0, %s200
      %s202 = sphi 0, %s200
      %s203 = sphi 0, %s202
      %s217 = sphi 0, %s203
      %s221 = sphi 0, %s221
      %s223 = sphi 0, %s221
      %s224 = sphi 0, %s223
      %s238 = sphi 0, %s224
      %s242 = sphi 0, %s242
      %s244 = sphi 0, %s242
      %s245 = sphi 0, %s244
      %s259 = sphi 0, %s245
      %s263 = sphi 0, %s263
      %s265 = sphi 0, %s263
      %s266 = sphi 0, %s265
      %s280 = sphi 0, %s266
      %s284 = sphi 0, %s284
      %s286 = sphi 0, %s284
      %s287 = sphi 0, %s286
      %s301 = sphi 0, %s287
      %s305 = sphi 0, %s305
      %s307 = sphi 0, %s305
      %s308 = sphi 0, %s307
      %s322 = sphi 0, %s308
      %s326 = sphi 0, %s326
      %s328 = sphi 0, %s326
      %s329 = sphi 0, %s328
      %s343 = sphi 0, %s329
      %s347 = sphi 0, %s347
      %s349 = sphi 0, %s347
      %s350 = sphi 0, %s349
      %s364 = sphi 0, %s350
      %s368 = sphi 0, %s368
      %s370 = sphi 0, %s368
      %s371 = sphi 0, %s370
      %s385 = sphi 0, %s371
      %s389 = sphi 0, %s389
      %s391 = sphi 0, %s389
      %s392 = sphi 0, %s391
      %s406 = sphi 0, %s392
      %s410 = sphi 0, %s410
      %s412 = sphi 0, %s410
      %s413 = sphi 0, %s412
      %s427 = sphi 0, %s413
      %s431 = sphi 0, %s431
      %s433 = sphi 0, %s431
      %s434 = sphi 0, %s433
      %s448 = sphi 0, %s434
      %s454 = sphi 0, %s456
      %s457 = sphi 0, %s454
      %s458 = sphi 0, %s457
      %s474 = sphi 0, %s458
    $region4: #{tpu_custom_call.1} parent=1 // loop_header_branch
      %28 = sbr.rel (%p26) target = $region8
    $region5: #{tpu_custom_call.1} parent=1 // loop_body
      %s30 = ssub.s32 %s25, 1
      %s31 = ssub.s32 %s25, 2
      %s32 = sadd.s32 %s25, 1
      %s33 = ssub.s32 %s25, %s32
      %p34 = scmp.eq.s32.totalorder %s33, 0
      %s36 = sadd.s32 %s35, 1
      %s37 = scalar_select %p34, %s35, %s36
      %p40 = pneg %p34
      %p41 = scmp.eq.s32.totalorder %s25, 4
      %p42 = por %p40, %p41
      %p43 = scmp.ne.s32.totalorder %s35, %s38
      %p44 = scmp.eq.s32.totalorder %s25, 0
      %p45 = por %p43, %p44
      %p46 = scmp.ne.s32.totalorder %s35, %s38
      %p47 = scmp.eq.s32.totalorder %s30, 4
      %p48 = por %p46, %p47
      %p49 = scmp.ne.s32.totalorder %s38, %s39
      %p50 = scmp.eq.s32.totalorder %s30, 0
      %p51 = por %p49, %p50
      %p52 = scmp.ne.s32.totalorder %s38, %s39
      %p53 = scmp.eq.s32.totalorder %s31, 4
      %p54 = por %p52, %p53
      %p56 = scmp.ne.s32.totalorder %s39, %s55
      %p57 = scmp.eq.s32.totalorder %s31, 0
      %p58 = por %p56, %p57
      %s59 = ssub.s32 %s25, %s32
      %p60 = scmp.eq.s32.totalorder %s59, 0
      %s62 = sadd.s32 %s61, 1
      %s63 = scalar_select %p60, %s61, %s62
      %p66 = pneg %p60
      %p67 = scmp.eq.s32.totalorder %s25, 4
      %p68 = por %p66, %p67
      %p69 = scmp.ne.s32.totalorder %s61, %s64
      %p70 = scmp.eq.s32.totalorder %s25, 0
      %p71 = por %p69, %p70
      %p72 = scmp.ne.s32.totalorder %s61, %s64
      %p73 = scmp.eq.s32.totalorder %s30, 4
      %p74 = por %p72, %p73
      %p75 = scmp.ne.s32.totalorder %s64, %s65
      %p76 = scmp.eq.s32.totalorder %s30, 0
      %p77 = por %p75, %p76
      %p78 = scmp.ne.s32.totalorder %s64, %s65
      %p79 = scmp.eq.s32.totalorder %s31, 4
      %p80 = por %p78, %p79
      %p82 = scmp.ne.s32.totalorder %s65, %s81
      %p83 = scmp.eq.s32.totalorder %s31, 0
      %p84 = por %p82, %p83
      %s85 = ssub.s32 %s25, %s32
      %p86 = scmp.eq.s32.totalorder %s85, 0
      %s88 = sadd.s32 %s87, 1
      %s89 = scalar_select %p86, %s87, %s88
      %p92 = pneg %p86
      %p93 = scmp.eq.s32.totalorder %s25, 4
      %p94 = por %p92, %p93
      %p95 = scmp.ne.s32.totalorder %s87, %s90
      %p96 = scmp.eq.s32.totalorder %s25, 0
      %p97 = por %p95, %p96
      %p98 = scmp.ne.s32.totalorder %s87, %s90
      %p99 = scmp.eq.s32.totalorder %s30, 4
      %p100 = por %p98, %p99
      %p101 = scmp.ne.s32.totalorder %s90, %s91
      %p102 = scmp.eq.s32.totalorder %s30, 0
      %p103 = por %p101, %p102
      %p104 = scmp.ne.s32.totalorder %s90, %s91
      %p105 = scmp.eq.s32.totalorder %s31, 4
      %p106 = por %p104, %p105
      %p108 = scmp.ne.s32.totalorder %s91, %s107
      %p109 = scmp.eq.s32.totalorder %s31, 0
      %p110 = por %p108, %p109
      %s111 = ssub.s32 %s25, %s32
      %p112 = scmp.eq.s32.totalorder %s111, 0
      %s114 = sadd.s32 %s113, 1
      %s115 = scalar_select %p112, %s113, %s114
      %p118 = pneg %p112
      %p119 = scmp.eq.s32.totalorder %s25, 4
      %p120 = por %p118, %p119
      %p121 = scmp.ne.s32.totalorder %s113, %s116
      %p122 = scmp.eq.s32.totalorder %s25, 0
      %p123 = por %p121, %p122
      %p124 = scmp.ne.s32.totalorder %s113, %s116
      %p125 = scmp.eq.s32.totalorder %s30, 4
      %p126 = por %p124, %p125
      %p127 = scmp.ne.s32.totalorder %s116, %s117
      %p128 = scmp.eq.s32.totalorder %s30, 0
      %p129 = por %p127, %p128
      %p130 = scmp.ne.s32.totalorder %s116, %s117
      %p131 = scmp.eq.s32.totalorder %s31, 4
      %p132 = por %p130, %p131
      %p134 = scmp.ne.s32.totalorder %s117, %s133
      %p135 = scmp.eq.s32.totalorder %s31, 0
      %p136 = por %p134, %p135
      %s138 = sadd.s32 %s137, 1
      %p141 = scmp.eq.s32.totalorder %s25, 4
      %p142 = scmp.ne.s32.totalorder %s137, %s139
      %p143 = scmp.eq.s32.totalorder %s25, 0
      %p144 = por %p142, %p143
      %p145 = scmp.ne.s32.totalorder %s137, %s139
      %p146 = scmp.eq.s32.totalorder %s30, 4
      %p147 = por %p145, %p146
      %p148 = scmp.ne.s32.totalorder %s139, %s140
      %p149 = scmp.eq.s32.totalorder %s30, 0
      %p150 = por %p148, %p149
      %p151 = scmp.ne.s32.totalorder %s139, %s140
      %p152 = scmp.eq.s32.totalorder %s31, 4
      %p153 = por %p151, %p152
      %p155 = scmp.ne.s32.totalorder %s140, %s154
      %p156 = scmp.eq.s32.totalorder %s31, 0
      %p157 = por %p155, %p156
      %s159 = sadd.s32 %s158, 1
      %p162 = scmp.eq.s32.totalorder %s25, 4
      %p163 = scmp.ne.s32.totalorder %s158, %s160
      %p164 = scmp.eq.s32.totalorder %s25, 0
      %p165 = por %p163, %p164
      %p166 = scmp.ne.s32.totalorder %s158, %s160
      %p167 = scmp.eq.s32.totalorder %s30, 4
      %p168 = por %p166, %p167
      %p169 = scmp.ne.s32.totalorder %s160, %s161
      %p170 = scmp.eq.s32.totalorder %s30, 0
      %p171 = por %p169, %p170
      %p172 = scmp.ne.s32.totalorder %s160, %s161
      %p173 = scmp.eq.s32.totalorder %s31, 4
      %p174 = por %p172, %p173
      %p176 = scmp.ne.s32.totalorder %s161, %s175
      %p177 = scmp.eq.s32.totalorder %s31, 0
      %p178 = por %p176, %p177
      %s180 = sadd.s32 %s179, 1
      %p183 = scmp.eq.s32.totalorder %s25, 4
      %p184 = scmp.ne.s32.totalorder %s179, %s181
      %p185 = scmp.eq.s32.totalorder %s25, 0
      %p186 = por %p184, %p185
      %p187 = scmp.ne.s32.totalorder %s179, %s181
      %p188 = scmp.eq.s32.totalorder %s30, 4
      %p189 = por %p187, %p188
      %p190 = scmp.ne.s32.totalorder %s181, %s182
      %p191 = scmp.eq.s32.totalorder %s30, 0
      %p192 = por %p190, %p191
      %p193 = scmp.ne.s32.totalorder %s181, %s182
      %p194 = scmp.eq.s32.totalorder %s31, 4
      %p195 = por %p193, %p194
      %p197 = scmp.ne.s32.totalorder %s182, %s196
      %p198 = scmp.eq.s32.totalorder %s31, 0
      %p199 = por %p197, %p198
      %s201 = sadd.s32 %s200, 1
      %p204 = scmp.eq.s32.totalorder %s25, 4
      %p205 = scmp.ne.s32.totalorder %s200, %s202
      %p206 = scmp.eq.s32.totalorder %s25, 0
      %p207 = por %p205, %p206
      %p208 = scmp.ne.s32.totalorder %s200, %s202
      %p209 = scmp.eq.s32.totalorder %s30, 4
      %p210 = por %p208, %p209
      %p211 = scmp.ne.s32.totalorder %s202, %s203
      %p212 = scmp.eq.s32.totalorder %s30, 0
      %p213 = por %p211, %p212
      %p214 = scmp.ne.s32.totalorder %s202, %s203
      %p215 = scmp.eq.s32.totalorder %s31, 4
      %p216 = por %p214, %p215
      %p218 = scmp.ne.s32.totalorder %s203, %s217
      %p219 = scmp.eq.s32.totalorder %s31, 0
      %p220 = por %p218, %p219
      %s222 = sadd.s32 %s221, 1
      %p225 = scmp.eq.s32.totalorder %s25, 4
      %p226 = scmp.ne.s32.totalorder %s221, %s223
      %p227 = scmp.eq.s32.totalorder %s25, 0
      %p228 = por %p226, %p227
      %p229 = scmp.ne.s32.totalorder %s221, %s223
      %p230 = scmp.eq.s32.totalorder %s30, 4
      %p231 = por %p229, %p230
      %p232 = scmp.ne.s32.totalorder %s223, %s224
      %p233 = scmp.eq.s32.totalorder %s30, 0
      %p234 = por %p232, %p233
      %p235 = scmp.ne.s32.totalorder %s223, %s224
      %p236 = scmp.eq.s32.totalorder %s31, 4
      %p237 = por %p235, %p236
      %p239 = scmp.ne.s32.totalorder %s224, %s238
      %p240 = scmp.eq.s32.totalorder %s31, 0
      %p241 = por %p239, %p240
      %s243 = sadd.s32 %s242, 1
      %p246 = scmp.eq.s32.totalorder %s25, 4
      %p247 = scmp.ne.s32.totalorder %s242, %s244
      %p248 = scmp.eq.s32.totalorder %s25, 0
      %p249 = por %p247, %p248
      %p250 = scmp.ne.s32.totalorder %s242, %s244
      %p251 = scmp.eq.s32.totalorder %s30, 4
      %p252 = por %p250, %p251
      %p253 = scmp.ne.s32.totalorder %s244, %s245
      %p254 = scmp.eq.s32.totalorder %s30, 0
      %p255 = por %p253, %p254
      %p256 = scmp.ne.s32.totalorder %s244, %s245
      %p257 = scmp.eq.s32.totalorder %s31, 4
      %p258 = por %p256, %p257
      %p260 = scmp.ne.s32.totalorder %s245, %s259
      %p261 = scmp.eq.s32.totalorder %s31, 0
      %p262 = por %p260, %p261
      %s264 = sadd.s32 %s263, 1
      %p267 = scmp.eq.s32.totalorder %s25, 4
      %p268 = scmp.ne.s32.totalorder %s263, %s265
      %p269 = scmp.eq.s32.totalorder %s25, 0
      %p270 = por %p268, %p269
      %p271 = scmp.ne.s32.totalorder %s263, %s265
      %p272 = scmp.eq.s32.totalorder %s30, 4
      %p273 = por %p271, %p272
      %p274 = scmp.ne.s32.totalorder %s265, %s266
      %p275 = scmp.eq.s32.totalorder %s30, 0
      %p276 = por %p274, %p275
      %p277 = scmp.ne.s32.totalorder %s265, %s266
      %p278 = scmp.eq.s32.totalorder %s31, 4
      %p279 = por %p277, %p278
      %p281 = scmp.ne.s32.totalorder %s266, %s280
      %p282 = scmp.eq.s32.totalorder %s31, 0
      %p283 = por %p281, %p282
      %s285 = sadd.s32 %s284, 1
      %p288 = scmp.eq.s32.totalorder %s25, 4
      %p289 = scmp.ne.s32.totalorder %s284, %s286
      %p290 = scmp.eq.s32.totalorder %s25, 0
      %p291 = por %p289, %p290
      %p292 = scmp.ne.s32.totalorder %s284, %s286
      %p293 = scmp.eq.s32.totalorder %s30, 4
      %p294 = por %p292, %p293
      %p295 = scmp.ne.s32.totalorder %s286, %s287
      %p296 = scmp.eq.s32.totalorder %s30, 0
      %p297 = por %p295, %p296
      %p298 = scmp.ne.s32.totalorder %s286, %s287
      %p299 = scmp.eq.s32.totalorder %s31, 4
      %p300 = por %p298, %p299
      %p302 = scmp.ne.s32.totalorder %s287, %s301
      %p303 = scmp.eq.s32.totalorder %s31, 0
      %p304 = por %p302, %p303
      %s306 = sadd.s32 %s305, 1
      %p309 = scmp.eq.s32.totalorder %s25, 4
      %p310 = scmp.ne.s32.totalorder %s305, %s307
      %p311 = scmp.eq.s32.totalorder %s25, 0
      %p312 = por %p310, %p311
      %p313 = scmp.ne.s32.totalorder %s305, %s307
      %p314 = scmp.eq.s32.totalorder %s30, 4
      %p315 = por %p313, %p314
      %p316 = scmp.ne.s32.totalorder %s307, %s308
      %p317 = scmp.eq.s32.totalorder %s30, 0
      %p318 = por %p316, %p317
      %p319 = scmp.ne.s32.totalorder %s307, %s308
      %p320 = scmp.eq.s32.totalorder %s31, 4
      %p321 = por %p319, %p320
      %p323 = scmp.ne.s32.totalorder %s308, %s322
      %p324 = scmp.eq.s32.totalorder %s31, 0
      %p325 = por %p323, %p324
      %s327 = sadd.s32 %s326, 1
      %p330 = scmp.eq.s32.totalorder %s25, 4
      %p331 = scmp.ne.s32.totalorder %s326, %s328
      %p332 = scmp.eq.s32.totalorder %s25, 0
      %p333 = por %p331, %p332
      %p334 = scmp.ne.s32.totalorder %s326, %s328
      %p335 = scmp.eq.s32.totalorder %s30, 4
      %p336 = por %p334, %p335
      %p337 = scmp.ne.s32.totalorder %s328, %s329
      %p338 = scmp.eq.s32.totalorder %s30, 0
      %p339 = por %p337, %p338
      %p340 = scmp.ne.s32.totalorder %s328, %s329
      %p341 = scmp.eq.s32.totalorder %s31, 4
      %p342 = por %p340, %p341
      %p344 = scmp.ne.s32.totalorder %s329, %s343
      %p345 = scmp.eq.s32.totalorder %s31, 0
      %p346 = por %p344, %p345
      %s348 = sadd.s32 %s347, 1
      %p351 = scmp.eq.s32.totalorder %s25, 4
      %p352 = scmp.ne.s32.totalorder %s347, %s349
      %p353 = scmp.eq.s32.totalorder %s25, 0
      %p354 = por %p352, %p353
      %p355 = scmp.ne.s32.totalorder %s347, %s349
      %p356 = scmp.eq.s32.totalorder %s30, 4
      %p357 = por %p355, %p356
      %p358 = scmp.ne.s32.totalorder %s349, %s350
      %p359 = scmp.eq.s32.totalorder %s30, 0
      %p360 = por %p358, %p359
      %p361 = scmp.ne.s32.totalorder %s349, %s350
      %p362 = scmp.eq.s32.totalorder %s31, 4
      %p363 = por %p361, %p362
      %p365 = scmp.ne.s32.totalorder %s350, %s364
      %p366 = scmp.eq.s32.totalorder %s31, 0
      %p367 = por %p365, %p366
      %s369 = sadd.s32 %s368, 1
      %p372 = scmp.eq.s32.totalorder %s25, 4
      %p373 = scmp.ne.s32.totalorder %s368, %s370
      %p374 = scmp.eq.s32.totalorder %s25, 0
      %p375 = por %p373, %p374
      %p376 = scmp.ne.s32.totalorder %s368, %s370
      %p377 = scmp.eq.s32.totalorder %s30, 4
      %p378 = por %p376, %p377
      %p379 = scmp.ne.s32.totalorder %s370, %s371
      %p380 = scmp.eq.s32.totalorder %s30, 0
      %p381 = por %p379, %p380
      %p382 = scmp.ne.s32.totalorder %s370, %s371
      %p383 = scmp.eq.s32.totalorder %s31, 4
      %p384 = por %p382, %p383
      %p386 = scmp.ne.s32.totalorder %s371, %s385
      %p387 = scmp.eq.s32.totalorder %s31, 0
      %p388 = por %p386, %p387
      %s390 = sadd.s32 %s389, 1
      %p393 = scmp.eq.s32.totalorder %s25, 4
      %p394 = scmp.ne.s32.totalorder %s389, %s391
      %p395 = scmp.eq.s32.totalorder %s25, 0
      %p396 = por %p394, %p395
      %p397 = scmp.ne.s32.totalorder %s389, %s391
      %p398 = scmp.eq.s32.totalorder %s30, 4
      %p399 = por %p397, %p398
      %p400 = scmp.ne.s32.totalorder %s391, %s392
      %p401 = scmp.eq.s32.totalorder %s30, 0
      %p402 = por %p400, %p401
      %p403 = scmp.ne.s32.totalorder %s391, %s392
      %p404 = scmp.eq.s32.totalorder %s31, 4
      %p405 = por %p403, %p404
      %p407 = scmp.ne.s32.totalorder %s392, %s406
      %p408 = scmp.eq.s32.totalorder %s31, 0
      %p409 = por %p407, %p408
      %s411 = sadd.s32 %s410, 1
      %p414 = scmp.eq.s32.totalorder %s25, 4
      %p415 = scmp.ne.s32.totalorder %s410, %s412
      %p416 = scmp.eq.s32.totalorder %s25, 0
      %p417 = por %p415, %p416
      %p418 = scmp.ne.s32.totalorder %s410, %s412
      %p419 = scmp.eq.s32.totalorder %s30, 4
      %p420 = por %p418, %p419
      %p421 = scmp.ne.s32.totalorder %s412, %s413
      %p422 = scmp.eq.s32.totalorder %s30, 0
      %p423 = por %p421, %p422
      %p424 = scmp.ne.s32.totalorder %s412, %s413
      %p425 = scmp.eq.s32.totalorder %s31, 4
      %p426 = por %p424, %p425
      %p428 = scmp.ne.s32.totalorder %s413, %s427
      %p429 = scmp.eq.s32.totalorder %s31, 0
      %p430 = por %p428, %p429
      %s432 = sadd.s32 %s431, 1
      %p435 = scmp.eq.s32.totalorder %s25, 4
      %p436 = scmp.ne.s32.totalorder %s431, %s433
      %p437 = scmp.eq.s32.totalorder %s25, 0
      %p438 = por %p436, %p437
      %p439 = scmp.ne.s32.totalorder %s431, %s433
      %p440 = scmp.eq.s32.totalorder %s30, 4
      %p441 = por %p439, %p440
      %p442 = scmp.ne.s32.totalorder %s433, %s434
      %p443 = scmp.eq.s32.totalorder %s30, 0
      %p444 = por %p442, %p443
      %p445 = scmp.ne.s32.totalorder %s433, %s434
      %p446 = scmp.eq.s32.totalorder %s31, 4
      %p447 = por %p445, %p446
      %p449 = scmp.ne.s32.totalorder %s434, %s448
      %p450 = scmp.eq.s32.totalorder %s31, 0
      %p451 = por %p449, %p450
      %s452 = ssub.s32 %s25, %s32
      %p453 = scmp.eq.s32.totalorder %s452, 0
      %s455 = sadd.s32 %s454, 1
      %s456 = scalar_select %p453, %s454, %s455
      %p459 = pneg %p453
      %p460 = scmp.eq.s32.totalorder %s25, 4
      %p461 = por %p459, %p460
      %p462 = scmp.ne.s32.totalorder %s454, %s457
      %p463 = scmp.eq.s32.totalorder %s25, 0
      %p464 = por %p462, %p463
      %p465 = scmp.ne.s32.totalorder %s454, %s457
      %p466 = scmp.eq.s32.totalorder %s30, 4
      %p467 = por %p465, %p466
      %p468 = scmp.ne.s32.totalorder %s457, %s458
      %p469 = scmp.eq.s32.totalorder %s30, 0
      %p470 = por %p468, %p469
      %p471 = scmp.ne.s32.totalorder %s457, %s458
      %p472 = scmp.eq.s32.totalorder %s31, 4
      %p473 = por %p471, %p472
      %p475 = scmp.ne.s32.totalorder %s458, %s474
      %p476 = scmp.eq.s32.totalorder %s31, 0
      %p477 = por %p475, %p476
      %p478 = scmp.le.s32.totalorder 1, %s25
      %p479 = scmp.lt.s32.totalorder %s25, 6
      %p480 = pnand %p478, %p479
      %p481 = pneg %p480
      // Predicated region
      $region9: #{tpu_custom_call.1} parent=5 // pred_check
        _
      $region10: #{tpu_custom_call.1} parent=5 // pred_check_branch
        %483 = sbr.rel (%p480) target = $region12
      $region11: #{tpu_custom_call.1} parent=5 // pred_region
        %s484 = ssub.s32 %s25, 1
        // Predicated region
        $region13: #{tpu_custom_call.1} parent=11 // pred_check
          %p485 = pneg %p150
        $region14: #{tpu_custom_call.1} parent=11 // pred_check_branch
          %487 = sbr.rel (%p485) target = $region16
        $region15: #{tpu_custom_call.1} parent=11 // pred_region
          _
        $region16: #{tpu_custom_call.1} parent=11 // pred_fallthru
          _
        // Predicated region
        $region17: #{tpu_custom_call.1} parent=11 // pred_check
          %p488 = pneg %p171
        $region18: #{tpu_custom_call.1} parent=11 // pred_check_branch
          %490 = sbr.rel (%p488) target = $region20
        $region19: #{tpu_custom_call.1} parent=11 // pred_region
          _
        $region20: #{tpu_custom_call.1} parent=11 // pred_fallthru
          _
        // Predicated region
        $region21: #{tpu_custom_call.1} parent=11 // pred_check
          %p491 = pneg %p192
        $region22: #{tpu_custom_call.1} parent=11 // pred_check_branch
          %493 = sbr.rel (%p491) target = $region24
        $region23: #{tpu_custom_call.1} parent=11 // pred_region
          _
        $region24: #{tpu_custom_call.1} parent=11 // pred_fallthru
          _
        // Predicated region
        $region25: #{tpu_custom_call.1} parent=11 // pred_check
          %p494 = pneg %p213
        $region26: #{tpu_custom_call.1} parent=11 // pred_check_branch
          %496 = sbr.rel (%p494) target = $region28
        $region27: #{tpu_custom_call.1} parent=11 // pred_region
          _
        $region28: #{tpu_custom_call.1} parent=11 // pred_fallthru
          _
        // Predicated region
        $region29: #{tpu_custom_call.1} parent=11 // pred_check
          %p497 = pneg %p234
        $region30: #{tpu_custom_call.1} parent=11 // pred_check_branch
          %499 = sbr.rel (%p497) target = $region32
        $region31: #{tpu_custom_call.1} parent=11 // pred_region
          _
        $region32: #{tpu_custom_call.1} parent=11 // pred_fallthru
          _
        // Predicated region
        $region33: #{tpu_custom_call.1} parent=11 // pred_check
          %p500 = pneg %p255
        $region34: #{tpu_custom_call.1} parent=11 // pred_check_branch
          %502 = sbr.rel (%p500) target = $region36
        $region35: #{tpu_custom_call.1} parent=11 // pred_region
          _
        $region36: #{tpu_custom_call.1} parent=11 // pred_fallthru
          _
        // Predicated region
        $region37: #{tpu_custom_call.1} parent=11 // pred_check
          %p503 = pneg %p276
        $region38: #{tpu_custom_call.1} parent=11 // pred_check_branch
          %505 = sbr.rel (%p503) target = $region40
        $region39: #{tpu_custom_call.1} parent=11 // pred_region
          _
        $region40: #{tpu_custom_call.1} parent=11 // pred_fallthru
          _
        // Predicated region
        $region41: #{tpu_custom_call.1} parent=11 // pred_check
          %p506 = pneg %p297
        $region42: #{tpu_custom_call.1} parent=11 // pred_check_branch
          %508 = sbr.rel (%p506) target = $region44
        $region43: #{tpu_custom_call.1} parent=11 // pred_region
          _
        $region44: #{tpu_custom_call.1} parent=11 // pred_fallthru
          _
        // Predicated region
        $region45: #{tpu_custom_call.1} parent=11 // pred_check
          %p509 = pneg %p318
        $region46: #{tpu_custom_call.1} parent=11 // pred_check_branch
          %511 = sbr.rel (%p509) target = $region48
        $region47: #{tpu_custom_call.1} parent=11 // pred_region
          _
        $region48: #{tpu_custom_call.1} parent=11 // pred_fallthru
          _
        // Predicated region
        $region49: #{tpu_custom_call.1} parent=11 // pred_check
          %p512 = pneg %p339
        $region50: #{tpu_custom_call.1} parent=11 // pred_check_branch
          %514 = sbr.rel (%p512) target = $region52
        $region51: #{tpu_custom_call.1} parent=11 // pred_region
          _
        $region52: #{tpu_custom_call.1} parent=11 // pred_fallthru
          _
        // Predicated region
        $region53: #{tpu_custom_call.1} parent=11 // pred_check
          %p515 = pneg %p360
        $region54: #{tpu_custom_call.1} parent=11 // pred_check_branch
          %517 = sbr.rel (%p515) target = $region56
        $region55: #{tpu_custom_call.1} parent=11 // pred_region
          _
        $region56: #{tpu_custom_call.1} parent=11 // pred_fallthru
          _
        // Predicated region
        $region57: #{tpu_custom_call.1} parent=11 // pred_check
          %p518 = pneg %p381
        $region58: #{tpu_custom_call.1} parent=11 // pred_check_branch
          %520 = sbr.rel (%p518) target = $region60
        $region59: #{tpu_custom_call.1} parent=11 // pred_region
          _
        $region60: #{tpu_custom_call.1} parent=11 // pred_fallthru
          _
        // Predicated region
        $region61: #{tpu_custom_call.1} parent=11 // pred_check
          %p521 = pneg %p402
        $region62: #{tpu_custom_call.1} parent=11 // pred_check_branch
          %523 = sbr.rel (%p521) target = $region64
        $region63: #{tpu_custom_call.1} parent=11 // pred_region
          _
        $region64: #{tpu_custom_call.1} parent=11 // pred_fallthru
          _
        // Predicated region
        $region65: #{tpu_custom_call.1} parent=11 // pred_check
          %p524 = pneg %p423
        $region66: #{tpu_custom_call.1} parent=11 // pred_check_branch
          %526 = sbr.rel (%p524) target = $region68
        $region67: #{tpu_custom_call.1} parent=11 // pred_region
          _
        $region68: #{tpu_custom_call.1} parent=11 // pred_fallthru
          _
        // Predicated region
        $region69: #{tpu_custom_call.1} parent=11 // pred_check
          %p527 = pneg %p444
        $region70: #{tpu_custom_call.1} parent=11 // pred_check_branch
          %529 = sbr.rel (%p527) target = $region72
        $region71: #{tpu_custom_call.1} parent=11 // pred_region
          _
        $region72: #{tpu_custom_call.1} parent=11 // pred_fallthru
          _
      $region12: #{tpu_custom_call.1} parent=5 // pred_fallthru
        _
      %p530 = scmp.lt.s32.totalorder %s25, 5
      // Predicated region
      $region73: #{tpu_custom_call.1} parent=5 // pred_check
        %p531 = pneg %p530
      $region74: #{tpu_custom_call.1} parent=5 // pred_check_branch
        %533 = sbr.rel (%p531) target = $region76
      $region75: #{tpu_custom_call.1} parent=5 // pred_region
        // Predicated region
        $region77: #{tpu_custom_call.1} parent=75 // pred_check
          %p534 = pneg %p45
        $region78: #{tpu_custom_call.1} parent=75 // pred_check_branch
          %536 = sbr.rel (%p534) target = $region80
        $region79: #{tpu_custom_call.1} parent=75 // pred_region
          %s537 = smul.u32 6, %s25
          %s538 = ssub.s32 25, %s537
          %p539 = scmp.lt.s32.totalorder %s538, 6
          %s540 = scalar_select %p539, %s538, 6
          %s541 = smul.u32 128, %s540
          %p542 = scmp.lt.s32.totalorder %s537, 24
          %s543 = scalar_select %p542, %s537, 24
          %s544 = smul.addr %s543, 8
          %s545 = scalar_lea.vmem %s0, %s544
          %s546 = smul.u32 6, %s25
          %s547 = ssub.s32 25, %s546
          %p548 = scmp.lt.s32.totalorder %s547, 6
          %s549 = scalar_select %p548, %s547, 6
          %s550 = smul.u32 128, %s549
        $region80: #{tpu_custom_call.1} parent=75 // pred_fallthru
          _
        // Predicated region
        $region81: #{tpu_custom_call.1} parent=75 // pred_check
          %p551 = pneg %p71
        $region82: #{tpu_custom_call.1} parent=75 // pred_check_branch
          %553 = sbr.rel (%p551) target = $region84
        $region83: #{tpu_custom_call.1} parent=75 // pred_region
          %s554 = smul.u32 48, %s25
          %s555 = ssub.s32 200, %s554
          %p556 = scmp.lt.s32.totalorder %s555, 48
          %s557 = scalar_select %p556, %s555, 48
          %s558 = smul.u32 128, %s557
          %p559 = scmp.lt.s32.totalorder %s554, 199
          %s560 = scalar_select %p559, %s554, 199
          %s561 = smul.addr %s560, 8
          %s562 = scalar_lea.vmem %s1, %s561
          %s563 = smul.u32 48, %s25
          %s564 = ssub.s32 200, %s563
          %p565 = scmp.lt.s32.totalorder %s564, 48
          %s566 = scalar_select %p565, %s564, 48
          %s567 = smul.u32 128, %s566
        $region84: #{tpu_custom_call.1} parent=75 // pred_fallthru
          _
        // Predicated region
        $region85: #{tpu_custom_call.1} parent=75 // pred_check
          %p568 = pneg %p97
        $region86: #{tpu_custom_call.1} parent=75 // pred_check_branch
          %570 = sbr.rel (%p568) target = $region88
        $region87: #{tpu_custom_call.1} parent=75 // pred_region
          %s571 = smul.u32 48, %s25
          %s572 = ssub.s32 200, %s571
          %p573 = scmp.lt.s32.totalorder %s572, 48
          %s574 = scalar_select %p573, %s572, 48
          %s575 = smul.u32 128, %s574
          %p576 = scmp.lt.s32.totalorder %s571, 199
          %s577 = scalar_select %p576, %s571, 199
          %s578 = smul.addr %s577, 8
          %s579 = scalar_lea.vmem %s2, %s578
          %s580 = smul.u32 48, %s25
          %s581 = ssub.s32 200, %s580
          %p582 = scmp.lt.s32.totalorder %s581, 48
          %s583 = scalar_select %p582, %s581, 48
          %s584 = smul.u32 128, %s583
        $region88: #{tpu_custom_call.1} parent=75 // pred_fallthru
          _
        // Predicated region
        $region89: #{tpu_custom_call.1} parent=75 // pred_check
          %p585 = pneg %p123
        $region90: #{tpu_custom_call.1} parent=75 // pred_check_branch
          %587 = sbr.rel (%p585) target = $region92
        $region91: #{tpu_custom_call.1} parent=75 // pred_region
          %s588 = smul.u32 6, %s25
          %s589 = ssub.s32 25, %s588
          %p590 = scmp.lt.s32.totalorder %s589, 6
          %s591 = scalar_select %p590, %s589, 6
          %s592 = smul.u32 128, %s591
          %p593 = scmp.lt.s32.totalorder %s588, 24
          %s594 = scalar_select %p593, %s588, 24
          %s595 = smul.addr %s594, 8
          %s596 = scalar_lea.vmem %s3, %s595
          %s597 = smul.u32 6, %s25
          %s598 = ssub.s32 25, %s597
          %p599 = scmp.lt.s32.totalorder %s598, 6
          %s600 = scalar_select %p599, %s598, 6
          %s601 = smul.u32 128, %s600
        $region92: #{tpu_custom_call.1} parent=75 // pred_fallthru
          _
      $region76: #{tpu_custom_call.1} parent=5 // pred_fallthru
        _
      %p602 = scmp.le.s32.totalorder 1, %s25
      %p603 = scmp.lt.s32.totalorder %s25, 6
      %p604 = pnand %p602, %p603
      %p605 = pneg %p604
      // Predicated region
      $region93: #{tpu_custom_call.1} parent=5 // pred_check
        _
      $region94: #{tpu_custom_call.1} parent=5 // pred_check_branch
        %607 = sbr.rel (%p604) target = $region96
      $region95: #{tpu_custom_call.1} parent=5 // pred_region
        %s608 = ssub.s32 %s25, 1
        %s609 = smul.u32 6, %s30
        %s610 = ssub.s32 25, %s609
        %p611 = scmp.lt.s32.totalorder %s610, 6
        %s612 = scalar_select %p611, %s610, 6
        %s613 = smul.u32 128, %s612
        %p614 = scmp.lt.s32.totalorder %s609, 24
        %s615 = scalar_select %p614, %s609, 24
        %s616 = smul.addr %s615, 8
        %s617 = scalar_lea.vmem %s0, %s616
        %p618 = pneg %p51
        %p619 = pneg %p48
        %s620 = smul.u32 48, %s30
        %s621 = ssub.s32 200, %s620
        %p622 = scmp.lt.s32.totalorder %s621, 48
        %s623 = scalar_select %p622, %s621, 48
        %s624 = smul.u32 128, %s623
        %p625 = scmp.lt.s32.totalorder %s620, 199
        %s626 = scalar_select %p625, %s620, 199
        %s627 = smul.addr %s626, 8
        %s628 = scalar_lea.vmem %s1, %s627
        %p629 = pneg %p77
        %p630 = pneg %p74
        %s631 = smul.u32 48, %s30
        %s632 = ssub.s32 200, %s631
        %p633 = scmp.lt.s32.totalorder %s632, 48
        %s634 = scalar_select %p633, %s632, 48
        %s635 = smul.u32 128, %s634
        %p636 = scmp.lt.s32.totalorder %s631, 199
        %s637 = scalar_select %p636, %s631, 199
        %s638 = smul.addr %s637, 8
        %s639 = scalar_lea.vmem %s2, %s638
        %p640 = pneg %p103
        %p641 = pneg %p100
        %s642 = smul.u32 6, %s30
        %s643 = ssub.s32 25, %s642
        %p644 = scmp.lt.s32.totalorder %s643, 6
        %s645 = scalar_select %p644, %s643, 6
        %s646 = smul.u32 128, %s645
        %p647 = scmp.lt.s32.totalorder %s642, 24
        %s648 = scalar_select %p647, %s642, 24
        %s649 = smul.addr %s648, 8
        %s650 = scalar_lea.vmem %s3, %s649
        %p651 = pneg %p129
        %p652 = pneg %p126
        %p653 = pneg %p150
        %p654 = pneg %p147
        %p655 = pneg %p171
        %p656 = pneg %p168
        %p657 = pneg %p192
        %p658 = pneg %p189
        %p659 = pneg %p213
        %p660 = pneg %p210
        %p661 = pneg %p234
        %p662 = pneg %p231
        %p663 = pneg %p255
        %p664 = pneg %p252
        %p665 = pneg %p276
        %p666 = pneg %p273
        %p667 = pneg %p297
        %p668 = pneg %p294
        %p669 = pneg %p318
        %p670 = pneg %p315
        %p671 = pneg %p339
        %p672 = pneg %p336
        %p673 = pneg %p360
        %p674 = pneg %p357
        %p675 = pneg %p381
        %p676 = pneg %p378
        %p677 = pneg %p402
        %p678 = pneg %p399
        %p679 = pneg %p423
        %p680 = pneg %p420
        %p681 = pneg %p444
        %p682 = pneg %p441
        %p683 = pneg %p470
        %p684 = pneg %p467
        %s685 = sand.u32 %s457, 1
        %s686 = sand.u32 %s457, 1
        %s687 = smul.addr %s686, 48
        %s688 = scalar_lea.vmem [#allocation2], %s687
        %s689 = smul.u32 6, %s30
        %s690 = ssub.s32 25, %s689
        %p691 = scmp.lt.s32.totalorder %s690, 6
        %s692 = scalar_select %p691, %s690, 6
        %s693 = smul.u32 128, %s692
        %p694 = scmp.lt.s32.totalorder %s689, 24
        %s695 = scalar_select %p694, %s689, 24
        %s696 = smul.addr %s695, 8
        %s697 = scalar_lea.vmem %s0, %s696
        %s698 = smul.u32 6, %s30
        %s699 = ssub.s32 25, %s698
        %p700 = scmp.lt.s32.totalorder %s699, 6
        %s701 = scalar_select %p700, %s699, 6
        %s702 = smul.u32 128, %s701
        %s703 = smul.u32 48, %s30
        %s704 = ssub.s32 200, %s703
        %p705 = scmp.lt.s32.totalorder %s704, 48
        %s706 = scalar_select %p705, %s704, 48
        %s707 = smul.u32 128, %s706
        %p708 = scmp.lt.s32.totalorder %s703, 199
        %s709 = scalar_select %p708, %s703, 199
        %s710 = smul.addr %s709, 8
        %s711 = scalar_lea.vmem %s1, %s710
        %s712 = smul.u32 48, %s30
        %s713 = ssub.s32 200, %s712
        %p714 = scmp.lt.s32.totalorder %s713, 48
        %s715 = scalar_select %p714, %s713, 48
        %s716 = smul.u32 128, %s715
        %s717 = smul.u32 48, %s30
        %s718 = ssub.s32 200, %s717
        %p719 = scmp.lt.s32.totalorder %s718, 48
        %s720 = scalar_select %p719, %s718, 48
        %s721 = smul.u32 128, %s720
        %p722 = scmp.lt.s32.totalorder %s717, 199
        %s723 = scalar_select %p722, %s717, 199
        %s724 = smul.addr %s723, 8
        %s725 = scalar_lea.vmem %s2, %s724
        %s726 = smul.u32 48, %s30
        %s727 = ssub.s32 200, %s726
        %p728 = scmp.lt.s32.totalorder %s727, 48
        %s729 = scalar_select %p728, %s727, 48
        %s730 = smul.u32 128, %s729
        %s731 = smul.u32 6, %s30
        %s732 = ssub.s32 25, %s731
        %p733 = scmp.lt.s32.totalorder %s732, 6
        %s734 = scalar_select %p733, %s732, 6
        %s735 = smul.u32 128, %s734
        %p736 = scmp.lt.s32.totalorder %s731, 24
        %s737 = scalar_select %p736, %s731, 24
        %s738 = smul.addr %s737, 8
        %s739 = scalar_lea.vmem %s3, %s738
        %s740 = smul.u32 6, %s30
        %s741 = ssub.s32 25, %s740
        %p742 = scmp.lt.s32.totalorder %s741, 6
        %s743 = scalar_select %p742, %s741, 6
        %s744 = smul.u32 128, %s743
        %s745 = smul.u32 6, %s30
        %s746 = ssub.s32 25, %s745
        %p747 = scmp.lt.s32.totalorder %s746, 6
        %s748 = scalar_select %p747, %s746, 6
        %s749 = smul.u32 128, %s748
        %v755 = vld [vmem:[%s697] sm:$0xff]
        %v756 = vld [vmem:[%s697 + $0x8] sm:$0xff]
        %v757 = vld [vmem:[%s697 + $0x10] sm:$0xff]
        %v758 = vld [vmem:[%s697 + $0x18] sm:$0xff]
        %v759 = vld [vmem:[%s697 + $0x20] sm:$0xff]
        %v760 = vld [vmem:[%s697 + $0x28] sm:$0xff]
        %v761 = vld [vmem:[%s711] sm:$0xff]
        %v762 = vld [vmem:[%s711 + $0x8] sm:$0xff]
        %v763 = vld [vmem:[%s711 + $0x10] sm:$0xff]
        %v764 = vld [vmem:[%s711 + $0x18] sm:$0xff]
        %v765 = vld [vmem:[%s711 + $0x20] sm:$0xff]
        %v766 = vld [vmem:[%s711 + $0x28] sm:$0xff]
        %v767 = vld [vmem:[%s711 + $0x30] sm:$0xff]
        %v768 = vld [vmem:[%s711 + $0x38] sm:$0xff]
        %v769 = vld [vmem:[%s711 + $0x40] sm:$0xff]
        %v770 = vld [vmem:[%s711 + $0x48] sm:$0xff]
        %v771 = vld [vmem:[%s711 + $0x50] sm:$0xff]
        %v772 = vld [vmem:[%s711 + $0x58] sm:$0xff]
        %v773 = vld [vmem:[%s711 + $0x60] sm:$0xff]
        %v774 = vld [vmem:[%s711 + $0x68] sm:$0xff]
        %v775 = vld [vmem:[%s711 + $0x70] sm:$0xff]
        %v776 = vld [vmem:[%s711 + $0x78] sm:$0xff]
        %v777 = vld [vmem:[%s711 + $0x80] sm:$0xff]
        %v778 = vld [vmem:[%s711 + $0x88] sm:$0xff]
        %v779 = vld [vmem:[%s711 + $0x90] sm:$0xff]
        %v780 = vld [vmem:[%s711 + $0x98] sm:$0xff]
        %v781 = vld [vmem:[%s711 + $0xa0] sm:$0xff]
        %v782 = vld [vmem:[%s711 + $0xa8] sm:$0xff]
        %v783 = vld [vmem:[%s711 + $0xb0] sm:$0xff]
        %v784 = vld [vmem:[%s711 + $0xb8] sm:$0xff]
        %v785 = vld [vmem:[%s711 + $0xc0] sm:$0xff]
        %v786 = vld [vmem:[%s711 + $0xc8] sm:$0xff]
        %v787 = vld [vmem:[%s711 + $0xd0] sm:$0xff]
        %v788 = vld [vmem:[%s711 + $0xd8] sm:$0xff]
        %v789 = vld [vmem:[%s711 + $0xe0] sm:$0xff]
        %v790 = vld [vmem:[%s711 + $0xe8] sm:$0xff]
        %v791 = vld [vmem:[%s711 + $0xf0] sm:$0xff]
        %v792 = vld [vmem:[%s711 + $0xf8] sm:$0xff]
        %v793 = vld [vmem:[%s711 + $0x100] sm:$0xff]
        %v794 = vld [vmem:[%s711 + $0x108] sm:$0xff]
        %v795 = vld [vmem:[%s711 + $0x110] sm:$0xff]
        %v796 = vld [vmem:[%s711 + $0x118] sm:$0xff]
        %v797 = vld [vmem:[%s711 + $0x120] sm:$0xff]
        %v798 = vld [vmem:[%s711 + $0x128] sm:$0xff]
        %v799 = vld [vmem:[%s711 + $0x130] sm:$0xff]
        %v800 = vld [vmem:[%s711 + $0x138] sm:$0xff]
        %v801 = vld [vmem:[%s711 + $0x140] sm:$0xff]
        %v802 = vld [vmem:[%s711 + $0x148] sm:$0xff]
        %v803 = vld [vmem:[%s711 + $0x150] sm:$0xff]
        %v804 = vld [vmem:[%s711 + $0x158] sm:$0xff]
        %v805 = vld [vmem:[%s711 + $0x160] sm:$0xff]
        %v806 = vld [vmem:[%s711 + $0x168] sm:$0xff]
        %v807 = vld [vmem:[%s711 + $0x170] sm:$0xff]
        %v808 = vld [vmem:[%s711 + $0x178] sm:$0xff]
        %v809 = vpack.c.bf16 %v756, %v755
        %v810 = vpack.c.bf16 %v758, %v757
        %v811 = vpack.c.bf16 %v760, %v759
        %v812 = vld [vmem:[%s4] sm:$0xf]
        %v813 = vld [vmem:[%s4 + $0x4] sm:$0xf]
        %v814 = vld [vmem:[%s4 + $0x8] sm:$0xf]
        %v815 = vld [vmem:[%s4 + $0xc] sm:$0xf]
        %v816 = vld [vmem:[%s6] sm:$0x1]
        %v818 = vlaneseq
        %v819 = vshrl.u32 %v818, 7
        %v820 = vsub.s32 0, %v819
        %v821 = vrot.slane %v816, %v820
        %v827 = vunpack.c.l.b16 %v812
        %v828 = vunpack.c.l.b16 %v813
        %v829 = vunpack.c.l.b16 %v814
        %v830 = vunpack.c.l.b16 %v815
        %v831 = vpack.c.b16 %v828, %v827
        %v832 = vpack.c.b16 %v830, %v829
        %vm835 = vcmask 261120
        %v837 = vsel %vm835, %v809, 0
        %v840 = vsel %vm835, %v810, 0
        %v843 = vsel %vm835, %v811, 0
        %845 = vmatprep.subr.bf16.mxu0 0
        %846 = vmatpush1.bf16.msra.mxu0 0
        %847 = vmatprep.subr.bf16.mxu0 0
        %848 = vmatpush1.bf16.msra.mxu0 0
        %849 = vmatprep.subr.bf16.mxu0 0
        %850 = vmatpush1.bf16.msra.mxu0 0
        %851 = vmatprep.subr.bf16.mxu0 0
        %852 = vmatpush1.bf16.msra.mxu0 0
        %853 = vmatprep.subr.bf16.mxu0 0
        %854 = vmatpush1.bf16.msra.mxu0 0
        %855 = vmatprep.subr.bf16.mxu0 0
        %856 = vmatpush1.bf16.msra.mxu0 0
        %857 = vmatprep.subr.bf16.mxu0 0
        %858 = vmatpush1.bf16.msra.mxu0 %v832
        %859 = vmatprep.subr.bf16.mxu0 0
        %860 = vmatpush1.bf16.msra.mxu0 %v831
        %861 = vmatprep.subr.bf16.mxu0 0
        %862 = vmatpush2.bf16.msra.mxu0 0
        %863 = vmatprep.subr.bf16.mxu0 0
        %864 = vmatpush2.bf16.msra.mxu0 0
        %865 = vmatprep.subr.bf16.mxu0 0
        %866 = vmatpush2.bf16.msra.mxu0 0
        %867 = vmatprep.subr.bf16.mxu0 0
        %868 = vmatpush2.bf16.msra.mxu0 0
        %869 = vmatprep.subr.bf16.mxu0 0
        %870 = vmatpush2.bf16.msra.mxu0 0
        %871 = vmatprep.subr.bf16.mxu0 0
        %872 = vmatpush2.bf16.msra.mxu0 0
        %873 = vmatprep.subr.bf16.mxu0 0
        %874 = vmatpush2.bf16.msra.mxu0 0
        %875 = vmatprep.subr.bf16.mxu0 0
        %876 = vmatpush2.bf16.msra.mxu0 0
        %877 = vmatprep.mubr.bf16.mxu0 0
        %878 = vmatmul.mubr.bf16.gmra.mxu0 %v837
        %v879 = vpop.f32.mrf.mxu0
        %v880 = vadd.f32 %v821, %v879
        %v881 = vpop.f32.mrf.mxu0
        %v882 = vpop.f32.mrf.mxu0
        %v883 = vadd.f32 %v821, %v882
        %v884 = vpop.f32.mrf.mxu0
        %885 = vmatprep.mubr.bf16.mxu0 0
        %886 = vmatmul.mubr.bf16.gmra.mxu0 %v840
        %v887 = vpop.f32.mrf.mxu0
        %v888 = vadd.f32 %v821, %v887
        %v889 = vpop.f32.mrf.mxu0
        %v890 = vpop.f32.mrf.mxu0
        %v891 = vadd.f32 %v821, %v890
        %v892 = vpop.f32.mrf.mxu0
        %893 = vmatprep.mubr.bf16.mxu0 0
        %894 = vmatmul.mubr.bf16.gmra.mxu0 %v843
        %v895 = vpop.f32.mrf.mxu0
        %v896 = vadd.f32 %v821, %v895
        %v897 = vpop.f32.mrf.mxu0
        %v898 = vpop.f32.mrf.mxu0
        %v899 = vadd.f32 %v821, %v898
        %v900 = vpop.f32.mrf.mxu0
        %901 = vdwg.mxu0
        %v902 = vpack.c.bf16 %v762, %v761
        %v903 = vpack.c.bf16 %v764, %v763
        %v904 = vpack.c.bf16 %v766, %v765
        %v905 = vpack.c.bf16 %v768, %v767
        %v906 = vpack.c.bf16 %v770, %v769
        %v907 = vpack.c.bf16 %v772, %v771
        %v908 = vpack.c.bf16 %v774, %v773
        %v909 = vpack.c.bf16 %v776, %v775
        %v910 = vpack.c.bf16 %v778, %v777
        %v911 = vpack.c.bf16 %v780, %v779
        %v912 = vpack.c.bf16 %v782, %v781
        %v913 = vpack.c.bf16 %v784, %v783
        %v914 = vpack.c.bf16 %v786, %v785
        %v915 = vpack.c.bf16 %v788, %v787
        %v916 = vpack.c.bf16 %v790, %v789
        %v917 = vpack.c.bf16 %v792, %v791
        %v918 = vpack.c.bf16 %v794, %v793
        %v919 = vpack.c.bf16 %v796, %v795
        %v920 = vpack.c.bf16 %v798, %v797
        %v921 = vpack.c.bf16 %v800, %v799
        %v922 = vpack.c.bf16 %v802, %v801
        %v923 = vpack.c.bf16 %v804, %v803
        %v924 = vpack.c.bf16 %v806, %v805
        %v925 = vpack.c.bf16 %v808, %v807
        %v926 = vld [vmem:[%s5] sm:$0xf]
        %v927 = vld [vmem:[%s5 + $0x4] sm:$0xf]
        %v928 = vld [vmem:[%s5 + $0x8] sm:$0xf]
        %v929 = vld [vmem:[%s5 + $0xc] sm:$0xf]
        %v934 = vunpack.c.l.b16 %v926
        %v935 = vunpack.c.l.b16 %v927
        %v936 = vunpack.c.l.b16 %v928
        %v937 = vunpack.c.l.b16 %v929
        %v938 = vpack.c.b16 %v935, %v934
        %v939 = vpack.c.b16 %v937, %v936
        %v943 = vsel %vm835, %v902, 0
        %v946 = vsel %vm835, %v903, 0
        %v949 = vsel %vm835, %v904, 0
        %v952 = vsel %vm835, %v905, 0
        %v955 = vsel %vm835, %v906, 0
        %v958 = vsel %vm835, %v907, 0
        %v961 = vsel %vm835, %v908, 0
        %v964 = vsel %vm835, %v909, 0
        %v967 = vsel %vm835, %v910, 0
        %v970 = vsel %vm835, %v911, 0
        %v973 = vsel %vm835, %v912, 0
        %v976 = vsel %vm835, %v913, 0
        %v979 = vsel %vm835, %v914, 0
        %v982 = vsel %vm835, %v915, 0
        %v985 = vsel %vm835, %v916, 0
        %v988 = vsel %vm835, %v917, 0
        %v991 = vsel %vm835, %v918, 0
        %v994 = vsel %vm835, %v919, 0
        %v997 = vsel %vm835, %v920, 0
        %v1000 = vsel %vm835, %v921, 0
        %v1003 = vsel %vm835, %v922, 0
        %v1006 = vsel %vm835, %v923, 0
        %v1009 = vsel %vm835, %v924, 0
        %v1012 = vsel %vm835, %v925, 0
        %1014 = vmatprep.subr.bf16.mxu0 0
        %1015 = vmatpush1.bf16.msra.mxu0 0
        %1016 = vmatprep.subr.bf16.mxu0 0
        %1017 = vmatpush1.bf16.msra.mxu0 0
        %1018 = vmatprep.subr.bf16.mxu0 0
        %1019 = vmatpush1.bf16.msra.mxu0 0
        %1020 = vmatprep.subr.bf16.mxu0 0
        %1021 = vmatpush1.bf16.msra.mxu0 0
        %1022 = vmatprep.subr.bf16.mxu0 0
        %1023 = vmatpush1.bf16.msra.mxu0 0
        %1024 = vmatprep.subr.bf16.mxu0 0
        %1025 = vmatpush1.bf16.msra.mxu0 0
        %1026 = vmatprep.subr.bf16.mxu0 0
        %1027 = vmatpush1.bf16.msra.mxu0 %v939
        %1028 = vmatprep.subr.bf16.mxu0 0
        %1029 = vmatpush1.bf16.msra.mxu0 %v938
        %1030 = vmatprep.subr.bf16.mxu0 0
        %1031 = vmatpush2.bf16.msra.mxu0 0
        %1032 = vmatprep.subr.bf16.mxu0 0
        %1033 = vmatpush2.bf16.msra.mxu0 0
        %1034 = vmatprep.subr.bf16.mxu0 0
        %1035 = vmatpush2.bf16.msra.mxu0 0
        %1036 = vmatprep.subr.bf16.mxu0 0
        %1037 = vmatpush2.bf16.msra.mxu0 0
        %1038 = vmatprep.subr.bf16.mxu0 0
        %1039 = vmatpush2.bf16.msra.mxu0 0
        %1040 = vmatprep.subr.bf16.mxu0 0
        %1041 = vmatpush2.bf16.msra.mxu0 0
        %1042 = vmatprep.subr.bf16.mxu0 0
        %1043 = vmatpush2.bf16.msra.mxu0 0
        %1044 = vmatprep.subr.bf16.mxu0 0
        %1045 = vmatpush2.bf16.msra.mxu0 0
        %1046 = vmatprep.mubr.bf16.mxu0 0
        %1047 = vmatmul.mubr.bf16.gmra.mxu0 %v943
        %v1048 = vpop.f32.mrf.mxu0
        %v1049 = vadd.f32 0.0, %v1048
        %v1050 = vpop.f32.mrf.mxu0
        %v1051 = vpop.f32.mrf.mxu0
        %v1052 = vadd.f32 0.0, %v1051
        %v1053 = vpop.f32.mrf.mxu0
        %1054 = vmatprep.mubr.bf16.mxu0 0
        %1055 = vmatmul.mubr.bf16.gmra.mxu0 %v946
        %v1056 = vpop.f32.mrf.mxu0
        %v1057 = vadd.f32 0.0, %v1056
        %v1058 = vpop.f32.mrf.mxu0
        %v1059 = vpop.f32.mrf.mxu0
        %v1060 = vadd.f32 0.0, %v1059
        %v1061 = vpop.f32.mrf.mxu0
        %1062 = vmatprep.mubr.bf16.mxu0 0
        %1063 = vmatmul.mubr.bf16.gmra.mxu0 %v949
        %v1064 = vpop.f32.mrf.mxu0
        %v1065 = vadd.f32 0.0, %v1064
        %v1066 = vpop.f32.mrf.mxu0
        %v1067 = vpop.f32.mrf.mxu0
        %v1068 = vadd.f32 0.0, %v1067
        %v1069 = vpop.f32.mrf.mxu0
        %1070 = vmatprep.mubr.bf16.mxu0 0
        %1071 = vmatmul.mubr.bf16.gmra.mxu0 %v952
        %v1072 = vpop.f32.mrf.mxu0
        %v1073 = vadd.f32 0.0, %v1072
        %v1074 = vpop.f32.mrf.mxu0
        %v1075 = vpop.f32.mrf.mxu0
        %v1076 = vadd.f32 0.0, %v1075
        %v1077 = vpop.f32.mrf.mxu0
        %1078 = vmatprep.mubr.bf16.mxu0 0
        %1079 = vmatmul.mubr.bf16.gmra.mxu0 %v955
        %v1080 = vpop.f32.mrf.mxu0
        %v1081 = vadd.f32 0.0, %v1080
        %v1082 = vpop.f32.mrf.mxu0
        %v1083 = vpop.f32.mrf.mxu0
        %v1084 = vadd.f32 0.0, %v1083
        %v1085 = vpop.f32.mrf.mxu0
        %1086 = vmatprep.mubr.bf16.mxu0 0
        %1087 = vmatmul.mubr.bf16.gmra.mxu0 %v958
        %v1088 = vpop.f32.mrf.mxu0
        %v1089 = vadd.f32 0.0, %v1088
        %v1090 = vpop.f32.mrf.mxu0
        %v1091 = vpop.f32.mrf.mxu0
        %v1092 = vadd.f32 0.0, %v1091
        %v1093 = vpop.f32.mrf.mxu0
        %1094 = vmatprep.mubr.bf16.mxu0 0
        %1095 = vmatmul.mubr.bf16.gmra.mxu0 %v961
        %v1096 = vpop.f32.mrf.mxu0
        %v1097 = vadd.f32 0.0, %v1096
        %v1098 = vpop.f32.mrf.mxu0
        %v1099 = vpop.f32.mrf.mxu0
        %v1100 = vadd.f32 0.0, %v1099
        %v1101 = vpop.f32.mrf.mxu0
        %1102 = vmatprep.mubr.bf16.mxu0 0
        %1103 = vmatmul.mubr.bf16.gmra.mxu0 %v964
        %v1104 = vpop.f32.mrf.mxu0
        %v1105 = vadd.f32 0.0, %v1104
        %v1106 = vpop.f32.mrf.mxu0
        %v1107 = vpop.f32.mrf.mxu0
        %v1108 = vadd.f32 0.0, %v1107
        %v1109 = vpop.f32.mrf.mxu0
        %1110 = vmatprep.mubr.bf16.mxu0 0
        %1111 = vmatmul.mubr.bf16.gmra.mxu0 %v967
        %v1112 = vpop.f32.mrf.mxu0
        %v1113 = vadd.f32 0.0, %v1112
        %v1114 = vpop.f32.mrf.mxu0
        %v1115 = vpop.f32.mrf.mxu0
        %v1116 = vadd.f32 0.0, %v1115
        %v1117 = vpop.f32.mrf.mxu0
        %1118 = vmatprep.mubr.bf16.mxu0 0
        %1119 = vmatmul.mubr.bf16.gmra.mxu0 %v970
        %v1120 = vpop.f32.mrf.mxu0
        %v1121 = vadd.f32 0.0, %v1120
        %v1122 = vpop.f32.mrf.mxu0
        %v1123 = vpop.f32.mrf.mxu0
        %v1124 = vadd.f32 0.0, %v1123
        %v1125 = vpop.f32.mrf.mxu0
        %1126 = vmatprep.mubr.bf16.mxu0 0
        %1127 = vmatmul.mubr.bf16.gmra.mxu0 %v973
        %v1128 = vpop.f32.mrf.mxu0
        %v1129 = vadd.f32 0.0, %v1128
        %v1130 = vpop.f32.mrf.mxu0
        %v1131 = vpop.f32.mrf.mxu0
        %v1132 = vadd.f32 0.0, %v1131
        %v1133 = vpop.f32.mrf.mxu0
        %1134 = vmatprep.mubr.bf16.mxu0 0
        %1135 = vmatmul.mubr.bf16.gmra.mxu0 %v976
        %v1136 = vpop.f32.mrf.mxu0
        %v1137 = vadd.f32 0.0, %v1136
        %v1138 = vpop.f32.mrf.mxu0
        %v1139 = vpop.f32.mrf.mxu0
        %v1140 = vadd.f32 0.0, %v1139
        %v1141 = vpop.f32.mrf.mxu0
        %1142 = vmatprep.mubr.bf16.mxu0 0
        %1143 = vmatmul.mubr.bf16.gmra.mxu0 %v979
        %v1144 = vpop.f32.mrf.mxu0
        %v1145 = vadd.f32 0.0, %v1144
        %v1146 = vpop.f32.mrf.mxu0
        %v1147 = vpop.f32.mrf.mxu0
        %v1148 = vadd.f32 0.0, %v1147
        %v1149 = vpop.f32.mrf.mxu0
        %1150 = vmatprep.mubr.bf16.mxu0 0
        %1151 = vmatmul.mubr.bf16.gmra.mxu0 %v982
        %v1152 = vpop.f32.mrf.mxu0
        %v1153 = vadd.f32 0.0, %v1152
        %v1154 = vpop.f32.mrf.mxu0
        %v1155 = vpop.f32.mrf.mxu0
        %v1156 = vadd.f32 0.0, %v1155
        %v1157 = vpop.f32.mrf.mxu0
        %1158 = vmatprep.mubr.bf16.mxu0 0
        %1159 = vmatmul.mubr.bf16.gmra.mxu0 %v985
        %v1160 = vpop.f32.mrf.mxu0
        %v1161 = vadd.f32 0.0, %v1160
        %v1162 = vpop.f32.mrf.mxu0
        %v1163 = vpop.f32.mrf.mxu0
        %v1164 = vadd.f32 0.0, %v1163
        %v1165 = vpop.f32.mrf.mxu0
        %1166 = vmatprep.mubr.bf16.mxu0 0
        %1167 = vmatmul.mubr.bf16.gmra.mxu0 %v988
        %v1168 = vpop.f32.mrf.mxu0
        %v1169 = vadd.f32 0.0, %v1168
        %v1170 = vpop.f32.mrf.mxu0
        %v1171 = vpop.f32.mrf.mxu0
        %v1172 = vadd.f32 0.0, %v1171
        %v1173 = vpop.f32.mrf.mxu0
        %1174 = vmatprep.mubr.bf16.mxu0 0
        %1175 = vmatmul.mubr.bf16.gmra.mxu0 %v991
        %v1176 = vpop.f32.mrf.mxu0
        %v1177 = vadd.f32 0.0, %v1176
        %v1178 = vpop.f32.mrf.mxu0
        %v1179 = vpop.f32.mrf.mxu0
        %v1180 = vadd.f32 0.0, %v1179
        %v1181 = vpop.f32.mrf.mxu0
        %1182 = vmatprep.mubr.bf16.mxu0 0
        %1183 = vmatmul.mubr.bf16.gmra.mxu0 %v994
        %v1184 = vpop.f32.mrf.mxu0
        %v1185 = vadd.f32 0.0, %v1184
        %v1186 = vpop.f32.mrf.mxu0
        %v1187 = vpop.f32.mrf.mxu0
        %v1188 = vadd.f32 0.0, %v1187
        %v1189 = vpop.f32.mrf.mxu0
        %1190 = vmatprep.mubr.bf16.mxu0 0
        %1191 = vmatmul.mubr.bf16.gmra.mxu0 %v997
        %v1192 = vpop.f32.mrf.mxu0
        %v1193 = vadd.f32 0.0, %v1192
        %v1194 = vpop.f32.mrf.mxu0
        %v1195 = vpop.f32.mrf.mxu0
        %v1196 = vadd.f32 0.0, %v1195
        %v1197 = vpop.f32.mrf.mxu0
        %1198 = vmatprep.mubr.bf16.mxu0 0
        %1199 = vmatmul.mubr.bf16.gmra.mxu0 %v1000
        %v1200 = vpop.f32.mrf.mxu0
        %v1201 = vadd.f32 0.0, %v1200
        %v1202 = vpop.f32.mrf.mxu0
        %v1203 = vpop.f32.mrf.mxu0
        %v1204 = vadd.f32 0.0, %v1203
        %v1205 = vpop.f32.mrf.mxu0
        %1206 = vmatprep.mubr.bf16.mxu0 0
        %1207 = vmatmul.mubr.bf16.gmra.mxu0 %v1003
        %v1208 = vpop.f32.mrf.mxu0
        %v1209 = vadd.f32 0.0, %v1208
        %v1210 = vpop.f32.mrf.mxu0
        %v1211 = vpop.f32.mrf.mxu0
        %v1212 = vadd.f32 0.0, %v1211
        %v1213 = vpop.f32.mrf.mxu0
        %1214 = vmatprep.mubr.bf16.mxu0 0
        %1215 = vmatmul.mubr.bf16.gmra.mxu0 %v1006
        %v1216 = vpop.f32.mrf.mxu0
        %v1217 = vadd.f32 0.0, %v1216
        %v1218 = vpop.f32.mrf.mxu0
        %v1219 = vpop.f32.mrf.mxu0
        %v1220 = vadd.f32 0.0, %v1219
        %v1221 = vpop.f32.mrf.mxu0
        %1222 = vmatprep.mubr.bf16.mxu0 0
        %1223 = vmatmul.mubr.bf16.gmra.mxu0 %v1009
        %v1224 = vpop.f32.mrf.mxu0
        %v1225 = vadd.f32 0.0, %v1224
        %v1226 = vpop.f32.mrf.mxu0
        %v1227 = vpop.f32.mrf.mxu0
        %v1228 = vadd.f32 0.0, %v1227
        %v1229 = vpop.f32.mrf.mxu0
        %1230 = vmatprep.mubr.bf16.mxu0 0
        %1231 = vmatmul.mubr.bf16.gmra.mxu0 %v1012
        %v1232 = vpop.f32.mrf.mxu0
        %v1233 = vadd.f32 0.0, %v1232
        %v1234 = vpop.f32.mrf.mxu0
        %v1235 = vpop.f32.mrf.mxu0
        %v1236 = vadd.f32 0.0, %v1235
        %v1237 = vpop.f32.mrf.mxu0
        %1238 = vdwg.mxu0
        %v1245 = vcombine.high %v880, %v880
        %v1247 = vunpack.c.l.s4 1966171168
        %v1248 = vunpack.c.0.s8 %v1247
        %v1249 = vlaneseq
        %v1250 = vshrl.u32 %v1249, 7
        %v1251 = vsub.s32 %v1248, %v1250
        %v1252 = vrot.slane %v880, %v1251
        %v1254 = vunpack.c.l.s4 1966171168
        %v1255 = vunpack.c.0.s8 %v1254
        %v1256 = vlaneseq
        %v1257 = vshrl.u32 %v1256, 7
        %v1258 = vsub.s32 %v1255, %v1257
        %v1259 = vrot.slane %v1245, %v1258
        %v1260 = vcombine.high %v1252, %v1252
        %v1261 = vcombine.high %v1259, %v1259
        %v1263 = vunpack.c.l.s4 1966171168
        %v1264 = vunpack.c.0.s8 %v1263
        %v1265 = vlaneseq
        %v1266 = vshrl.u32 %v1265, 7
        %v1267 = vsub.s32 %v1264, %v1266
        %v1268 = vrot.slane %v1252, %v1267
        %v1270 = vunpack.c.l.s4 1966171168
        %v1271 = vunpack.c.0.s8 %v1270
        %v1272 = vlaneseq
        %v1273 = vshrl.u32 %v1272, 7
        %v1274 = vsub.s32 %v1271, %v1273
        %v1275 = vrot.slane %v1259, %v1274
        %v1277 = vunpack.c.l.s4 1966171168
        %v1278 = vunpack.c.0.s8 %v1277
        %v1279 = vlaneseq
        %v1280 = vshrl.u32 %v1279, 7
        %v1281 = vsub.s32 %v1278, %v1280
        %v1282 = vrot.slane %v1260, %v1281
        %v1284 = vunpack.c.l.s4 1966171168
        %v1285 = vunpack.c.0.s8 %v1284
        %v1286 = vlaneseq
        %v1287 = vshrl.u32 %v1286, 7
        %v1288 = vsub.s32 %v1285, %v1287
        %v1289 = vrot.slane %v1261, %v1288
        %v1290 = vcombine.high %v1268, %v1268
        %v1291 = vcombine.high %v1275, %v1275
        %v1292 = vcombine.high %v1282, %v1282
        %v1293 = vcombine.high %v1289, %v1289
        %v1294 = vcombine.high %v883, %v883
        %v1296 = vunpack.c.l.s4 1966171168
        %v1297 = vunpack.c.0.s8 %v1296
        %v1298 = vlaneseq
        %v1299 = vshrl.u32 %v1298, 7
        %v1300 = vsub.s32 %v1297, %v1299
        %v1301 = vrot.slane %v883, %v1300
        %v1303 = vunpack.c.l.s4 1966171168
        %v1304 = vunpack.c.0.s8 %v1303
        %v1305 = vlaneseq
        %v1306 = vshrl.u32 %v1305, 7
        %v1307 = vsub.s32 %v1304, %v1306
        %v1308 = vrot.slane %v1294, %v1307
        %v1309 = vcombine.high %v1301, %v1301
        %v1310 = vcombine.high %v1308, %v1308
        %v1312 = vunpack.c.l.s4 1966171168
        %v1313 = vunpack.c.0.s8 %v1312
        %v1314 = vlaneseq
        %v1315 = vshrl.u32 %v1314, 7
        %v1316 = vsub.s32 %v1313, %v1315
        %v1317 = vrot.slane %v1301, %v1316
        %v1319 = vunpack.c.l.s4 1966171168
        %v1320 = vunpack.c.0.s8 %v1319
        %v1321 = vlaneseq
        %v1322 = vshrl.u32 %v1321, 7
        %v1323 = vsub.s32 %v1320, %v1322
        %v1324 = vrot.slane %v1308, %v1323
        %v1326 = vunpack.c.l.s4 1966171168
        %v1327 = vunpack.c.0.s8 %v1326
        %v1328 = vlaneseq
        %v1329 = vshrl.u32 %v1328, 7
        %v1330 = vsub.s32 %v1327, %v1329
        %v1331 = vrot.slane %v1309, %v1330
        %v1333 = vunpack.c.l.s4 1966171168
        %v1334 = vunpack.c.0.s8 %v1333
        %v1335 = vlaneseq
        %v1336 = vshrl.u32 %v1335, 7
        %v1337 = vsub.s32 %v1334, %v1336
        %v1338 = vrot.slane %v1310, %v1337
        %v1339 = vcombine.high %v1317, %v1317
        %v1340 = vcombine.high %v1324, %v1324
        %v1341 = vcombine.high %v1331, %v1331
        %v1342 = vcombine.high %v1338, %v1338
        %v1343 = vcombine.high %v888, %v888
        %v1345 = vunpack.c.l.s4 1966171168
        %v1346 = vunpack.c.0.s8 %v1345
        %v1347 = vlaneseq
        %v1348 = vshrl.u32 %v1347, 7
        %v1349 = vsub.s32 %v1346, %v1348
        %v1350 = vrot.slane %v888, %v1349
        %v1352 = vunpack.c.l.s4 1966171168
        %v1353 = vunpack.c.0.s8 %v1352
        %v1354 = vlaneseq
        %v1355 = vshrl.u32 %v1354, 7
        %v1356 = vsub.s32 %v1353, %v1355
        %v1357 = vrot.slane %v1343, %v1356
        %v1358 = vcombine.high %v1350, %v1350
        %v1359 = vcombine.high %v1357, %v1357
        %v1361 = vunpack.c.l.s4 1966171168
        %v1362 = vunpack.c.0.s8 %v1361
        %v1363 = vlaneseq
        %v1364 = vshrl.u32 %v1363, 7
        %v1365 = vsub.s32 %v1362, %v1364
        %v1366 = vrot.slane %v1350, %v1365
        %v1368 = vunpack.c.l.s4 1966171168
        %v1369 = vunpack.c.0.s8 %v1368
        %v1370 = vlaneseq
        %v1371 = vshrl.u32 %v1370, 7
        %v1372 = vsub.s32 %v1369, %v1371
        %v1373 = vrot.slane %v1357, %v1372
        %v1375 = vunpack.c.l.s4 1966171168
        %v1376 = vunpack.c.0.s8 %v1375
        %v1377 = vlaneseq
        %v1378 = vshrl.u32 %v1377, 7
        %v1379 = vsub.s32 %v1376, %v1378
        %v1380 = vrot.slane %v1358, %v1379
        %v1382 = vunpack.c.l.s4 1966171168
        %v1383 = vunpack.c.0.s8 %v1382
        %v1384 = vlaneseq
        %v1385 = vshrl.u32 %v1384, 7
        %v1386 = vsub.s32 %v1383, %v1385
        %v1387 = vrot.slane %v1359, %v1386
        %v1388 = vcombine.high %v1366, %v1366
        %v1389 = vcombine.high %v1373, %v1373
        %v1390 = vcombine.high %v1380, %v1380
        %v1391 = vcombine.high %v1387, %v1387
        %v1392 = vcombine.high %v891, %v891
        %v1394 = vunpack.c.l.s4 1966171168
        %v1395 = vunpack.c.0.s8 %v1394
        %v1396 = vlaneseq
        %v1397 = vshrl.u32 %v1396, 7
        %v1398 = vsub.s32 %v1395, %v1397
        %v1399 = vrot.slane %v891, %v1398
        %v1401 = vunpack.c.l.s4 1966171168
        %v1402 = vunpack.c.0.s8 %v1401
        %v1403 = vlaneseq
        %v1404 = vshrl.u32 %v1403, 7
        %v1405 = vsub.s32 %v1402, %v1404
        %v1406 = vrot.slane %v1392, %v1405
        %v1407 = vcombine.high %v1399, %v1399
        %v1408 = vcombine.high %v1406, %v1406
        %v1410 = vunpack.c.l.s4 1966171168
        %v1411 = vunpack.c.0.s8 %v1410
        %v1412 = vlaneseq
        %v1413 = vshrl.u32 %v1412, 7
        %v1414 = vsub.s32 %v1411, %v1413
        %v1415 = vrot.slane %v1399, %v1414
        %v1417 = vunpack.c.l.s4 1966171168
        %v1418 = vunpack.c.0.s8 %v1417
        %v1419 = vlaneseq
        %v1420 = vshrl.u32 %v1419, 7
        %v1421 = vsub.s32 %v1418, %v1420
        %v1422 = vrot.slane %v1406, %v1421
        %v1424 = vunpack.c.l.s4 1966171168
        %v1425 = vunpack.c.0.s8 %v1424
        %v1426 = vlaneseq
        %v1427 = vshrl.u32 %v1426, 7
        %v1428 = vsub.s32 %v1425, %v1427
        %v1429 = vrot.slane %v1407, %v1428
        %v1431 = vunpack.c.l.s4 1966171168
        %v1432 = vunpack.c.0.s8 %v1431
        %v1433 = vlaneseq
        %v1434 = vshrl.u32 %v1433, 7
        %v1435 = vsub.s32 %v1432, %v1434
        %v1436 = vrot.slane %v1408, %v1435
        %v1437 = vcombine.high %v1415, %v1415
        %v1438 = vcombine.high %v1422, %v1422
        %v1439 = vcombine.high %v1429, %v1429
        %v1440 = vcombine.high %v1436, %v1436
        %v1441 = vcombine.high %v896, %v896
        %v1443 = vunpack.c.l.s4 1966171168
        %v1444 = vunpack.c.0.s8 %v1443
        %v1445 = vlaneseq
        %v1446 = vshrl.u32 %v1445, 7
        %v1447 = vsub.s32 %v1444, %v1446
        %v1448 = vrot.slane %v896, %v1447
        %v1450 = vunpack.c.l.s4 1966171168
        %v1451 = vunpack.c.0.s8 %v1450
        %v1452 = vlaneseq
        %v1453 = vshrl.u32 %v1452, 7
        %v1454 = vsub.s32 %v1451, %v1453
        %v1455 = vrot.slane %v1441, %v1454
        %v1456 = vcombine.high %v1448, %v1448
        %v1457 = vcombine.high %v1455, %v1455
        %v1459 = vunpack.c.l.s4 1966171168
        %v1460 = vunpack.c.0.s8 %v1459
        %v1461 = vlaneseq
        %v1462 = vshrl.u32 %v1461, 7
        %v1463 = vsub.s32 %v1460, %v1462
        %v1464 = vrot.slane %v1448, %v1463
        %v1466 = vunpack.c.l.s4 1966171168
        %v1467 = vunpack.c.0.s8 %v1466
        %v1468 = vlaneseq
        %v1469 = vshrl.u32 %v1468, 7
        %v1470 = vsub.s32 %v1467, %v1469
        %v1471 = vrot.slane %v1455, %v1470
        %v1473 = vunpack.c.l.s4 1966171168
        %v1474 = vunpack.c.0.s8 %v1473
        %v1475 = vlaneseq
        %v1476 = vshrl.u32 %v1475, 7
        %v1477 = vsub.s32 %v1474, %v1476
        %v1478 = vrot.slane %v1456, %v1477
        %v1480 = vunpack.c.l.s4 1966171168
        %v1481 = vunpack.c.0.s8 %v1480
        %v1482 = vlaneseq
        %v1483 = vshrl.u32 %v1482, 7
        %v1484 = vsub.s32 %v1481, %v1483
        %v1485 = vrot.slane %v1457, %v1484
        %v1486 = vcombine.high %v1464, %v1464
        %v1487 = vcombine.high %v1471, %v1471
        %v1488 = vcombine.high %v1478, %v1478
        %v1489 = vcombine.high %v1485, %v1485
        %v1490 = vcombine.high %v899, %v899
        %v1492 = vunpack.c.l.s4 1966171168
        %v1493 = vunpack.c.0.s8 %v1492
        %v1494 = vlaneseq
        %v1495 = vshrl.u32 %v1494, 7
        %v1496 = vsub.s32 %v1493, %v1495
        %v1497 = vrot.slane %v899, %v1496
        %v1499 = vunpack.c.l.s4 1966171168
        %v1500 = vunpack.c.0.s8 %v1499
        %v1501 = vlaneseq
        %v1502 = vshrl.u32 %v1501, 7
        %v1503 = vsub.s32 %v1500, %v1502
        %v1504 = vrot.slane %v1490, %v1503
        %v1505 = vcombine.high %v1497, %v1497
        %v1506 = vcombine.high %v1504, %v1504
        %v1508 = vunpack.c.l.s4 1966171168
        %v1509 = vunpack.c.0.s8 %v1508
        %v1510 = vlaneseq
        %v1511 = vshrl.u32 %v1510, 7
        %v1512 = vsub.s32 %v1509, %v1511
        %v1513 = vrot.slane %v1497, %v1512
        %v1515 = vunpack.c.l.s4 1966171168
        %v1516 = vunpack.c.0.s8 %v1515
        %v1517 = vlaneseq
        %v1518 = vshrl.u32 %v1517, 7
        %v1519 = vsub.s32 %v1516, %v1518
        %v1520 = vrot.slane %v1504, %v1519
        %v1522 = vunpack.c.l.s4 1966171168
        %v1523 = vunpack.c.0.s8 %v1522
        %v1524 = vlaneseq
        %v1525 = vshrl.u32 %v1524, 7
        %v1526 = vsub.s32 %v1523, %v1525
        %v1527 = vrot.slane %v1505, %v1526
        %v1529 = vunpack.c.l.s4 1966171168
        %v1530 = vunpack.c.0.s8 %v1529
        %v1531 = vlaneseq
        %v1532 = vshrl.u32 %v1531, 7
        %v1533 = vsub.s32 %v1530, %v1532
        %v1534 = vrot.slane %v1506, %v1533
        %v1535 = vcombine.high %v1513, %v1513
        %v1536 = vcombine.high %v1520, %v1520
        %v1537 = vcombine.high %v1527, %v1527
        %v1538 = vcombine.high %v1534, %v1534
        %v1539 = vlaneseq
        %v1540 = vshrl.u32 %v1539, 7
        %v1541 = vsub.s32 0, %v1540
        %v1542 = vrot.slane %v1268, %v1541
        %v1543 = vlaneseq
        %v1544 = vshrl.u32 %v1543, 7
        %v1545 = vsub.s32 0, %v1544
        %v1546 = vrot.slane %v1282, %v1545
        %v1547 = vlaneseq
        %v1548 = vshrl.u32 %v1547, 7
        %v1549 = vsub.s32 0, %v1548
        %v1550 = vrot.slane %v1290, %v1549
        %v1551 = vlaneseq
        %v1552 = vshrl.u32 %v1551, 7
        %v1553 = vsub.s32 0, %v1552
        %v1554 = vrot.slane %v1292, %v1553
        %v1555 = vlaneseq
        %v1556 = vshrl.u32 %v1555, 7
        %v1557 = vsub.s32 0, %v1556
        %v1558 = vrot.slane %v1275, %v1557
        %v1559 = vlaneseq
        %v1560 = vshrl.u32 %v1559, 7
        %v1561 = vsub.s32 0, %v1560
        %v1562 = vrot.slane %v1289, %v1561
        %v1563 = vlaneseq
        %v1564 = vshrl.u32 %v1563, 7
        %v1565 = vsub.s32 0, %v1564
        %v1566 = vrot.slane %v1291, %v1565
        %v1567 = vlaneseq
        %v1568 = vshrl.u32 %v1567, 7
        %v1569 = vsub.s32 0, %v1568
        %v1570 = vrot.slane %v1293, %v1569
        %v1571 = vlaneseq
        %v1572 = vshrl.u32 %v1571, 7
        %v1573 = vsub.s32 0, %v1572
        %v1574 = vrot.slane %v1317, %v1573
        %v1575 = vlaneseq
        %v1576 = vshrl.u32 %v1575, 7
        %v1577 = vsub.s32 0, %v1576
        %v1578 = vrot.slane %v1331, %v1577
        %v1579 = vlaneseq
        %v1580 = vshrl.u32 %v1579, 7
        %v1581 = vsub.s32 0, %v1580
        %v1582 = vrot.slane %v1339, %v1581
        %v1583 = vlaneseq
        %v1584 = vshrl.u32 %v1583, 7
        %v1585 = vsub.s32 0, %v1584
        %v1586 = vrot.slane %v1341, %v1585
        %v1587 = vlaneseq
        %v1588 = vshrl.u32 %v1587, 7
        %v1589 = vsub.s32 0, %v1588
        %v1590 = vrot.slane %v1324, %v1589
        %v1591 = vlaneseq
        %v1592 = vshrl.u32 %v1591, 7
        %v1593 = vsub.s32 0, %v1592
        %v1594 = vrot.slane %v1338, %v1593
        %v1595 = vlaneseq
        %v1596 = vshrl.u32 %v1595, 7
        %v1597 = vsub.s32 0, %v1596
        %v1598 = vrot.slane %v1340, %v1597
        %v1599 = vlaneseq
        %v1600 = vshrl.u32 %v1599, 7
        %v1601 = vsub.s32 0, %v1600
        %v1602 = vrot.slane %v1342, %v1601
        %v1603 = vlaneseq
        %v1604 = vshrl.u32 %v1603, 7
        %v1605 = vsub.s32 0, %v1604
        %v1606 = vrot.slane %v1366, %v1605
        %v1607 = vlaneseq
        %v1608 = vshrl.u32 %v1607, 7
        %v1609 = vsub.s32 0, %v1608
        %v1610 = vrot.slane %v1380, %v1609
        %v1611 = vlaneseq
        %v1612 = vshrl.u32 %v1611, 7
        %v1613 = vsub.s32 0, %v1612
        %v1614 = vrot.slane %v1388, %v1613
        %v1615 = vlaneseq
        %v1616 = vshrl.u32 %v1615, 7
        %v1617 = vsub.s32 0, %v1616
        %v1618 = vrot.slane %v1390, %v1617
        %v1619 = vlaneseq
        %v1620 = vshrl.u32 %v1619, 7
        %v1621 = vsub.s32 0, %v1620
        %v1622 = vrot.slane %v1373, %v1621
        %v1623 = vlaneseq
        %v1624 = vshrl.u32 %v1623, 7
        %v1625 = vsub.s32 0, %v1624
        %v1626 = vrot.slane %v1387, %v1625
        %v1627 = vlaneseq
        %v1628 = vshrl.u32 %v1627, 7
        %v1629 = vsub.s32 0, %v1628
        %v1630 = vrot.slane %v1389, %v1629
        %v1631 = vlaneseq
        %v1632 = vshrl.u32 %v1631, 7
        %v1633 = vsub.s32 0, %v1632
        %v1634 = vrot.slane %v1391, %v1633
        %v1635 = vlaneseq
        %v1636 = vshrl.u32 %v1635, 7
        %v1637 = vsub.s32 0, %v1636
        %v1638 = vrot.slane %v1415, %v1637
        %v1639 = vlaneseq
        %v1640 = vshrl.u32 %v1639, 7
        %v1641 = vsub.s32 0, %v1640
        %v1642 = vrot.slane %v1429, %v1641
        %v1643 = vlaneseq
        %v1644 = vshrl.u32 %v1643, 7
        %v1645 = vsub.s32 0, %v1644
        %v1646 = vrot.slane %v1437, %v1645
        %v1647 = vlaneseq
        %v1648 = vshrl.u32 %v1647, 7
        %v1649 = vsub.s32 0, %v1648
        %v1650 = vrot.slane %v1439, %v1649
        %v1651 = vlaneseq
        %v1652 = vshrl.u32 %v1651, 7
        %v1653 = vsub.s32 0, %v1652
        %v1654 = vrot.slane %v1422, %v1653
        %v1655 = vlaneseq
        %v1656 = vshrl.u32 %v1655, 7
        %v1657 = vsub.s32 0, %v1656
        %v1658 = vrot.slane %v1436, %v1657
        %v1659 = vlaneseq
        %v1660 = vshrl.u32 %v1659, 7
        %v1661 = vsub.s32 0, %v1660
        %v1662 = vrot.slane %v1438, %v1661
        %v1663 = vlaneseq
        %v1664 = vshrl.u32 %v1663, 7
        %v1665 = vsub.s32 0, %v1664
        %v1666 = vrot.slane %v1440, %v1665
        %v1667 = vlaneseq
        %v1668 = vshrl.u32 %v1667, 7
        %v1669 = vsub.s32 0, %v1668
        %v1670 = vrot.slane %v1464, %v1669
        %v1671 = vlaneseq
        %v1672 = vshrl.u32 %v1671, 7
        %v1673 = vsub.s32 0, %v1672
        %v1674 = vrot.slane %v1478, %v1673
        %v1675 = vlaneseq
        %v1676 = vshrl.u32 %v1675, 7
        %v1677 = vsub.s32 0, %v1676
        %v1678 = vrot.slane %v1486, %v1677
        %v1679 = vlaneseq
        %v1680 = vshrl.u32 %v1679, 7
        %v1681 = vsub.s32 0, %v1680
        %v1682 = vrot.slane %v1488, %v1681
        %v1683 = vlaneseq
        %v1684 = vshrl.u32 %v1683, 7
        %v1685 = vsub.s32 0, %v1684
        %v1686 = vrot.slane %v1471, %v1685
        %v1687 = vlaneseq
        %v1688 = vshrl.u32 %v1687, 7
        %v1689 = vsub.s32 0, %v1688
        %v1690 = vrot.slane %v1485, %v1689
        %v1691 = vlaneseq
        %v1692 = vshrl.u32 %v1691, 7
        %v1693 = vsub.s32 0, %v1692
        %v1694 = vrot.slane %v1487, %v1693
        %v1695 = vlaneseq
        %v1696 = vshrl.u32 %v1695, 7
        %v1697 = vsub.s32 0, %v1696
        %v1698 = vrot.slane %v1489, %v1697
        %v1699 = vlaneseq
        %v1700 = vshrl.u32 %v1699, 7
        %v1701 = vsub.s32 0, %v1700
        %v1702 = vrot.slane %v1513, %v1701
        %v1703 = vlaneseq
        %v1704 = vshrl.u32 %v1703, 7
        %v1705 = vsub.s32 0, %v1704
        %v1706 = vrot.slane %v1527, %v1705
        %v1707 = vlaneseq
        %v1708 = vshrl.u32 %v1707, 7
        %v1709 = vsub.s32 0, %v1708
        %v1710 = vrot.slane %v1535, %v1709
        %v1711 = vlaneseq
        %v1712 = vshrl.u32 %v1711, 7
        %v1713 = vsub.s32 0, %v1712
        %v1714 = vrot.slane %v1537, %v1713
        %v1715 = vlaneseq
        %v1716 = vshrl.u32 %v1715, 7
        %v1717 = vsub.s32 0, %v1716
        %v1718 = vrot.slane %v1520, %v1717
        %v1719 = vlaneseq
        %v1720 = vshrl.u32 %v1719, 7
        %v1721 = vsub.s32 0, %v1720
        %v1722 = vrot.slane %v1534, %v1721
        %v1723 = vlaneseq
        %v1724 = vshrl.u32 %v1723, 7
        %v1725 = vsub.s32 0, %v1724
        %v1726 = vrot.slane %v1536, %v1725
        %v1727 = vlaneseq
        %v1728 = vshrl.u32 %v1727, 7
        %v1729 = vsub.s32 0, %v1728
        %v1730 = vrot.slane %v1538, %v1729
        %v1779 = vadd.f32 %v1049, %v1542
        %v1780 = vadd.f32 %v1052, %v1546
        %v1781 = vadd.f32 %v1057, %v1550
        %v1782 = vadd.f32 %v1060, %v1554
        %v1783 = vadd.f32 %v1065, %v1558
        %v1784 = vadd.f32 %v1068, %v1562
        %v1785 = vadd.f32 %v1073, %v1566
        %v1786 = vadd.f32 %v1076, %v1570
        %v1787 = vadd.f32 %v1081, %v1574
        %v1788 = vadd.f32 %v1084, %v1578
        %v1789 = vadd.f32 %v1089, %v1582
        %v1790 = vadd.f32 %v1092, %v1586
        %v1791 = vadd.f32 %v1097, %v1590
        %v1792 = vadd.f32 %v1100, %v1594
        %v1793 = vadd.f32 %v1105, %v1598
        %v1794 = vadd.f32 %v1108, %v1602
        %v1795 = vadd.f32 %v1113, %v1606
        %v1796 = vadd.f32 %v1116, %v1610
        %v1797 = vadd.f32 %v1121, %v1614
        %v1798 = vadd.f32 %v1124, %v1618
        %v1799 = vadd.f32 %v1129, %v1622
        %v1800 = vadd.f32 %v1132, %v1626
        %v1801 = vadd.f32 %v1137, %v1630
        %v1802 = vadd.f32 %v1140, %v1634
        %v1803 = vadd.f32 %v1145, %v1638
        %v1804 = vadd.f32 %v1148, %v1642
        %v1805 = vadd.f32 %v1153, %v1646
        %v1806 = vadd.f32 %v1156, %v1650
        %v1807 = vadd.f32 %v1161, %v1654
        %v1808 = vadd.f32 %v1164, %v1658
        %v1809 = vadd.f32 %v1169, %v1662
        %v1810 = vadd.f32 %v1172, %v1666
        %v1811 = vadd.f32 %v1177, %v1670
        %v1812 = vadd.f32 %v1180, %v1674
        %v1813 = vadd.f32 %v1185, %v1678
        %v1814 = vadd.f32 %v1188, %v1682
        %v1815 = vadd.f32 %v1193, %v1686
        %v1816 = vadd.f32 %v1196, %v1690
        %v1817 = vadd.f32 %v1201, %v1694
        %v1818 = vadd.f32 %v1204, %v1698
        %v1819 = vadd.f32 %v1209, %v1702
        %v1820 = vadd.f32 %v1212, %v1706
        %v1821 = vadd.f32 %v1217, %v1710
        %v1822 = vadd.f32 %v1220, %v1714
        %v1823 = vadd.f32 %v1225, %v1718
        %v1824 = vadd.f32 %v1228, %v1722
        %v1825 = vadd.f32 %v1233, %v1726
        %v1826 = vadd.f32 %v1236, %v1730
        %v1827 = vpack.c.bf16 %v1780, %v1779
        %v1828 = vpack.c.bf16 %v1782, %v1781
        %v1829 = vpack.c.bf16 %v1784, %v1783
        %v1830 = vpack.c.bf16 %v1786, %v1785
        %v1831 = vpack.c.bf16 %v1788, %v1787
        %v1832 = vpack.c.bf16 %v1790, %v1789
        %v1833 = vpack.c.bf16 %v1792, %v1791
        %v1834 = vpack.c.bf16 %v1794, %v1793
        %v1835 = vpack.c.bf16 %v1796, %v1795
        %v1836 = vpack.c.bf16 %v1798, %v1797
        %v1837 = vpack.c.bf16 %v1800, %v1799
        %v1838 = vpack.c.bf16 %v1802, %v1801
        %v1839 = vpack.c.bf16 %v1804, %v1803
        %v1840 = vpack.c.bf16 %v1806, %v1805
        %v1841 = vpack.c.bf16 %v1808, %v1807
        %v1842 = vpack.c.bf16 %v1810, %v1809
        %v1843 = vpack.c.bf16 %v1812, %v1811
        %v1844 = vpack.c.bf16 %v1814, %v1813
        %v1845 = vpack.c.bf16 %v1816, %v1815
        %v1846 = vpack.c.bf16 %v1818, %v1817
        %v1847 = vpack.c.bf16 %v1820, %v1819
        %v1848 = vpack.c.bf16 %v1822, %v1821
        %v1849 = vpack.c.bf16 %v1824, %v1823
        %v1850 = vpack.c.bf16 %v1826, %v1825
        %v1851 = vmul.bf16 %v1827, 1056980736
        %v1852 = vmul.bf16 %v1828, 1056980736
        %v1853 = vmul.bf16 %v1829, 1056980736
        %v1854 = vmul.bf16 %v1830, 1056980736
        %v1855 = vmul.bf16 %v1831, 1056980736
        %v1856 = vmul.bf16 %v1832, 1056980736
        %v1857 = vmul.bf16 %v1833, 1056980736
        %v1858 = vmul.bf16 %v1834, 1056980736
        %v1859 = vmul.bf16 %v1835, 1056980736
        %v1860 = vmul.bf16 %v1836, 1056980736
        %v1861 = vmul.bf16 %v1837, 1056980736
        %v1862 = vmul.bf16 %v1838, 1056980736
        %v1863 = vmul.bf16 %v1839, 1056980736
        %v1864 = vmul.bf16 %v1840, 1056980736
        %v1865 = vmul.bf16 %v1841, 1056980736
        %v1866 = vmul.bf16 %v1842, 1056980736
        %v1867 = vmul.bf16 %v1843, 1056980736
        %v1868 = vmul.bf16 %v1844, 1056980736
        %v1869 = vmul.bf16 %v1845, 1056980736
        %v1870 = vmul.bf16 %v1846, 1056980736
        %v1871 = vmul.bf16 %v1847, 1056980736
        %v1872 = vmul.bf16 %v1848, 1056980736
        %v1873 = vmul.bf16 %v1849, 1056980736
        %v1874 = vmul.bf16 %v1850, 1056980736
        %v1875 = vmul.bf16 %v1827, %v1827
        %v1876 = vmul.bf16 %v1828, %v1828
        %v1877 = vmul.bf16 %v1829, %v1829
        %v1878 = vmul.bf16 %v1830, %v1830
        %v1879 = vmul.bf16 %v1831, %v1831
        %v1880 = vmul.bf16 %v1832, %v1832
        %v1881 = vmul.bf16 %v1833, %v1833
        %v1882 = vmul.bf16 %v1834, %v1834
        %v1883 = vmul.bf16 %v1835, %v1835
        %v1884 = vmul.bf16 %v1836, %v1836
        %v1885 = vmul.bf16 %v1837, %v1837
        %v1886 = vmul.bf16 %v1838, %v1838
        %v1887 = vmul.bf16 %v1839, %v1839
        %v1888 = vmul.bf16 %v1840, %v1840
        %v1889 = vmul.bf16 %v1841, %v1841
        %v1890 = vmul.bf16 %v1842, %v1842
        %v1891 = vmul.bf16 %v1843, %v1843
        %v1892 = vmul.bf16 %v1844, %v1844
        %v1893 = vmul.bf16 %v1845, %v1845
        %v1894 = vmul.bf16 %v1846, %v1846
        %v1895 = vmul.bf16 %v1847, %v1847
        %v1896 = vmul.bf16 %v1848, %v1848
        %v1897 = vmul.bf16 %v1849, %v1849
        %v1898 = vmul.bf16 %v1850, %v1850
        %v1899 = vmul.bf16 %v1875, %v1827
        %v1900 = vmul.bf16 %v1876, %v1828
        %v1901 = vmul.bf16 %v1877, %v1829
        %v1902 = vmul.bf16 %v1878, %v1830
        %v1903 = vmul.bf16 %v1879, %v1831
        %v1904 = vmul.bf16 %v1880, %v1832
        %v1905 = vmul.bf16 %v1881, %v1833
        %v1906 = vmul.bf16 %v1882, %v1834
        %v1907 = vmul.bf16 %v1883, %v1835
        %v1908 = vmul.bf16 %v1884, %v1836
        %v1909 = vmul.bf16 %v1885, %v1837
        %v1910 = vmul.bf16 %v1886, %v1838
        %v1911 = vmul.bf16 %v1887, %v1839
        %v1912 = vmul.bf16 %v1888, %v1840
        %v1913 = vmul.bf16 %v1889, %v1841
        %v1914 = vmul.bf16 %v1890, %v1842
        %v1915 = vmul.bf16 %v1891, %v1843
        %v1916 = vmul.bf16 %v1892, %v1844
        %v1917 = vmul.bf16 %v1893, %v1845
        %v1918 = vmul.bf16 %v1894, %v1846
        %v1919 = vmul.bf16 %v1895, %v1847
        %v1920 = vmul.bf16 %v1896, %v1848
        %v1921 = vmul.bf16 %v1897, %v1849
        %v1922 = vmul.bf16 %v1898, %v1850
        %v1923 = vmul.bf16 %v1899, 1027030327
        %v1924 = vmul.bf16 %v1900, 1027030327
        %v1925 = vmul.bf16 %v1901, 1027030327
        %v1926 = vmul.bf16 %v1902, 1027030327
        %v1927 = vmul.bf16 %v1903, 1027030327
        %v1928 = vmul.bf16 %v1904, 1027030327
        %v1929 = vmul.bf16 %v1905, 1027030327
        %v1930 = vmul.bf16 %v1906, 1027030327
        %v1931 = vmul.bf16 %v1907, 1027030327
        %v1932 = vmul.bf16 %v1908, 1027030327
        %v1933 = vmul.bf16 %v1909, 1027030327
        %v1934 = vmul.bf16 %v1910, 1027030327
        %v1935 = vmul.bf16 %v1911, 1027030327
        %v1936 = vmul.bf16 %v1912, 1027030327
        %v1937 = vmul.bf16 %v1913, 1027030327
        %v1938 = vmul.bf16 %v1914, 1027030327
        %v1939 = vmul.bf16 %v1915, 1027030327
        %v1940 = vmul.bf16 %v1916, 1027030327
        %v1941 = vmul.bf16 %v1917, 1027030327
        %v1942 = vmul.bf16 %v1918, 1027030327
        %v1943 = vmul.bf16 %v1919, 1027030327
        %v1944 = vmul.bf16 %v1920, 1027030327
        %v1945 = vmul.bf16 %v1921, 1027030327
        %v1946 = vmul.bf16 %v1922, 1027030327
        %v1947 = vadd.bf16 %v1827, %v1923
        %v1948 = vadd.bf16 %v1828, %v1924
        %v1949 = vadd.bf16 %v1829, %v1925
        %v1950 = vadd.bf16 %v1830, %v1926
        %v1951 = vadd.bf16 %v1831, %v1927
        %v1952 = vadd.bf16 %v1832, %v1928
        %v1953 = vadd.bf16 %v1833, %v1929
        %v1954 = vadd.bf16 %v1834, %v1930
        %v1955 = vadd.bf16 %v1835, %v1931
        %v1956 = vadd.bf16 %v1836, %v1932
        %v1957 = vadd.bf16 %v1837, %v1933
        %v1958 = vadd.bf16 %v1838, %v1934
        %v1959 = vadd.bf16 %v1839, %v1935
        %v1960 = vadd.bf16 %v1840, %v1936
        %v1961 = vadd.bf16 %v1841, %v1937
        %v1962 = vadd.bf16 %v1842, %v1938
        %v1963 = vadd.bf16 %v1843, %v1939
        %v1964 = vadd.bf16 %v1844, %v1940
        %v1965 = vadd.bf16 %v1845, %v1941
        %v1966 = vadd.bf16 %v1846, %v1942
        %v1967 = vadd.bf16 %v1847, %v1943
        %v1968 = vadd.bf16 %v1848, %v1944
        %v1969 = vadd.bf16 %v1849, %v1945
        %v1970 = vadd.bf16 %v1850, %v1946
        %v1971 = vmul.bf16 %v1947, 1061961548
        %v1972 = vmul.bf16 %v1948, 1061961548
        %v1973 = vmul.bf16 %v1949, 1061961548
        %v1974 = vmul.bf16 %v1950, 1061961548
        %v1975 = vmul.bf16 %v1951, 1061961548
        %v1976 = vmul.bf16 %v1952, 1061961548
        %v1977 = vmul.bf16 %v1953, 1061961548
        %v1978 = vmul.bf16 %v1954, 1061961548
        %v1979 = vmul.bf16 %v1955, 1061961548
        %v1980 = vmul.bf16 %v1956, 1061961548
        %v1981 = vmul.bf16 %v1957, 1061961548
        %v1982 = vmul.bf16 %v1958, 1061961548
        %v1983 = vmul.bf16 %v1959, 1061961548
        %v1984 = vmul.bf16 %v1960, 1061961548
        %v1985 = vmul.bf16 %v1961, 1061961548
        %v1986 = vmul.bf16 %v1962, 1061961548
        %v1987 = vmul.bf16 %v1963, 1061961548
        %v1988 = vmul.bf16 %v1964, 1061961548
        %v1989 = vmul.bf16 %v1965, 1061961548
        %v1990 = vmul.bf16 %v1966, 1061961548
        %v1991 = vmul.bf16 %v1967, 1061961548
        %v1992 = vmul.bf16 %v1968, 1061961548
        %v1993 = vmul.bf16 %v1969, 1061961548
        %v1994 = vmul.bf16 %v1970, 1061961548
        %v1995 = vtanh.bf16.pop %v1971
        %v1996 = vtanh.bf16.pop %v1972
        %v1997 = vtanh.bf16.pop %v1973
        %v1998 = vtanh.bf16.pop %v1974
        %v1999 = vtanh.bf16.pop %v1975
        %v2000 = vtanh.bf16.pop %v1976
        %v2001 = vtanh.bf16.pop %v1977
        %v2002 = vtanh.bf16.pop %v1978
        %v2003 = vtanh.bf16.pop %v1979
        %v2004 = vtanh.bf16.pop %v1980
        %v2005 = vtanh.bf16.pop %v1981
        %v2006 = vtanh.bf16.pop %v1982
        %v2007 = vtanh.bf16.pop %v1983
        %v2008 = vtanh.bf16.pop %v1984
        %v2009 = vtanh.bf16.pop %v1985
        %v2010 = vtanh.bf16.pop %v1986
        %v2011 = vtanh.bf16.pop %v1987
        %v2012 = vtanh.bf16.pop %v1988
        %v2013 = vtanh.bf16.pop %v1989
        %v2014 = vtanh.bf16.pop %v1990
        %v2015 = vtanh.bf16.pop %v1991
        %v2016 = vtanh.bf16.pop %v1992
        %v2017 = vtanh.bf16.pop %v1993
        %v2018 = vtanh.bf16.pop %v1994
        %v2019 = vadd.bf16 %v1995, 1065369472
        %v2020 = vadd.bf16 %v1996, 1065369472
        %v2021 = vadd.bf16 %v1997, 1065369472
        %v2022 = vadd.bf16 %v1998, 1065369472
        %v2023 = vadd.bf16 %v1999, 1065369472
        %v2024 = vadd.bf16 %v2000, 1065369472
        %v2025 = vadd.bf16 %v2001, 1065369472
        %v2026 = vadd.bf16 %v2002, 1065369472
        %v2027 = vadd.bf16 %v2003, 1065369472
        %v2028 = vadd.bf16 %v2004, 1065369472
        %v2029 = vadd.bf16 %v2005, 1065369472
        %v2030 = vadd.bf16 %v2006, 1065369472
        %v2031 = vadd.bf16 %v2007, 1065369472
        %v2032 = vadd.bf16 %v2008, 1065369472
        %v2033 = vadd.bf16 %v2009, 1065369472
        %v2034 = vadd.bf16 %v2010, 1065369472
        %v2035 = vadd.bf16 %v2011, 1065369472
        %v2036 = vadd.bf16 %v2012, 1065369472
        %v2037 = vadd.bf16 %v2013, 1065369472
        %v2038 = vadd.bf16 %v2014, 1065369472
        %v2039 = vadd.bf16 %v2015, 1065369472
        %v2040 = vadd.bf16 %v2016, 1065369472
        %v2041 = vadd.bf16 %v2017, 1065369472
        %v2042 = vadd.bf16 %v2018, 1065369472
        %v2043 = vmul.bf16 %v1851, %v2019
        %v2044 = vmul.bf16 %v1852, %v2020
        %v2045 = vmul.bf16 %v1853, %v2021
        %v2046 = vmul.bf16 %v1854, %v2022
        %v2047 = vmul.bf16 %v1855, %v2023
        %v2048 = vmul.bf16 %v1856, %v2024
        %v2049 = vmul.bf16 %v1857, %v2025
        %v2050 = vmul.bf16 %v1858, %v2026
        %v2051 = vmul.bf16 %v1859, %v2027
        %v2052 = vmul.bf16 %v1860, %v2028
        %v2053 = vmul.bf16 %v1861, %v2029
        %v2054 = vmul.bf16 %v1862, %v2030
        %v2055 = vmul.bf16 %v1863, %v2031
        %v2056 = vmul.bf16 %v1864, %v2032
        %v2057 = vmul.bf16 %v1865, %v2033
        %v2058 = vmul.bf16 %v1866, %v2034
        %v2059 = vmul.bf16 %v1867, %v2035
        %v2060 = vmul.bf16 %v1868, %v2036
        %v2061 = vmul.bf16 %v1869, %v2037
        %v2062 = vmul.bf16 %v1870, %v2038
        %v2063 = vmul.bf16 %v1871, %v2039
        %v2064 = vmul.bf16 %v1872, %v2040
        %v2065 = vmul.bf16 %v1873, %v2041
        %v2066 = vmul.bf16 %v1874, %v2042
        %v2067 = vld [vmem:[%s7] sm:$0xf]
        %v2068 = vld [vmem:[%s7 + $0x4] sm:$0xf]
        %v2069 = vld [vmem:[%s7 + $0x8] sm:$0xf]
        %v2070 = vld [vmem:[%s7 + $0xc] sm:$0xf]
        %v2071 = vld [vmem:[%s8] sm:$0x1]
        %v2073 = vlaneseq
        %v2074 = vshrl.u32 %v2073, 7
        %v2075 = vsub.s32 0, %v2074
        %v2076 = vrot.slane %v2071, %v2075
        %v2082 = vunpack.c.l.b16 %v2067
        %v2083 = vunpack.c.l.b16 %v2068
        %v2084 = vunpack.c.l.b16 %v2069
        %v2085 = vunpack.c.l.b16 %v2070
        %v2086 = vpack.c.b16 %v2083, %v2082
        %v2087 = vpack.c.b16 %v2085, %v2084
        %v2091 = vsel %vm835, %v2043, 0
        %v2094 = vsel %vm835, %v2044, 0
        %v2097 = vsel %vm835, %v2045, 0
        %v2100 = vsel %vm835, %v2046, 0
        %v2103 = vsel %vm835, %v2047, 0
        %v2106 = vsel %vm835, %v2048, 0
        %v2109 = vsel %vm835, %v2049, 0
        %v2112 = vsel %vm835, %v2050, 0
        %v2115 = vsel %vm835, %v2051, 0
        %v2118 = vsel %vm835, %v2052, 0
        %v2121 = vsel %vm835, %v2053, 0
        %v2124 = vsel %vm835, %v2054, 0
        %v2127 = vsel %vm835, %v2055, 0
        %v2130 = vsel %vm835, %v2056, 0
        %v2133 = vsel %vm835, %v2057, 0
        %v2136 = vsel %vm835, %v2058, 0
        %v2139 = vsel %vm835, %v2059, 0
        %v2142 = vsel %vm835, %v2060, 0
        %v2145 = vsel %vm835, %v2061, 0
        %v2148 = vsel %vm835, %v2062, 0
        %v2151 = vsel %vm835, %v2063, 0
        %v2154 = vsel %vm835, %v2064, 0
        %v2157 = vsel %vm835, %v2065, 0
        %v2160 = vsel %vm835, %v2066, 0
        %2162 = vmatprep.subr.bf16.mxu0 0
        %2163 = vmatpush1.bf16.msra.mxu0 0
        %2164 = vmatprep.subr.bf16.mxu0 0
        %2165 = vmatpush1.bf16.msra.mxu0 0
        %2166 = vmatprep.subr.bf16.mxu0 0
        %2167 = vmatpush1.bf16.msra.mxu0 0
        %2168 = vmatprep.subr.bf16.mxu0 0
        %2169 = vmatpush1.bf16.msra.mxu0 0
        %2170 = vmatprep.subr.bf16.mxu0 0
        %2171 = vmatpush1.bf16.msra.mxu0 0
        %2172 = vmatprep.subr.bf16.mxu0 0
        %2173 = vmatpush1.bf16.msra.mxu0 0
        %2174 = vmatprep.subr.bf16.mxu0 0
        %2175 = vmatpush1.bf16.msra.mxu0 %v2087
        %2176 = vmatprep.subr.bf16.mxu0 0
        %2177 = vmatpush1.bf16.msra.mxu0 %v2086
        %2178 = vmatprep.subr.bf16.mxu0 0
        %2179 = vmatpush2.bf16.msra.mxu0 0
        %2180 = vmatprep.subr.bf16.mxu0 0
        %2181 = vmatpush2.bf16.msra.mxu0 0
        %2182 = vmatprep.subr.bf16.mxu0 0
        %2183 = vmatpush2.bf16.msra.mxu0 0
        %2184 = vmatprep.subr.bf16.mxu0 0
        %2185 = vmatpush2.bf16.msra.mxu0 0
        %2186 = vmatprep.subr.bf16.mxu0 0
        %2187 = vmatpush2.bf16.msra.mxu0 0
        %2188 = vmatprep.subr.bf16.mxu0 0
        %2189 = vmatpush2.bf16.msra.mxu0 0
        %2190 = vmatprep.subr.bf16.mxu0 0
        %2191 = vmatpush2.bf16.msra.mxu0 0
        %2192 = vmatprep.subr.bf16.mxu0 0
        %2193 = vmatpush2.bf16.msra.mxu0 0
        %2194 = vmatprep.mubr.bf16.mxu0 0
        %2195 = vmatmul.mubr.bf16.gmra.mxu0 %v2091
        %v2196 = vpop.f32.mrf.mxu0
        %v2197 = vadd.f32 %v2076, %v2196
        %v2198 = vpop.f32.mrf.mxu0
        %v2199 = vpop.f32.mrf.mxu0
        %v2200 = vadd.f32 %v2076, %v2199
        %v2201 = vpop.f32.mrf.mxu0
        %2202 = vmatprep.mubr.bf16.mxu0 0
        %2203 = vmatmul.mubr.bf16.gmra.mxu0 %v2094
        %v2204 = vpop.f32.mrf.mxu0
        %v2205 = vadd.f32 %v2076, %v2204
        %v2206 = vpop.f32.mrf.mxu0
        %v2207 = vpop.f32.mrf.mxu0
        %v2208 = vadd.f32 %v2076, %v2207
        %v2209 = vpop.f32.mrf.mxu0
        %2210 = vmatprep.mubr.bf16.mxu0 0
        %2211 = vmatmul.mubr.bf16.gmra.mxu0 %v2097
        %v2212 = vpop.f32.mrf.mxu0
        %v2213 = vadd.f32 %v2076, %v2212
        %v2214 = vpop.f32.mrf.mxu0
        %v2215 = vpop.f32.mrf.mxu0
        %v2216 = vadd.f32 %v2076, %v2215
        %v2217 = vpop.f32.mrf.mxu0
        %2218 = vmatprep.mubr.bf16.mxu0 0
        %2219 = vmatmul.mubr.bf16.gmra.mxu0 %v2100
        %v2220 = vpop.f32.mrf.mxu0
        %v2221 = vadd.f32 %v2076, %v2220
        %v2222 = vpop.f32.mrf.mxu0
        %v2223 = vpop.f32.mrf.mxu0
        %v2224 = vadd.f32 %v2076, %v2223
        %v2225 = vpop.f32.mrf.mxu0
        %2226 = vmatprep.mubr.bf16.mxu0 0
        %2227 = vmatmul.mubr.bf16.gmra.mxu0 %v2103
        %v2228 = vpop.f32.mrf.mxu0
        %v2229 = vadd.f32 %v2076, %v2228
        %v2230 = vpop.f32.mrf.mxu0
        %v2231 = vpop.f32.mrf.mxu0
        %v2232 = vadd.f32 %v2076, %v2231
        %v2233 = vpop.f32.mrf.mxu0
        %2234 = vmatprep.mubr.bf16.mxu0 0
        %2235 = vmatmul.mubr.bf16.gmra.mxu0 %v2106
        %v2236 = vpop.f32.mrf.mxu0
        %v2237 = vadd.f32 %v2076, %v2236
        %v2238 = vpop.f32.mrf.mxu0
        %v2239 = vpop.f32.mrf.mxu0
        %v2240 = vadd.f32 %v2076, %v2239
        %v2241 = vpop.f32.mrf.mxu0
        %2242 = vmatprep.mubr.bf16.mxu0 0
        %2243 = vmatmul.mubr.bf16.gmra.mxu0 %v2109
        %v2244 = vpop.f32.mrf.mxu0
        %v2245 = vadd.f32 %v2076, %v2244
        %v2246 = vpop.f32.mrf.mxu0
        %v2247 = vpop.f32.mrf.mxu0
        %v2248 = vadd.f32 %v2076, %v2247
        %v2249 = vpop.f32.mrf.mxu0
        %2250 = vmatprep.mubr.bf16.mxu0 0
        %2251 = vmatmul.mubr.bf16.gmra.mxu0 %v2112
        %v2252 = vpop.f32.mrf.mxu0
        %v2253 = vadd.f32 %v2076, %v2252
        %v2254 = vpop.f32.mrf.mxu0
        %v2255 = vpop.f32.mrf.mxu0
        %v2256 = vadd.f32 %v2076, %v2255
        %v2257 = vpop.f32.mrf.mxu0
        %2258 = vmatprep.mubr.bf16.mxu0 0
        %2259 = vmatmul.mubr.bf16.gmra.mxu0 %v2115
        %v2260 = vpop.f32.mrf.mxu0
        %v2261 = vadd.f32 %v2076, %v2260
        %v2262 = vpop.f32.mrf.mxu0
        %v2263 = vpop.f32.mrf.mxu0
        %v2264 = vadd.f32 %v2076, %v2263
        %v2265 = vpop.f32.mrf.mxu0
        %2266 = vmatprep.mubr.bf16.mxu0 0
        %2267 = vmatmul.mubr.bf16.gmra.mxu0 %v2118
        %v2268 = vpop.f32.mrf.mxu0
        %v2269 = vadd.f32 %v2076, %v2268
        %v2270 = vpop.f32.mrf.mxu0
        %v2271 = vpop.f32.mrf.mxu0
        %v2272 = vadd.f32 %v2076, %v2271
        %v2273 = vpop.f32.mrf.mxu0
        %2274 = vmatprep.mubr.bf16.mxu0 0
        %2275 = vmatmul.mubr.bf16.gmra.mxu0 %v2121
        %v2276 = vpop.f32.mrf.mxu0
        %v2277 = vadd.f32 %v2076, %v2276
        %v2278 = vpop.f32.mrf.mxu0
        %v2279 = vpop.f32.mrf.mxu0
        %v2280 = vadd.f32 %v2076, %v2279
        %v2281 = vpop.f32.mrf.mxu0
        %2282 = vmatprep.mubr.bf16.mxu0 0
        %2283 = vmatmul.mubr.bf16.gmra.mxu0 %v2124
        %v2284 = vpop.f32.mrf.mxu0
        %v2285 = vadd.f32 %v2076, %v2284
        %v2286 = vpop.f32.mrf.mxu0
        %v2287 = vpop.f32.mrf.mxu0
        %v2288 = vadd.f32 %v2076, %v2287
        %v2289 = vpop.f32.mrf.mxu0
        %2290 = vmatprep.mubr.bf16.mxu0 0
        %2291 = vmatmul.mubr.bf16.gmra.mxu0 %v2127
        %v2292 = vpop.f32.mrf.mxu0
        %v2293 = vadd.f32 %v2076, %v2292
        %v2294 = vpop.f32.mrf.mxu0
        %v2295 = vpop.f32.mrf.mxu0
        %v2296 = vadd.f32 %v2076, %v2295
        %v2297 = vpop.f32.mrf.mxu0
        %2298 = vmatprep.mubr.bf16.mxu0 0
        %2299 = vmatmul.mubr.bf16.gmra.mxu0 %v2130
        %v2300 = vpop.f32.mrf.mxu0
        %v2301 = vadd.f32 %v2076, %v2300
        %v2302 = vpop.f32.mrf.mxu0
        %v2303 = vpop.f32.mrf.mxu0
        %v2304 = vadd.f32 %v2076, %v2303
        %v2305 = vpop.f32.mrf.mxu0
        %2306 = vmatprep.mubr.bf16.mxu0 0
        %2307 = vmatmul.mubr.bf16.gmra.mxu0 %v2133
        %v2308 = vpop.f32.mrf.mxu0
        %v2309 = vadd.f32 %v2076, %v2308
        %v2310 = vpop.f32.mrf.mxu0
        %v2311 = vpop.f32.mrf.mxu0
        %v2312 = vadd.f32 %v2076, %v2311
        %v2313 = vpop.f32.mrf.mxu0
        %2314 = vmatprep.mubr.bf16.mxu0 0
        %2315 = vmatmul.mubr.bf16.gmra.mxu0 %v2136
        %v2316 = vpop.f32.mrf.mxu0
        %v2317 = vadd.f32 %v2076, %v2316
        %v2318 = vpop.f32.mrf.mxu0
        %v2319 = vpop.f32.mrf.mxu0
        %v2320 = vadd.f32 %v2076, %v2319
        %v2321 = vpop.f32.mrf.mxu0
        %2322 = vmatprep.mubr.bf16.mxu0 0
        %2323 = vmatmul.mubr.bf16.gmra.mxu0 %v2139
        %v2324 = vpop.f32.mrf.mxu0
        %v2325 = vadd.f32 %v2076, %v2324
        %v2326 = vpop.f32.mrf.mxu0
        %v2327 = vpop.f32.mrf.mxu0
        %v2328 = vadd.f32 %v2076, %v2327
        %v2329 = vpop.f32.mrf.mxu0
        %2330 = vmatprep.mubr.bf16.mxu0 0
        %2331 = vmatmul.mubr.bf16.gmra.mxu0 %v2142
        %v2332 = vpop.f32.mrf.mxu0
        %v2333 = vadd.f32 %v2076, %v2332
        %v2334 = vpop.f32.mrf.mxu0
        %v2335 = vpop.f32.mrf.mxu0
        %v2336 = vadd.f32 %v2076, %v2335
        %v2337 = vpop.f32.mrf.mxu0
        %2338 = vmatprep.mubr.bf16.mxu0 0
        %2339 = vmatmul.mubr.bf16.gmra.mxu0 %v2145
        %v2340 = vpop.f32.mrf.mxu0
        %v2341 = vadd.f32 %v2076, %v2340
        %v2342 = vpop.f32.mrf.mxu0
        %v2343 = vpop.f32.mrf.mxu0
        %v2344 = vadd.f32 %v2076, %v2343
        %v2345 = vpop.f32.mrf.mxu0
        %2346 = vmatprep.mubr.bf16.mxu0 0
        %2347 = vmatmul.mubr.bf16.gmra.mxu0 %v2148
        %v2348 = vpop.f32.mrf.mxu0
        %v2349 = vadd.f32 %v2076, %v2348
        %v2350 = vpop.f32.mrf.mxu0
        %v2351 = vpop.f32.mrf.mxu0
        %v2352 = vadd.f32 %v2076, %v2351
        %v2353 = vpop.f32.mrf.mxu0
        %2354 = vmatprep.mubr.bf16.mxu0 0
        %2355 = vmatmul.mubr.bf16.gmra.mxu0 %v2151
        %v2356 = vpop.f32.mrf.mxu0
        %v2357 = vadd.f32 %v2076, %v2356
        %v2358 = vpop.f32.mrf.mxu0
        %v2359 = vpop.f32.mrf.mxu0
        %v2360 = vadd.f32 %v2076, %v2359
        %v2361 = vpop.f32.mrf.mxu0
        %2362 = vmatprep.mubr.bf16.mxu0 0
        %2363 = vmatmul.mubr.bf16.gmra.mxu0 %v2154
        %v2364 = vpop.f32.mrf.mxu0
        %v2365 = vadd.f32 %v2076, %v2364
        %v2366 = vpop.f32.mrf.mxu0
        %v2367 = vpop.f32.mrf.mxu0
        %v2368 = vadd.f32 %v2076, %v2367
        %v2369 = vpop.f32.mrf.mxu0
        %2370 = vmatprep.mubr.bf16.mxu0 0
        %2371 = vmatmul.mubr.bf16.gmra.mxu0 %v2157
        %v2372 = vpop.f32.mrf.mxu0
        %v2373 = vadd.f32 %v2076, %v2372
        %v2374 = vpop.f32.mrf.mxu0
        %v2375 = vpop.f32.mrf.mxu0
        %v2376 = vadd.f32 %v2076, %v2375
        %v2377 = vpop.f32.mrf.mxu0
        %2378 = vmatprep.mubr.bf16.mxu0 0
        %2379 = vmatmul.mubr.bf16.gmra.mxu0 %v2160
        %v2380 = vpop.f32.mrf.mxu0
        %v2381 = vadd.f32 %v2076, %v2380
        %v2382 = vpop.f32.mrf.mxu0
        %v2383 = vpop.f32.mrf.mxu0
        %v2384 = vadd.f32 %v2076, %v2383
        %v2385 = vpop.f32.mrf.mxu0
        %2386 = vdwg.mxu0
        %v2387 = vpack.c.bf16 %v2200, %v2197
        %v2388 = vpack.c.bf16 %v2208, %v2205
        %v2389 = vpack.c.bf16 %v2216, %v2213
        %v2390 = vpack.c.bf16 %v2224, %v2221
        %v2391 = vpack.c.bf16 %v2232, %v2229
        %v2392 = vpack.c.bf16 %v2240, %v2237
        %v2393 = vpack.c.bf16 %v2248, %v2245
        %v2394 = vpack.c.bf16 %v2256, %v2253
        %v2395 = vpack.c.bf16 %v2264, %v2261
        %v2396 = vpack.c.bf16 %v2272, %v2269
        %v2397 = vpack.c.bf16 %v2280, %v2277
        %v2398 = vpack.c.bf16 %v2288, %v2285
        %v2399 = vpack.c.bf16 %v2296, %v2293
        %v2400 = vpack.c.bf16 %v2304, %v2301
        %v2401 = vpack.c.bf16 %v2312, %v2309
        %v2402 = vpack.c.bf16 %v2320, %v2317
        %v2403 = vpack.c.bf16 %v2328, %v2325
        %v2404 = vpack.c.bf16 %v2336, %v2333
        %v2405 = vpack.c.bf16 %v2344, %v2341
        %v2406 = vpack.c.bf16 %v2352, %v2349
        %v2407 = vpack.c.bf16 %v2360, %v2357
        %v2408 = vpack.c.bf16 %v2368, %v2365
        %v2409 = vpack.c.bf16 %v2376, %v2373
        %v2410 = vpack.c.bf16 %v2384, %v2381
        %v2411 = vmul.bf16 %v2387, 1056980736
        %v2412 = vmul.bf16 %v2388, 1056980736
        %v2413 = vmul.bf16 %v2389, 1056980736
        %v2414 = vmul.bf16 %v2390, 1056980736
        %v2415 = vmul.bf16 %v2391, 1056980736
        %v2416 = vmul.bf16 %v2392, 1056980736
        %v2417 = vmul.bf16 %v2393, 1056980736
        %v2418 = vmul.bf16 %v2394, 1056980736
        %v2419 = vmul.bf16 %v2395, 1056980736
        %v2420 = vmul.bf16 %v2396, 1056980736
        %v2421 = vmul.bf16 %v2397, 1056980736
        %v2422 = vmul.bf16 %v2398, 1056980736
        %v2423 = vmul.bf16 %v2399, 1056980736
        %v2424 = vmul.bf16 %v2400, 1056980736
        %v2425 = vmul.bf16 %v2401, 1056980736
        %v2426 = vmul.bf16 %v2402, 1056980736
        %v2427 = vmul.bf16 %v2403, 1056980736
        %v2428 = vmul.bf16 %v2404, 1056980736
        %v2429 = vmul.bf16 %v2405, 1056980736
        %v2430 = vmul.bf16 %v2406, 1056980736
        %v2431 = vmul.bf16 %v2407, 1056980736
        %v2432 = vmul.bf16 %v2408, 1056980736
        %v2433 = vmul.bf16 %v2409, 1056980736
        %v2434 = vmul.bf16 %v2410, 1056980736
        %v2435 = vmul.bf16 %v2387, %v2387
        %v2436 = vmul.bf16 %v2388, %v2388
        %v2437 = vmul.bf16 %v2389, %v2389
        %v2438 = vmul.bf16 %v2390, %v2390
        %v2439 = vmul.bf16 %v2391, %v2391
        %v2440 = vmul.bf16 %v2392, %v2392
        %v2441 = vmul.bf16 %v2393, %v2393
        %v2442 = vmul.bf16 %v2394, %v2394
        %v2443 = vmul.bf16 %v2395, %v2395
        %v2444 = vmul.bf16 %v2396, %v2396
        %v2445 = vmul.bf16 %v2397, %v2397
        %v2446 = vmul.bf16 %v2398, %v2398
        %v2447 = vmul.bf16 %v2399, %v2399
        %v2448 = vmul.bf16 %v2400, %v2400
        %v2449 = vmul.bf16 %v2401, %v2401
        %v2450 = vmul.bf16 %v2402, %v2402
        %v2451 = vmul.bf16 %v2403, %v2403
        %v2452 = vmul.bf16 %v2404, %v2404
        %v2453 = vmul.bf16 %v2405, %v2405
        %v2454 = vmul.bf16 %v2406, %v2406
        %v2455 = vmul.bf16 %v2407, %v2407
        %v2456 = vmul.bf16 %v2408, %v2408
        %v2457 = vmul.bf16 %v2409, %v2409
        %v2458 = vmul.bf16 %v2410, %v2410
        %v2459 = vmul.bf16 %v2435, %v2387
        %v2460 = vmul.bf16 %v2436, %v2388
        %v2461 = vmul.bf16 %v2437, %v2389
        %v2462 = vmul.bf16 %v2438, %v2390
        %v2463 = vmul.bf16 %v2439, %v2391
        %v2464 = vmul.bf16 %v2440, %v2392
        %v2465 = vmul.bf16 %v2441, %v2393
        %v2466 = vmul.bf16 %v2442, %v2394
        %v2467 = vmul.bf16 %v2443, %v2395
        %v2468 = vmul.bf16 %v2444, %v2396
        %v2469 = vmul.bf16 %v2445, %v2397
        %v2470 = vmul.bf16 %v2446, %v2398
        %v2471 = vmul.bf16 %v2447, %v2399
        %v2472 = vmul.bf16 %v2448, %v2400
        %v2473 = vmul.bf16 %v2449, %v2401
        %v2474 = vmul.bf16 %v2450, %v2402
        %v2475 = vmul.bf16 %v2451, %v2403
        %v2476 = vmul.bf16 %v2452, %v2404
        %v2477 = vmul.bf16 %v2453, %v2405
        %v2478 = vmul.bf16 %v2454, %v2406
        %v2479 = vmul.bf16 %v2455, %v2407
        %v2480 = vmul.bf16 %v2456, %v2408
        %v2481 = vmul.bf16 %v2457, %v2409
        %v2482 = vmul.bf16 %v2458, %v2410
        %v2483 = vmul.bf16 %v2459, 1027030327
        %v2484 = vmul.bf16 %v2460, 1027030327
        %v2485 = vmul.bf16 %v2461, 1027030327
        %v2486 = vmul.bf16 %v2462, 1027030327
        %v2487 = vmul.bf16 %v2463, 1027030327
        %v2488 = vmul.bf16 %v2464, 1027030327
        %v2489 = vmul.bf16 %v2465, 1027030327
        %v2490 = vmul.bf16 %v2466, 1027030327
        %v2491 = vmul.bf16 %v2467, 1027030327
        %v2492 = vmul.bf16 %v2468, 1027030327
        %v2493 = vmul.bf16 %v2469, 1027030327
        %v2494 = vmul.bf16 %v2470, 1027030327
        %v2495 = vmul.bf16 %v2471, 1027030327
        %v2496 = vmul.bf16 %v2472, 1027030327
        %v2497 = vmul.bf16 %v2473, 1027030327
        %v2498 = vmul.bf16 %v2474, 1027030327
        %v2499 = vmul.bf16 %v2475, 1027030327
        %v2500 = vmul.bf16 %v2476, 1027030327
        %v2501 = vmul.bf16 %v2477, 1027030327
        %v2502 = vmul.bf16 %v2478, 1027030327
        %v2503 = vmul.bf16 %v2479, 1027030327
        %v2504 = vmul.bf16 %v2480, 1027030327
        %v2505 = vmul.bf16 %v2481, 1027030327
        %v2506 = vmul.bf16 %v2482, 1027030327
        %v2507 = vadd.bf16 %v2387, %v2483
        %v2508 = vadd.bf16 %v2388, %v2484
        %v2509 = vadd.bf16 %v2389, %v2485
        %v2510 = vadd.bf16 %v2390, %v2486
        %v2511 = vadd.bf16 %v2391, %v2487
        %v2512 = vadd.bf16 %v2392, %v2488
        %v2513 = vadd.bf16 %v2393, %v2489
        %v2514 = vadd.bf16 %v2394, %v2490
        %v2515 = vadd.bf16 %v2395, %v2491
        %v2516 = vadd.bf16 %v2396, %v2492
        %v2517 = vadd.bf16 %v2397, %v2493
        %v2518 = vadd.bf16 %v2398, %v2494
        %v2519 = vadd.bf16 %v2399, %v2495
        %v2520 = vadd.bf16 %v2400, %v2496
        %v2521 = vadd.bf16 %v2401, %v2497
        %v2522 = vadd.bf16 %v2402, %v2498
        %v2523 = vadd.bf16 %v2403, %v2499
        %v2524 = vadd.bf16 %v2404, %v2500
        %v2525 = vadd.bf16 %v2405, %v2501
        %v2526 = vadd.bf16 %v2406, %v2502
        %v2527 = vadd.bf16 %v2407, %v2503
        %v2528 = vadd.bf16 %v2408, %v2504
        %v2529 = vadd.bf16 %v2409, %v2505
        %v2530 = vadd.bf16 %v2410, %v2506
        %v2531 = vmul.bf16 %v2507, 1061961548
        %v2532 = vmul.bf16 %v2508, 1061961548
        %v2533 = vmul.bf16 %v2509, 1061961548
        %v2534 = vmul.bf16 %v2510, 1061961548
        %v2535 = vmul.bf16 %v2511, 1061961548
        %v2536 = vmul.bf16 %v2512, 1061961548
        %v2537 = vmul.bf16 %v2513, 1061961548
        %v2538 = vmul.bf16 %v2514, 1061961548
        %v2539 = vmul.bf16 %v2515, 1061961548
        %v2540 = vmul.bf16 %v2516, 1061961548
        %v2541 = vmul.bf16 %v2517, 1061961548
        %v2542 = vmul.bf16 %v2518, 1061961548
        %v2543 = vmul.bf16 %v2519, 1061961548
        %v2544 = vmul.bf16 %v2520, 1061961548
        %v2545 = vmul.bf16 %v2521, 1061961548
        %v2546 = vmul.bf16 %v2522, 1061961548
        %v2547 = vmul.bf16 %v2523, 1061961548
        %v2548 = vmul.bf16 %v2524, 1061961548
        %v2549 = vmul.bf16 %v2525, 1061961548
        %v2550 = vmul.bf16 %v2526, 1061961548
        %v2551 = vmul.bf16 %v2527, 1061961548
        %v2552 = vmul.bf16 %v2528, 1061961548
        %v2553 = vmul.bf16 %v2529, 1061961548
        %v2554 = vmul.bf16 %v2530, 1061961548
        %v2555 = vtanh.bf16.pop %v2531
        %v2556 = vtanh.bf16.pop %v2532
        %v2557 = vtanh.bf16.pop %v2533
        %v2558 = vtanh.bf16.pop %v2534
        %v2559 = vtanh.bf16.pop %v2535
        %v2560 = vtanh.bf16.pop %v2536
        %v2561 = vtanh.bf16.pop %v2537
        %v2562 = vtanh.bf16.pop %v2538
        %v2563 = vtanh.bf16.pop %v2539
        %v2564 = vtanh.bf16.pop %v2540
        %v2565 = vtanh.bf16.pop %v2541
        %v2566 = vtanh.bf16.pop %v2542
        %v2567 = vtanh.bf16.pop %v2543
        %v2568 = vtanh.bf16.pop %v2544
        %v2569 = vtanh.bf16.pop %v2545
        %v2570 = vtanh.bf16.pop %v2546
        %v2571 = vtanh.bf16.pop %v2547
        %v2572 = vtanh.bf16.pop %v2548
        %v2573 = vtanh.bf16.pop %v2549
        %v2574 = vtanh.bf16.pop %v2550
        %v2575 = vtanh.bf16.pop %v2551
        %v2576 = vtanh.bf16.pop %v2552
        %v2577 = vtanh.bf16.pop %v2553
        %v2578 = vtanh.bf16.pop %v2554
        %v2579 = vadd.bf16 %v2555, 1065369472
        %v2580 = vadd.bf16 %v2556, 1065369472
        %v2581 = vadd.bf16 %v2557, 1065369472
        %v2582 = vadd.bf16 %v2558, 1065369472
        %v2583 = vadd.bf16 %v2559, 1065369472
        %v2584 = vadd.bf16 %v2560, 1065369472
        %v2585 = vadd.bf16 %v2561, 1065369472
        %v2586 = vadd.bf16 %v2562, 1065369472
        %v2587 = vadd.bf16 %v2563, 1065369472
        %v2588 = vadd.bf16 %v2564, 1065369472
        %v2589 = vadd.bf16 %v2565, 1065369472
        %v2590 = vadd.bf16 %v2566, 1065369472
        %v2591 = vadd.bf16 %v2567, 1065369472
        %v2592 = vadd.bf16 %v2568, 1065369472
        %v2593 = vadd.bf16 %v2569, 1065369472
        %v2594 = vadd.bf16 %v2570, 1065369472
        %v2595 = vadd.bf16 %v2571, 1065369472
        %v2596 = vadd.bf16 %v2572, 1065369472
        %v2597 = vadd.bf16 %v2573, 1065369472
        %v2598 = vadd.bf16 %v2574, 1065369472
        %v2599 = vadd.bf16 %v2575, 1065369472
        %v2600 = vadd.bf16 %v2576, 1065369472
        %v2601 = vadd.bf16 %v2577, 1065369472
        %v2602 = vadd.bf16 %v2578, 1065369472
        %v2603 = vmul.bf16 %v2411, %v2579
        %v2604 = vmul.bf16 %v2412, %v2580
        %v2605 = vmul.bf16 %v2413, %v2581
        %v2606 = vmul.bf16 %v2414, %v2582
        %v2607 = vmul.bf16 %v2415, %v2583
        %v2608 = vmul.bf16 %v2416, %v2584
        %v2609 = vmul.bf16 %v2417, %v2585
        %v2610 = vmul.bf16 %v2418, %v2586
        %v2611 = vmul.bf16 %v2419, %v2587
        %v2612 = vmul.bf16 %v2420, %v2588
        %v2613 = vmul.bf16 %v2421, %v2589
        %v2614 = vmul.bf16 %v2422, %v2590
        %v2615 = vmul.bf16 %v2423, %v2591
        %v2616 = vmul.bf16 %v2424, %v2592
        %v2617 = vmul.bf16 %v2425, %v2593
        %v2618 = vmul.bf16 %v2426, %v2594
        %v2619 = vmul.bf16 %v2427, %v2595
        %v2620 = vmul.bf16 %v2428, %v2596
        %v2621 = vmul.bf16 %v2429, %v2597
        %v2622 = vmul.bf16 %v2430, %v2598
        %v2623 = vmul.bf16 %v2431, %v2599
        %v2624 = vmul.bf16 %v2432, %v2600
        %v2625 = vmul.bf16 %v2433, %v2601
        %v2626 = vmul.bf16 %v2434, %v2602
        %v2627 = vld [vmem:[%s725] sm:$0xff]
        %v2628 = vld [vmem:[%s725 + $0x8] sm:$0xff]
        %v2629 = vld [vmem:[%s725 + $0x10] sm:$0xff]
        %v2630 = vld [vmem:[%s725 + $0x18] sm:$0xff]
        %v2631 = vld [vmem:[%s725 + $0x20] sm:$0xff]
        %v2632 = vld [vmem:[%s725 + $0x28] sm:$0xff]
        %v2633 = vld [vmem:[%s725 + $0x30] sm:$0xff]
        %v2634 = vld [vmem:[%s725 + $0x38] sm:$0xff]
        %v2635 = vld [vmem:[%s725 + $0x40] sm:$0xff]
        %v2636 = vld [vmem:[%s725 + $0x48] sm:$0xff]
        %v2637 = vld [vmem:[%s725 + $0x50] sm:$0xff]
        %v2638 = vld [vmem:[%s725 + $0x58] sm:$0xff]
        %v2639 = vld [vmem:[%s725 + $0x60] sm:$0xff]
        %v2640 = vld [vmem:[%s725 + $0x68] sm:$0xff]
        %v2641 = vld [vmem:[%s725 + $0x70] sm:$0xff]
        %v2642 = vld [vmem:[%s725 + $0x78] sm:$0xff]
        %v2643 = vld [vmem:[%s725 + $0x80] sm:$0xff]
        %v2644 = vld [vmem:[%s725 + $0x88] sm:$0xff]
        %v2645 = vld [vmem:[%s725 + $0x90] sm:$0xff]
        %v2646 = vld [vmem:[%s725 + $0x98] sm:$0xff]
        %v2647 = vld [vmem:[%s725 + $0xa0] sm:$0xff]
        %v2648 = vld [vmem:[%s725 + $0xa8] sm:$0xff]
        %v2649 = vld [vmem:[%s725 + $0xb0] sm:$0xff]
        %v2650 = vld [vmem:[%s725 + $0xb8] sm:$0xff]
        %v2651 = vld [vmem:[%s725 + $0xc0] sm:$0xff]
        %v2652 = vld [vmem:[%s725 + $0xc8] sm:$0xff]
        %v2653 = vld [vmem:[%s725 + $0xd0] sm:$0xff]
        %v2654 = vld [vmem:[%s725 + $0xd8] sm:$0xff]
        %v2655 = vld [vmem:[%s725 + $0xe0] sm:$0xff]
        %v2656 = vld [vmem:[%s725 + $0xe8] sm:$0xff]
        %v2657 = vld [vmem:[%s725 + $0xf0] sm:$0xff]
        %v2658 = vld [vmem:[%s725 + $0xf8] sm:$0xff]
        %v2659 = vld [vmem:[%s725 + $0x100] sm:$0xff]
        %v2660 = vld [vmem:[%s725 + $0x108] sm:$0xff]
        %v2661 = vld [vmem:[%s725 + $0x110] sm:$0xff]
        %v2662 = vld [vmem:[%s725 + $0x118] sm:$0xff]
        %v2663 = vld [vmem:[%s725 + $0x120] sm:$0xff]
        %v2664 = vld [vmem:[%s725 + $0x128] sm:$0xff]
        %v2665 = vld [vmem:[%s725 + $0x130] sm:$0xff]
        %v2666 = vld [vmem:[%s725 + $0x138] sm:$0xff]
        %v2667 = vld [vmem:[%s725 + $0x140] sm:$0xff]
        %v2668 = vld [vmem:[%s725 + $0x148] sm:$0xff]
        %v2669 = vld [vmem:[%s725 + $0x150] sm:$0xff]
        %v2670 = vld [vmem:[%s725 + $0x158] sm:$0xff]
        %v2671 = vld [vmem:[%s725 + $0x160] sm:$0xff]
        %v2672 = vld [vmem:[%s725 + $0x168] sm:$0xff]
        %v2673 = vld [vmem:[%s725 + $0x170] sm:$0xff]
        %v2674 = vld [vmem:[%s725 + $0x178] sm:$0xff]
        %v2675 = vunpack.c.l.bf16 %v2603
        %v2676 = vunpack.c.h.bf16 %v2603
        %v2677 = vunpack.c.l.bf16 %v2604
        %v2678 = vunpack.c.h.bf16 %v2604
        %v2679 = vunpack.c.l.bf16 %v2605
        %v2680 = vunpack.c.h.bf16 %v2605
        %v2681 = vunpack.c.l.bf16 %v2606
        %v2682 = vunpack.c.h.bf16 %v2606
        %v2683 = vunpack.c.l.bf16 %v2607
        %v2684 = vunpack.c.h.bf16 %v2607
        %v2685 = vunpack.c.l.bf16 %v2608
        %v2686 = vunpack.c.h.bf16 %v2608
        %v2687 = vunpack.c.l.bf16 %v2609
        %v2688 = vunpack.c.h.bf16 %v2609
        %v2689 = vunpack.c.l.bf16 %v2610
        %v2690 = vunpack.c.h.bf16 %v2610
        %v2691 = vunpack.c.l.bf16 %v2611
        %v2692 = vunpack.c.h.bf16 %v2611
        %v2693 = vunpack.c.l.bf16 %v2612
        %v2694 = vunpack.c.h.bf16 %v2612
        %v2695 = vunpack.c.l.bf16 %v2613
        %v2696 = vunpack.c.h.bf16 %v2613
        %v2697 = vunpack.c.l.bf16 %v2614
        %v2698 = vunpack.c.h.bf16 %v2614
        %v2699 = vunpack.c.l.bf16 %v2615
        %v2700 = vunpack.c.h.bf16 %v2615
        %v2701 = vunpack.c.l.bf16 %v2616
        %v2702 = vunpack.c.h.bf16 %v2616
        %v2703 = vunpack.c.l.bf16 %v2617
        %v2704 = vunpack.c.h.bf16 %v2617
        %v2705 = vunpack.c.l.bf16 %v2618
        %v2706 = vunpack.c.h.bf16 %v2618
        %v2707 = vunpack.c.l.bf16 %v2619
        %v2708 = vunpack.c.h.bf16 %v2619
        %v2709 = vunpack.c.l.bf16 %v2620
        %v2710 = vunpack.c.h.bf16 %v2620
        %v2711 = vunpack.c.l.bf16 %v2621
        %v2712 = vunpack.c.h.bf16 %v2621
        %v2713 = vunpack.c.l.bf16 %v2622
        %v2714 = vunpack.c.h.bf16 %v2622
        %v2715 = vunpack.c.l.bf16 %v2623
        %v2716 = vunpack.c.h.bf16 %v2623
        %v2717 = vunpack.c.l.bf16 %v2624
        %v2718 = vunpack.c.h.bf16 %v2624
        %v2719 = vunpack.c.l.bf16 %v2625
        %v2720 = vunpack.c.h.bf16 %v2625
        %v2721 = vunpack.c.l.bf16 %v2626
        %v2722 = vunpack.c.h.bf16 %v2626
        %2724 = vset.pattern.permute.xlu0 0
        %2725 = vperm.xlu0 %2724, %v2627
        %v2726 = vpop.permute.xlu0 %2725
        %2729 = vset.pattern.permute.xlu0 0
        %2730 = vperm.xlu0 %2729, %v2628
        %v2731 = vpop.permute.xlu0 %2730
        %2734 = vset.pattern.permute.xlu0 0
        %2735 = vperm.xlu0 %2734, %v2629
        %v2736 = vpop.permute.xlu0 %2735
        %2739 = vset.pattern.permute.xlu0 0
        %2740 = vperm.xlu0 %2739, %v2630
        %v2741 = vpop.permute.xlu0 %2740
        %2744 = vset.pattern.permute.xlu0 0
        %2745 = vperm.xlu0 %2744, %v2631
        %v2746 = vpop.permute.xlu0 %2745
        %2749 = vset.pattern.permute.xlu0 0
        %2750 = vperm.xlu0 %2749, %v2632
        %v2751 = vpop.permute.xlu0 %2750
        %2754 = vset.pattern.permute.xlu0 0
        %2755 = vperm.xlu0 %2754, %v2633
        %v2756 = vpop.permute.xlu0 %2755
        %2759 = vset.pattern.permute.xlu0 0
        %2760 = vperm.xlu0 %2759, %v2634
        %v2761 = vpop.permute.xlu0 %2760
        %2764 = vset.pattern.permute.xlu0 0
        %2765 = vperm.xlu0 %2764, %v2635
        %v2766 = vpop.permute.xlu0 %2765
        %2769 = vset.pattern.permute.xlu0 0
        %2770 = vperm.xlu0 %2769, %v2636
        %v2771 = vpop.permute.xlu0 %2770
        %2774 = vset.pattern.permute.xlu0 0
        %2775 = vperm.xlu0 %2774, %v2637
        %v2776 = vpop.permute.xlu0 %2775
        %2779 = vset.pattern.permute.xlu0 0
        %2780 = vperm.xlu0 %2779, %v2638
        %v2781 = vpop.permute.xlu0 %2780
        %2784 = vset.pattern.permute.xlu0 0
        %2785 = vperm.xlu0 %2784, %v2639
        %v2786 = vpop.permute.xlu0 %2785
        %2789 = vset.pattern.permute.xlu0 0
        %2790 = vperm.xlu0 %2789, %v2640
        %v2791 = vpop.permute.xlu0 %2790
        %2794 = vset.pattern.permute.xlu0 0
        %2795 = vperm.xlu0 %2794, %v2641
        %v2796 = vpop.permute.xlu0 %2795
        %2799 = vset.pattern.permute.xlu0 0
        %2800 = vperm.xlu0 %2799, %v2642
        %v2801 = vpop.permute.xlu0 %2800
        %2804 = vset.pattern.permute.xlu0 0
        %2805 = vperm.xlu0 %2804, %v2643
        %v2806 = vpop.permute.xlu0 %2805
        %2809 = vset.pattern.permute.xlu0 0
        %2810 = vperm.xlu0 %2809, %v2644
        %v2811 = vpop.permute.xlu0 %2810
        %2814 = vset.pattern.permute.xlu0 0
        %2815 = vperm.xlu0 %2814, %v2645
        %v2816 = vpop.permute.xlu0 %2815
        %2819 = vset.pattern.permute.xlu0 0
        %2820 = vperm.xlu0 %2819, %v2646
        %v2821 = vpop.permute.xlu0 %2820
        %2824 = vset.pattern.permute.xlu0 0
        %2825 = vperm.xlu0 %2824, %v2647
        %v2826 = vpop.permute.xlu0 %2825
        %2829 = vset.pattern.permute.xlu0 0
        %2830 = vperm.xlu0 %2829, %v2648
        %v2831 = vpop.permute.xlu0 %2830
        %2834 = vset.pattern.permute.xlu0 0
        %2835 = vperm.xlu0 %2834, %v2649
        %v2836 = vpop.permute.xlu0 %2835
        %2839 = vset.pattern.permute.xlu0 0
        %2840 = vperm.xlu0 %2839, %v2650
        %v2841 = vpop.permute.xlu0 %2840
        %2844 = vset.pattern.permute.xlu0 0
        %2845 = vperm.xlu0 %2844, %v2651
        %v2846 = vpop.permute.xlu0 %2845
        %2849 = vset.pattern.permute.xlu0 0
        %2850 = vperm.xlu0 %2849, %v2652
        %v2851 = vpop.permute.xlu0 %2850
        %2854 = vset.pattern.permute.xlu0 0
        %2855 = vperm.xlu0 %2854, %v2653
        %v2856 = vpop.permute.xlu0 %2855
        %2859 = vset.pattern.permute.xlu0 0
        %2860 = vperm.xlu0 %2859, %v2654
        %v2861 = vpop.permute.xlu0 %2860
        %2864 = vset.pattern.permute.xlu0 0
        %2865 = vperm.xlu0 %2864, %v2655
        %v2866 = vpop.permute.xlu0 %2865
        %2869 = vset.pattern.permute.xlu0 0
        %2870 = vperm.xlu0 %2869, %v2656
        %v2871 = vpop.permute.xlu0 %2870
        %2874 = vset.pattern.permute.xlu0 0
        %2875 = vperm.xlu0 %2874, %v2657
        %v2876 = vpop.permute.xlu0 %2875
        %2879 = vset.pattern.permute.xlu0 0
        %2880 = vperm.xlu0 %2879, %v2658
        %v2881 = vpop.permute.xlu0 %2880
        %2884 = vset.pattern.permute.xlu0 0
        %2885 = vperm.xlu0 %2884, %v2659
        %v2886 = vpop.permute.xlu0 %2885
        %2889 = vset.pattern.permute.xlu0 0
        %2890 = vperm.xlu0 %2889, %v2660
        %v2891 = vpop.permute.xlu0 %2890
        %2894 = vset.pattern.permute.xlu0 0
        %2895 = vperm.xlu0 %2894, %v2661
        %v2896 = vpop.permute.xlu0 %2895
        %2899 = vset.pattern.permute.xlu0 0
        %2900 = vperm.xlu0 %2899, %v2662
        %v2901 = vpop.permute.xlu0 %2900
        %2904 = vset.pattern.permute.xlu0 0
        %2905 = vperm.xlu0 %2904, %v2663
        %v2906 = vpop.permute.xlu0 %2905
        %2909 = vset.pattern.permute.xlu0 0
        %2910 = vperm.xlu0 %2909, %v2664
        %v2911 = vpop.permute.xlu0 %2910
        %2914 = vset.pattern.permute.xlu0 0
        %2915 = vperm.xlu0 %2914, %v2665
        %v2916 = vpop.permute.xlu0 %2915
        %2919 = vset.pattern.permute.xlu0 0
        %2920 = vperm.xlu0 %2919, %v2666
        %v2921 = vpop.permute.xlu0 %2920
        %2924 = vset.pattern.permute.xlu0 0
        %2925 = vperm.xlu0 %2924, %v2667
        %v2926 = vpop.permute.xlu0 %2925
        %2929 = vset.pattern.permute.xlu0 0
        %2930 = vperm.xlu0 %2929, %v2668
        %v2931 = vpop.permute.xlu0 %2930
        %2934 = vset.pattern.permute.xlu0 0
        %2935 = vperm.xlu0 %2934, %v2669
        %v2936 = vpop.permute.xlu0 %2935
        %2939 = vset.pattern.permute.xlu0 0
        %2940 = vperm.xlu0 %2939, %v2670
        %v2941 = vpop.permute.xlu0 %2940
        %2944 = vset.pattern.permute.xlu0 0
        %2945 = vperm.xlu0 %2944, %v2671
        %v2946 = vpop.permute.xlu0 %2945
        %2949 = vset.pattern.permute.xlu0 0
        %2950 = vperm.xlu0 %2949, %v2672
        %v2951 = vpop.permute.xlu0 %2950
        %2954 = vset.pattern.permute.xlu0 0
        %2955 = vperm.xlu0 %2954, %v2673
        %v2956 = vpop.permute.xlu0 %2955
        %2959 = vset.pattern.permute.xlu0 0
        %2960 = vperm.xlu0 %2959, %v2674
        %v2961 = vpop.permute.xlu0 %2960
        %v2963 = vmul.f32 %v2675, %v2726
        %v2964 = vmul.f32 %v2676, %v2731
        %v2965 = vmul.f32 %v2677, %v2736
        %v2966 = vmul.f32 %v2678, %v2741
        %v2967 = vmul.f32 %v2679, %v2746
        %v2968 = vmul.f32 %v2680, %v2751
        %v2969 = vmul.f32 %v2681, %v2756
        %v2970 = vmul.f32 %v2682, %v2761
        %v2971 = vmul.f32 %v2683, %v2766
        %v2972 = vmul.f32 %v2684, %v2771
        %v2973 = vmul.f32 %v2685, %v2776
        %v2974 = vmul.f32 %v2686, %v2781
        %v2975 = vmul.f32 %v2687, %v2786
        %v2976 = vmul.f32 %v2688, %v2791
        %v2977 = vmul.f32 %v2689, %v2796
        %v2978 = vmul.f32 %v2690, %v2801
        %v2979 = vmul.f32 %v2691, %v2806
        %v2980 = vmul.f32 %v2692, %v2811
        %v2981 = vmul.f32 %v2693, %v2816
        %v2982 = vmul.f32 %v2694, %v2821
        %v2983 = vmul.f32 %v2695, %v2826
        %v2984 = vmul.f32 %v2696, %v2831
        %v2985 = vmul.f32 %v2697, %v2836
        %v2986 = vmul.f32 %v2698, %v2841
        %v2987 = vmul.f32 %v2699, %v2846
        %v2988 = vmul.f32 %v2700, %v2851
        %v2989 = vmul.f32 %v2701, %v2856
        %v2990 = vmul.f32 %v2702, %v2861
        %v2991 = vmul.f32 %v2703, %v2866
        %v2992 = vmul.f32 %v2704, %v2871
        %v2993 = vmul.f32 %v2705, %v2876
        %v2994 = vmul.f32 %v2706, %v2881
        %v2995 = vmul.f32 %v2707, %v2886
        %v2996 = vmul.f32 %v2708, %v2891
        %v2997 = vmul.f32 %v2709, %v2896
        %v2998 = vmul.f32 %v2710, %v2901
        %v2999 = vmul.f32 %v2711, %v2906
        %v3000 = vmul.f32 %v2712, %v2911
        %v3001 = vmul.f32 %v2713, %v2916
        %v3002 = vmul.f32 %v2714, %v2921
        %v3003 = vmul.f32 %v2715, %v2926
        %v3004 = vmul.f32 %v2716, %v2931
        %v3005 = vmul.f32 %v2717, %v2936
        %v3006 = vmul.f32 %v2718, %v2941
        %v3007 = vmul.f32 %v2719, %v2946
        %v3008 = vmul.f32 %v2720, %v2951
        %v3009 = vmul.f32 %v2721, %v2956
        %v3010 = vmul.f32 %v2722, %v2961
        %v3011 = vsel %vm835, %v2963, 0.0
        %v3012 = vrot.slane %v3011, 4
        %v3013 = vadd.f32 %v3011, %v3012
        %v3014 = vrot.slane %v3013, 2
        %v3015 = vadd.f32 %v3013, %v3014
        %v3016 = vrot.slane %v3015, 1
        %v3017 = vadd.f32 %v3015, %v3016
        %v3018 = vsel %vm835, %v2964, 0.0
        %v3019 = vrot.slane %v3018, 4
        %v3020 = vadd.f32 %v3018, %v3019
        %v3021 = vrot.slane %v3020, 2
        %v3022 = vadd.f32 %v3020, %v3021
        %v3023 = vrot.slane %v3022, 1
        %v3024 = vadd.f32 %v3022, %v3023
        %v3025 = vsel %vm835, %v2965, 0.0
        %v3026 = vrot.slane %v3025, 4
        %v3027 = vadd.f32 %v3025, %v3026
        %v3028 = vrot.slane %v3027, 2
        %v3029 = vadd.f32 %v3027, %v3028
        %v3030 = vrot.slane %v3029, 1
        %v3031 = vadd.f32 %v3029, %v3030
        %v3032 = vsel %vm835, %v2966, 0.0
        %v3033 = vrot.slane %v3032, 4
        %v3034 = vadd.f32 %v3032, %v3033
        %v3035 = vrot.slane %v3034, 2
        %v3036 = vadd.f32 %v3034, %v3035
        %v3037 = vrot.slane %v3036, 1
        %v3038 = vadd.f32 %v3036, %v3037
        %v3039 = vsel %vm835, %v2967, 0.0
        %v3040 = vrot.slane %v3039, 4
        %v3041 = vadd.f32 %v3039, %v3040
        %v3042 = vrot.slane %v3041, 2
        %v3043 = vadd.f32 %v3041, %v3042
        %v3044 = vrot.slane %v3043, 1
        %v3045 = vadd.f32 %v3043, %v3044
        %v3046 = vsel %vm835, %v2968, 0.0
        %v3047 = vrot.slane %v3046, 4
        %v3048 = vadd.f32 %v3046, %v3047
        %v3049 = vrot.slane %v3048, 2
        %v3050 = vadd.f32 %v3048, %v3049
        %v3051 = vrot.slane %v3050, 1
        %v3052 = vadd.f32 %v3050, %v3051
        %v3053 = vsel %vm835, %v2969, 0.0
        %v3054 = vrot.slane %v3053, 4
        %v3055 = vadd.f32 %v3053, %v3054
        %v3056 = vrot.slane %v3055, 2
        %v3057 = vadd.f32 %v3055, %v3056
        %v3058 = vrot.slane %v3057, 1
        %v3059 = vadd.f32 %v3057, %v3058
        %v3060 = vsel %vm835, %v2970, 0.0
        %v3061 = vrot.slane %v3060, 4
        %v3062 = vadd.f32 %v3060, %v3061
        %v3063 = vrot.slane %v3062, 2
        %v3064 = vadd.f32 %v3062, %v3063
        %v3065 = vrot.slane %v3064, 1
        %v3066 = vadd.f32 %v3064, %v3065
        %v3067 = vsel %vm835, %v2971, 0.0
        %v3068 = vrot.slane %v3067, 4
        %v3069 = vadd.f32 %v3067, %v3068
        %v3070 = vrot.slane %v3069, 2
        %v3071 = vadd.f32 %v3069, %v3070
        %v3072 = vrot.slane %v3071, 1
        %v3073 = vadd.f32 %v3071, %v3072
        %v3074 = vsel %vm835, %v2972, 0.0
        %v3075 = vrot.slane %v3074, 4
        %v3076 = vadd.f32 %v3074, %v3075
        %v3077 = vrot.slane %v3076, 2
        %v3078 = vadd.f32 %v3076, %v3077
        %v3079 = vrot.slane %v3078, 1
        %v3080 = vadd.f32 %v3078, %v3079
        %v3081 = vsel %vm835, %v2973, 0.0
        %v3082 = vrot.slane %v3081, 4
        %v3083 = vadd.f32 %v3081, %v3082
        %v3084 = vrot.slane %v3083, 2
        %v3085 = vadd.f32 %v3083, %v3084
        %v3086 = vrot.slane %v3085, 1
        %v3087 = vadd.f32 %v3085, %v3086
        %v3088 = vsel %vm835, %v2974, 0.0
        %v3089 = vrot.slane %v3088, 4
        %v3090 = vadd.f32 %v3088, %v3089
        %v3091 = vrot.slane %v3090, 2
        %v3092 = vadd.f32 %v3090, %v3091
        %v3093 = vrot.slane %v3092, 1
        %v3094 = vadd.f32 %v3092, %v3093
        %v3095 = vsel %vm835, %v2975, 0.0
        %v3096 = vrot.slane %v3095, 4
        %v3097 = vadd.f32 %v3095, %v3096
        %v3098 = vrot.slane %v3097, 2
        %v3099 = vadd.f32 %v3097, %v3098
        %v3100 = vrot.slane %v3099, 1
        %v3101 = vadd.f32 %v3099, %v3100
        %v3102 = vsel %vm835, %v2976, 0.0
        %v3103 = vrot.slane %v3102, 4
        %v3104 = vadd.f32 %v3102, %v3103
        %v3105 = vrot.slane %v3104, 2
        %v3106 = vadd.f32 %v3104, %v3105
        %v3107 = vrot.slane %v3106, 1
        %v3108 = vadd.f32 %v3106, %v3107
        %v3109 = vsel %vm835, %v2977, 0.0
        %v3110 = vrot.slane %v3109, 4
        %v3111 = vadd.f32 %v3109, %v3110
        %v3112 = vrot.slane %v3111, 2
        %v3113 = vadd.f32 %v3111, %v3112
        %v3114 = vrot.slane %v3113, 1
        %v3115 = vadd.f32 %v3113, %v3114
        %v3116 = vsel %vm835, %v2978, 0.0
        %v3117 = vrot.slane %v3116, 4
        %v3118 = vadd.f32 %v3116, %v3117
        %v3119 = vrot.slane %v3118, 2
        %v3120 = vadd.f32 %v3118, %v3119
        %v3121 = vrot.slane %v3120, 1
        %v3122 = vadd.f32 %v3120, %v3121
        %v3123 = vsel %vm835, %v2979, 0.0
        %v3124 = vrot.slane %v3123, 4
        %v3125 = vadd.f32 %v3123, %v3124
        %v3126 = vrot.slane %v3125, 2
        %v3127 = vadd.f32 %v3125, %v3126
        %v3128 = vrot.slane %v3127, 1
        %v3129 = vadd.f32 %v3127, %v3128
        %v3130 = vsel %vm835, %v2980, 0.0
        %v3131 = vrot.slane %v3130, 4
        %v3132 = vadd.f32 %v3130, %v3131
        %v3133 = vrot.slane %v3132, 2
        %v3134 = vadd.f32 %v3132, %v3133
        %v3135 = vrot.slane %v3134, 1
        %v3136 = vadd.f32 %v3134, %v3135
        %v3137 = vsel %vm835, %v2981, 0.0
        %v3138 = vrot.slane %v3137, 4
        %v3139 = vadd.f32 %v3137, %v3138
        %v3140 = vrot.slane %v3139, 2
        %v3141 = vadd.f32 %v3139, %v3140
        %v3142 = vrot.slane %v3141, 1
        %v3143 = vadd.f32 %v3141, %v3142
        %v3144 = vsel %vm835, %v2982, 0.0
        %v3145 = vrot.slane %v3144, 4
        %v3146 = vadd.f32 %v3144, %v3145
        %v3147 = vrot.slane %v3146, 2
        %v3148 = vadd.f32 %v3146, %v3147
        %v3149 = vrot.slane %v3148, 1
        %v3150 = vadd.f32 %v3148, %v3149
        %v3151 = vsel %vm835, %v2983, 0.0
        %v3152 = vrot.slane %v3151, 4
        %v3153 = vadd.f32 %v3151, %v3152
        %v3154 = vrot.slane %v3153, 2
        %v3155 = vadd.f32 %v3153, %v3154
        %v3156 = vrot.slane %v3155, 1
        %v3157 = vadd.f32 %v3155, %v3156
        %v3158 = vsel %vm835, %v2984, 0.0
        %v3159 = vrot.slane %v3158, 4
        %v3160 = vadd.f32 %v3158, %v3159
        %v3161 = vrot.slane %v3160, 2
        %v3162 = vadd.f32 %v3160, %v3161
        %v3163 = vrot.slane %v3162, 1
        %v3164 = vadd.f32 %v3162, %v3163
        %v3165 = vsel %vm835, %v2985, 0.0
        %v3166 = vrot.slane %v3165, 4
        %v3167 = vadd.f32 %v3165, %v3166
        %v3168 = vrot.slane %v3167, 2
        %v3169 = vadd.f32 %v3167, %v3168
        %v3170 = vrot.slane %v3169, 1
        %v3171 = vadd.f32 %v3169, %v3170
        %v3172 = vsel %vm835, %v2986, 0.0
        %v3173 = vrot.slane %v3172, 4
        %v3174 = vadd.f32 %v3172, %v3173
        %v3175 = vrot.slane %v3174, 2
        %v3176 = vadd.f32 %v3174, %v3175
        %v3177 = vrot.slane %v3176, 1
        %v3178 = vadd.f32 %v3176, %v3177
        %v3179 = vsel %vm835, %v2987, 0.0
        %v3180 = vrot.slane %v3179, 4
        %v3181 = vadd.f32 %v3179, %v3180
        %v3182 = vrot.slane %v3181, 2
        %v3183 = vadd.f32 %v3181, %v3182
        %v3184 = vrot.slane %v3183, 1
        %v3185 = vadd.f32 %v3183, %v3184
        %v3186 = vsel %vm835, %v2988, 0.0
        %v3187 = vrot.slane %v3186, 4
        %v3188 = vadd.f32 %v3186, %v3187
        %v3189 = vrot.slane %v3188, 2
        %v3190 = vadd.f32 %v3188, %v3189
        %v3191 = vrot.slane %v3190, 1
        %v3192 = vadd.f32 %v3190, %v3191
        %v3193 = vsel %vm835, %v2989, 0.0
        %v3194 = vrot.slane %v3193, 4
        %v3195 = vadd.f32 %v3193, %v3194
        %v3196 = vrot.slane %v3195, 2
        %v3197 = vadd.f32 %v3195, %v3196
        %v3198 = vrot.slane %v3197, 1
        %v3199 = vadd.f32 %v3197, %v3198
        %v3200 = vsel %vm835, %v2990, 0.0
        %v3201 = vrot.slane %v3200, 4
        %v3202 = vadd.f32 %v3200, %v3201
        %v3203 = vrot.slane %v3202, 2
        %v3204 = vadd.f32 %v3202, %v3203
        %v3205 = vrot.slane %v3204, 1
        %v3206 = vadd.f32 %v3204, %v3205
        %v3207 = vsel %vm835, %v2991, 0.0
        %v3208 = vrot.slane %v3207, 4
        %v3209 = vadd.f32 %v3207, %v3208
        %v3210 = vrot.slane %v3209, 2
        %v3211 = vadd.f32 %v3209, %v3210
        %v3212 = vrot.slane %v3211, 1
        %v3213 = vadd.f32 %v3211, %v3212
        %v3214 = vsel %vm835, %v2992, 0.0
        %v3215 = vrot.slane %v3214, 4
        %v3216 = vadd.f32 %v3214, %v3215
        %v3217 = vrot.slane %v3216, 2
        %v3218 = vadd.f32 %v3216, %v3217
        %v3219 = vrot.slane %v3218, 1
        %v3220 = vadd.f32 %v3218, %v3219
        %v3221 = vsel %vm835, %v2993, 0.0
        %v3222 = vrot.slane %v3221, 4
        %v3223 = vadd.f32 %v3221, %v3222
        %v3224 = vrot.slane %v3223, 2
        %v3225 = vadd.f32 %v3223, %v3224
        %v3226 = vrot.slane %v3225, 1
        %v3227 = vadd.f32 %v3225, %v3226
        %v3228 = vsel %vm835, %v2994, 0.0
        %v3229 = vrot.slane %v3228, 4
        %v3230 = vadd.f32 %v3228, %v3229
        %v3231 = vrot.slane %v3230, 2
        %v3232 = vadd.f32 %v3230, %v3231
        %v3233 = vrot.slane %v3232, 1
        %v3234 = vadd.f32 %v3232, %v3233
        %v3235 = vsel %vm835, %v2995, 0.0
        %v3236 = vrot.slane %v3235, 4
        %v3237 = vadd.f32 %v3235, %v3236
        %v3238 = vrot.slane %v3237, 2
        %v3239 = vadd.f32 %v3237, %v3238
        %v3240 = vrot.slane %v3239, 1
        %v3241 = vadd.f32 %v3239, %v3240
        %v3242 = vsel %vm835, %v2996, 0.0
        %v3243 = vrot.slane %v3242, 4
        %v3244 = vadd.f32 %v3242, %v3243
        %v3245 = vrot.slane %v3244, 2
        %v3246 = vadd.f32 %v3244, %v3245
        %v3247 = vrot.slane %v3246, 1
        %v3248 = vadd.f32 %v3246, %v3247
        %v3249 = vsel %vm835, %v2997, 0.0
        %v3250 = vrot.slane %v3249, 4
        %v3251 = vadd.f32 %v3249, %v3250
        %v3252 = vrot.slane %v3251, 2
        %v3253 = vadd.f32 %v3251, %v3252
        %v3254 = vrot.slane %v3253, 1
        %v3255 = vadd.f32 %v3253, %v3254
        %v3256 = vsel %vm835, %v2998, 0.0
        %v3257 = vrot.slane %v3256, 4
        %v3258 = vadd.f32 %v3256, %v3257
        %v3259 = vrot.slane %v3258, 2
        %v3260 = vadd.f32 %v3258, %v3259
        %v3261 = vrot.slane %v3260, 1
        %v3262 = vadd.f32 %v3260, %v3261
        %v3263 = vsel %vm835, %v2999, 0.0
        %v3264 = vrot.slane %v3263, 4
        %v3265 = vadd.f32 %v3263, %v3264
        %v3266 = vrot.slane %v3265, 2
        %v3267 = vadd.f32 %v3265, %v3266
        %v3268 = vrot.slane %v3267, 1
        %v3269 = vadd.f32 %v3267, %v3268
        %v3270 = vsel %vm835, %v3000, 0.0
        %v3271 = vrot.slane %v3270, 4
        %v3272 = vadd.f32 %v3270, %v3271
        %v3273 = vrot.slane %v3272, 2
        %v3274 = vadd.f32 %v3272, %v3273
        %v3275 = vrot.slane %v3274, 1
        %v3276 = vadd.f32 %v3274, %v3275
        %v3277 = vsel %vm835, %v3001, 0.0
        %v3278 = vrot.slane %v3277, 4
        %v3279 = vadd.f32 %v3277, %v3278
        %v3280 = vrot.slane %v3279, 2
        %v3281 = vadd.f32 %v3279, %v3280
        %v3282 = vrot.slane %v3281, 1
        %v3283 = vadd.f32 %v3281, %v3282
        %v3284 = vsel %vm835, %v3002, 0.0
        %v3285 = vrot.slane %v3284, 4
        %v3286 = vadd.f32 %v3284, %v3285
        %v3287 = vrot.slane %v3286, 2
        %v3288 = vadd.f32 %v3286, %v3287
        %v3289 = vrot.slane %v3288, 1
        %v3290 = vadd.f32 %v3288, %v3289
        %v3291 = vsel %vm835, %v3003, 0.0
        %v3292 = vrot.slane %v3291, 4
        %v3293 = vadd.f32 %v3291, %v3292
        %v3294 = vrot.slane %v3293, 2
        %v3295 = vadd.f32 %v3293, %v3294
        %v3296 = vrot.slane %v3295, 1
        %v3297 = vadd.f32 %v3295, %v3296
        %v3298 = vsel %vm835, %v3004, 0.0
        %v3299 = vrot.slane %v3298, 4
        %v3300 = vadd.f32 %v3298, %v3299
        %v3301 = vrot.slane %v3300, 2
        %v3302 = vadd.f32 %v3300, %v3301
        %v3303 = vrot.slane %v3302, 1
        %v3304 = vadd.f32 %v3302, %v3303
        %v3305 = vsel %vm835, %v3005, 0.0
        %v3306 = vrot.slane %v3305, 4
        %v3307 = vadd.f32 %v3305, %v3306
        %v3308 = vrot.slane %v3307, 2
        %v3309 = vadd.f32 %v3307, %v3308
        %v3310 = vrot.slane %v3309, 1
        %v3311 = vadd.f32 %v3309, %v3310
        %v3312 = vsel %vm835, %v3006, 0.0
        %v3313 = vrot.slane %v3312, 4
        %v3314 = vadd.f32 %v3312, %v3313
        %v3315 = vrot.slane %v3314, 2
        %v3316 = vadd.f32 %v3314, %v3315
        %v3317 = vrot.slane %v3316, 1
        %v3318 = vadd.f32 %v3316, %v3317
        %v3319 = vsel %vm835, %v3007, 0.0
        %v3320 = vrot.slane %v3319, 4
        %v3321 = vadd.f32 %v3319, %v3320
        %v3322 = vrot.slane %v3321, 2
        %v3323 = vadd.f32 %v3321, %v3322
        %v3324 = vrot.slane %v3323, 1
        %v3325 = vadd.f32 %v3323, %v3324
        %v3326 = vsel %vm835, %v3008, 0.0
        %v3327 = vrot.slane %v3326, 4
        %v3328 = vadd.f32 %v3326, %v3327
        %v3329 = vrot.slane %v3328, 2
        %v3330 = vadd.f32 %v3328, %v3329
        %v3331 = vrot.slane %v3330, 1
        %v3332 = vadd.f32 %v3330, %v3331
        %v3333 = vsel %vm835, %v3009, 0.0
        %v3334 = vrot.slane %v3333, 4
        %v3335 = vadd.f32 %v3333, %v3334
        %v3336 = vrot.slane %v3335, 2
        %v3337 = vadd.f32 %v3335, %v3336
        %v3338 = vrot.slane %v3337, 1
        %v3339 = vadd.f32 %v3337, %v3338
        %v3340 = vsel %vm835, %v3010, 0.0
        %v3341 = vrot.slane %v3340, 4
        %v3342 = vadd.f32 %v3340, %v3341
        %v3343 = vrot.slane %v3342, 2
        %v3344 = vadd.f32 %v3342, %v3343
        %v3345 = vrot.slane %v3344, 1
        %v3346 = vadd.f32 %v3344, %v3345
        %vm3347 = vcmask 7168
        %v3348 = vsel %vm3347, %v2627, 0.0
        %v3349 = vrot.slane %v3348, 4
        %v3350 = vadd.f32 %v3348, %v3349
        %v3351 = vrot.slane %v3350, 2
        %v3352 = vadd.f32 %v3350, %v3351
        %v3353 = vrot.slane %v3352, 1
        %v3354 = vadd.f32 %v3352, %v3353
        %v3355 = vsel %vm3347, %v2628, 0.0
        %v3356 = vrot.slane %v3355, 4
        %v3357 = vadd.f32 %v3355, %v3356
        %v3358 = vrot.slane %v3357, 2
        %v3359 = vadd.f32 %v3357, %v3358
        %v3360 = vrot.slane %v3359, 1
        %v3361 = vadd.f32 %v3359, %v3360
        %v3362 = vsel %vm3347, %v2629, 0.0
        %v3363 = vrot.slane %v3362, 4
        %v3364 = vadd.f32 %v3362, %v3363
        %v3365 = vrot.slane %v3364, 2
        %v3366 = vadd.f32 %v3364, %v3365
        %v3367 = vrot.slane %v3366, 1
        %v3368 = vadd.f32 %v3366, %v3367
        %v3369 = vsel %vm3347, %v2630, 0.0
        %v3370 = vrot.slane %v3369, 4
        %v3371 = vadd.f32 %v3369, %v3370
        %v3372 = vrot.slane %v3371, 2
        %v3373 = vadd.f32 %v3371, %v3372
        %v3374 = vrot.slane %v3373, 1
        %v3375 = vadd.f32 %v3373, %v3374
        %v3376 = vsel %vm3347, %v2631, 0.0
        %v3377 = vrot.slane %v3376, 4
        %v3378 = vadd.f32 %v3376, %v3377
        %v3379 = vrot.slane %v3378, 2
        %v3380 = vadd.f32 %v3378, %v3379
        %v3381 = vrot.slane %v3380, 1
        %v3382 = vadd.f32 %v3380, %v3381
        %v3383 = vsel %vm3347, %v2632, 0.0
        %v3384 = vrot.slane %v3383, 4
        %v3385 = vadd.f32 %v3383, %v3384
        %v3386 = vrot.slane %v3385, 2
        %v3387 = vadd.f32 %v3385, %v3386
        %v3388 = vrot.slane %v3387, 1
        %v3389 = vadd.f32 %v3387, %v3388
        %v3390 = vsel %vm3347, %v2633, 0.0
        %v3391 = vrot.slane %v3390, 4
        %v3392 = vadd.f32 %v3390, %v3391
        %v3393 = vrot.slane %v3392, 2
        %v3394 = vadd.f32 %v3392, %v3393
        %v3395 = vrot.slane %v3394, 1
        %v3396 = vadd.f32 %v3394, %v3395
        %v3397 = vsel %vm3347, %v2634, 0.0
        %v3398 = vrot.slane %v3397, 4
        %v3399 = vadd.f32 %v3397, %v3398
        %v3400 = vrot.slane %v3399, 2
        %v3401 = vadd.f32 %v3399, %v3400
        %v3402 = vrot.slane %v3401, 1
        %v3403 = vadd.f32 %v3401, %v3402
        %v3404 = vsel %vm3347, %v2635, 0.0
        %v3405 = vrot.slane %v3404, 4
        %v3406 = vadd.f32 %v3404, %v3405
        %v3407 = vrot.slane %v3406, 2
        %v3408 = vadd.f32 %v3406, %v3407
        %v3409 = vrot.slane %v3408, 1
        %v3410 = vadd.f32 %v3408, %v3409
        %v3411 = vsel %vm3347, %v2636, 0.0
        %v3412 = vrot.slane %v3411, 4
        %v3413 = vadd.f32 %v3411, %v3412
        %v3414 = vrot.slane %v3413, 2
        %v3415 = vadd.f32 %v3413, %v3414
        %v3416 = vrot.slane %v3415, 1
        %v3417 = vadd.f32 %v3415, %v3416
        %v3418 = vsel %vm3347, %v2637, 0.0
        %v3419 = vrot.slane %v3418, 4
        %v3420 = vadd.f32 %v3418, %v3419
        %v3421 = vrot.slane %v3420, 2
        %v3422 = vadd.f32 %v3420, %v3421
        %v3423 = vrot.slane %v3422, 1
        %v3424 = vadd.f32 %v3422, %v3423
        %v3425 = vsel %vm3347, %v2638, 0.0
        %v3426 = vrot.slane %v3425, 4
        %v3427 = vadd.f32 %v3425, %v3426
        %v3428 = vrot.slane %v3427, 2
        %v3429 = vadd.f32 %v3427, %v3428
        %v3430 = vrot.slane %v3429, 1
        %v3431 = vadd.f32 %v3429, %v3430
        %v3432 = vsel %vm3347, %v2639, 0.0
        %v3433 = vrot.slane %v3432, 4
        %v3434 = vadd.f32 %v3432, %v3433
        %v3435 = vrot.slane %v3434, 2
        %v3436 = vadd.f32 %v3434, %v3435
        %v3437 = vrot.slane %v3436, 1
        %v3438 = vadd.f32 %v3436, %v3437
        %v3439 = vsel %vm3347, %v2640, 0.0
        %v3440 = vrot.slane %v3439, 4
        %v3441 = vadd.f32 %v3439, %v3440
        %v3442 = vrot.slane %v3441, 2
        %v3443 = vadd.f32 %v3441, %v3442
        %v3444 = vrot.slane %v3443, 1
        %v3445 = vadd.f32 %v3443, %v3444
        %v3446 = vsel %vm3347, %v2641, 0.0
        %v3447 = vrot.slane %v3446, 4
        %v3448 = vadd.f32 %v3446, %v3447
        %v3449 = vrot.slane %v3448, 2
        %v3450 = vadd.f32 %v3448, %v3449
        %v3451 = vrot.slane %v3450, 1
        %v3452 = vadd.f32 %v3450, %v3451
        %v3453 = vsel %vm3347, %v2642, 0.0
        %v3454 = vrot.slane %v3453, 4
        %v3455 = vadd.f32 %v3453, %v3454
        %v3456 = vrot.slane %v3455, 2
        %v3457 = vadd.f32 %v3455, %v3456
        %v3458 = vrot.slane %v3457, 1
        %v3459 = vadd.f32 %v3457, %v3458
        %v3460 = vsel %vm3347, %v2643, 0.0
        %v3461 = vrot.slane %v3460, 4
        %v3462 = vadd.f32 %v3460, %v3461
        %v3463 = vrot.slane %v3462, 2
        %v3464 = vadd.f32 %v3462, %v3463
        %v3465 = vrot.slane %v3464, 1
        %v3466 = vadd.f32 %v3464, %v3465
        %v3467 = vsel %vm3347, %v2644, 0.0
        %v3468 = vrot.slane %v3467, 4
        %v3469 = vadd.f32 %v3467, %v3468
        %v3470 = vrot.slane %v3469, 2
        %v3471 = vadd.f32 %v3469, %v3470
        %v3472 = vrot.slane %v3471, 1
        %v3473 = vadd.f32 %v3471, %v3472
        %v3474 = vsel %vm3347, %v2645, 0.0
        %v3475 = vrot.slane %v3474, 4
        %v3476 = vadd.f32 %v3474, %v3475
        %v3477 = vrot.slane %v3476, 2
        %v3478 = vadd.f32 %v3476, %v3477
        %v3479 = vrot.slane %v3478, 1
        %v3480 = vadd.f32 %v3478, %v3479
        %v3481 = vsel %vm3347, %v2646, 0.0
        %v3482 = vrot.slane %v3481, 4
        %v3483 = vadd.f32 %v3481, %v3482
        %v3484 = vrot.slane %v3483, 2
        %v3485 = vadd.f32 %v3483, %v3484
        %v3486 = vrot.slane %v3485, 1
        %v3487 = vadd.f32 %v3485, %v3486
        %v3488 = vsel %vm3347, %v2647, 0.0
        %v3489 = vrot.slane %v3488, 4
        %v3490 = vadd.f32 %v3488, %v3489
        %v3491 = vrot.slane %v3490, 2
        %v3492 = vadd.f32 %v3490, %v3491
        %v3493 = vrot.slane %v3492, 1
        %v3494 = vadd.f32 %v3492, %v3493
        %v3495 = vsel %vm3347, %v2648, 0.0
        %v3496 = vrot.slane %v3495, 4
        %v3497 = vadd.f32 %v3495, %v3496
        %v3498 = vrot.slane %v3497, 2
        %v3499 = vadd.f32 %v3497, %v3498
        %v3500 = vrot.slane %v3499, 1
        %v3501 = vadd.f32 %v3499, %v3500
        %v3502 = vsel %vm3347, %v2649, 0.0
        %v3503 = vrot.slane %v3502, 4
        %v3504 = vadd.f32 %v3502, %v3503
        %v3505 = vrot.slane %v3504, 2
        %v3506 = vadd.f32 %v3504, %v3505
        %v3507 = vrot.slane %v3506, 1
        %v3508 = vadd.f32 %v3506, %v3507
        %v3509 = vsel %vm3347, %v2650, 0.0
        %v3510 = vrot.slane %v3509, 4
        %v3511 = vadd.f32 %v3509, %v3510
        %v3512 = vrot.slane %v3511, 2
        %v3513 = vadd.f32 %v3511, %v3512
        %v3514 = vrot.slane %v3513, 1
        %v3515 = vadd.f32 %v3513, %v3514
        %v3516 = vsel %vm3347, %v2651, 0.0
        %v3517 = vrot.slane %v3516, 4
        %v3518 = vadd.f32 %v3516, %v3517
        %v3519 = vrot.slane %v3518, 2
        %v3520 = vadd.f32 %v3518, %v3519
        %v3521 = vrot.slane %v3520, 1
        %v3522 = vadd.f32 %v3520, %v3521
        %v3523 = vsel %vm3347, %v2652, 0.0
        %v3524 = vrot.slane %v3523, 4
        %v3525 = vadd.f32 %v3523, %v3524
        %v3526 = vrot.slane %v3525, 2
        %v3527 = vadd.f32 %v3525, %v3526
        %v3528 = vrot.slane %v3527, 1
        %v3529 = vadd.f32 %v3527, %v3528
        %v3530 = vsel %vm3347, %v2653, 0.0
        %v3531 = vrot.slane %v3530, 4
        %v3532 = vadd.f32 %v3530, %v3531
        %v3533 = vrot.slane %v3532, 2
        %v3534 = vadd.f32 %v3532, %v3533
        %v3535 = vrot.slane %v3534, 1
        %v3536 = vadd.f32 %v3534, %v3535
        %v3537 = vsel %vm3347, %v2654, 0.0
        %v3538 = vrot.slane %v3537, 4
        %v3539 = vadd.f32 %v3537, %v3538
        %v3540 = vrot.slane %v3539, 2
        %v3541 = vadd.f32 %v3539, %v3540
        %v3542 = vrot.slane %v3541, 1
        %v3543 = vadd.f32 %v3541, %v3542
        %v3544 = vsel %vm3347, %v2655, 0.0
        %v3545 = vrot.slane %v3544, 4
        %v3546 = vadd.f32 %v3544, %v3545
        %v3547 = vrot.slane %v3546, 2
        %v3548 = vadd.f32 %v3546, %v3547
        %v3549 = vrot.slane %v3548, 1
        %v3550 = vadd.f32 %v3548, %v3549
        %v3551 = vsel %vm3347, %v2656, 0.0
        %v3552 = vrot.slane %v3551, 4
        %v3553 = vadd.f32 %v3551, %v3552
        %v3554 = vrot.slane %v3553, 2
        %v3555 = vadd.f32 %v3553, %v3554
        %v3556 = vrot.slane %v3555, 1
        %v3557 = vadd.f32 %v3555, %v3556
        %v3558 = vsel %vm3347, %v2657, 0.0
        %v3559 = vrot.slane %v3558, 4
        %v3560 = vadd.f32 %v3558, %v3559
        %v3561 = vrot.slane %v3560, 2
        %v3562 = vadd.f32 %v3560, %v3561
        %v3563 = vrot.slane %v3562, 1
        %v3564 = vadd.f32 %v3562, %v3563
        %v3565 = vsel %vm3347, %v2658, 0.0
        %v3566 = vrot.slane %v3565, 4
        %v3567 = vadd.f32 %v3565, %v3566
        %v3568 = vrot.slane %v3567, 2
        %v3569 = vadd.f32 %v3567, %v3568
        %v3570 = vrot.slane %v3569, 1
        %v3571 = vadd.f32 %v3569, %v3570
        %v3572 = vsel %vm3347, %v2659, 0.0
        %v3573 = vrot.slane %v3572, 4
        %v3574 = vadd.f32 %v3572, %v3573
        %v3575 = vrot.slane %v3574, 2
        %v3576 = vadd.f32 %v3574, %v3575
        %v3577 = vrot.slane %v3576, 1
        %v3578 = vadd.f32 %v3576, %v3577
        %v3579 = vsel %vm3347, %v2660, 0.0
        %v3580 = vrot.slane %v3579, 4
        %v3581 = vadd.f32 %v3579, %v3580
        %v3582 = vrot.slane %v3581, 2
        %v3583 = vadd.f32 %v3581, %v3582
        %v3584 = vrot.slane %v3583, 1
        %v3585 = vadd.f32 %v3583, %v3584
        %v3586 = vsel %vm3347, %v2661, 0.0
        %v3587 = vrot.slane %v3586, 4
        %v3588 = vadd.f32 %v3586, %v3587
        %v3589 = vrot.slane %v3588, 2
        %v3590 = vadd.f32 %v3588, %v3589
        %v3591 = vrot.slane %v3590, 1
        %v3592 = vadd.f32 %v3590, %v3591
        %v3593 = vsel %vm3347, %v2662, 0.0
        %v3594 = vrot.slane %v3593, 4
        %v3595 = vadd.f32 %v3593, %v3594
        %v3596 = vrot.slane %v3595, 2
        %v3597 = vadd.f32 %v3595, %v3596
        %v3598 = vrot.slane %v3597, 1
        %v3599 = vadd.f32 %v3597, %v3598
        %v3600 = vsel %vm3347, %v2663, 0.0
        %v3601 = vrot.slane %v3600, 4
        %v3602 = vadd.f32 %v3600, %v3601
        %v3603 = vrot.slane %v3602, 2
        %v3604 = vadd.f32 %v3602, %v3603
        %v3605 = vrot.slane %v3604, 1
        %v3606 = vadd.f32 %v3604, %v3605
        %v3607 = vsel %vm3347, %v2664, 0.0
        %v3608 = vrot.slane %v3607, 4
        %v3609 = vadd.f32 %v3607, %v3608
        %v3610 = vrot.slane %v3609, 2
        %v3611 = vadd.f32 %v3609, %v3610
        %v3612 = vrot.slane %v3611, 1
        %v3613 = vadd.f32 %v3611, %v3612
        %v3614 = vsel %vm3347, %v2665, 0.0
        %v3615 = vrot.slane %v3614, 4
        %v3616 = vadd.f32 %v3614, %v3615
        %v3617 = vrot.slane %v3616, 2
        %v3618 = vadd.f32 %v3616, %v3617
        %v3619 = vrot.slane %v3618, 1
        %v3620 = vadd.f32 %v3618, %v3619
        %v3621 = vsel %vm3347, %v2666, 0.0
        %v3622 = vrot.slane %v3621, 4
        %v3623 = vadd.f32 %v3621, %v3622
        %v3624 = vrot.slane %v3623, 2
        %v3625 = vadd.f32 %v3623, %v3624
        %v3626 = vrot.slane %v3625, 1
        %v3627 = vadd.f32 %v3625, %v3626
        %v3628 = vsel %vm3347, %v2667, 0.0
        %v3629 = vrot.slane %v3628, 4
        %v3630 = vadd.f32 %v3628, %v3629
        %v3631 = vrot.slane %v3630, 2
        %v3632 = vadd.f32 %v3630, %v3631
        %v3633 = vrot.slane %v3632, 1
        %v3634 = vadd.f32 %v3632, %v3633
        %v3635 = vsel %vm3347, %v2668, 0.0
        %v3636 = vrot.slane %v3635, 4
        %v3637 = vadd.f32 %v3635, %v3636
        %v3638 = vrot.slane %v3637, 2
        %v3639 = vadd.f32 %v3637, %v3638
        %v3640 = vrot.slane %v3639, 1
        %v3641 = vadd.f32 %v3639, %v3640
        %v3642 = vsel %vm3347, %v2669, 0.0
        %v3643 = vrot.slane %v3642, 4
        %v3644 = vadd.f32 %v3642, %v3643
        %v3645 = vrot.slane %v3644, 2
        %v3646 = vadd.f32 %v3644, %v3645
        %v3647 = vrot.slane %v3646, 1
        %v3648 = vadd.f32 %v3646, %v3647
        %v3649 = vsel %vm3347, %v2670, 0.0
        %v3650 = vrot.slane %v3649, 4
        %v3651 = vadd.f32 %v3649, %v3650
        %v3652 = vrot.slane %v3651, 2
        %v3653 = vadd.f32 %v3651, %v3652
        %v3654 = vrot.slane %v3653, 1
        %v3655 = vadd.f32 %v3653, %v3654
        %v3656 = vsel %vm3347, %v2671, 0.0
        %v3657 = vrot.slane %v3656, 4
        %v3658 = vadd.f32 %v3656, %v3657
        %v3659 = vrot.slane %v3658, 2
        %v3660 = vadd.f32 %v3658, %v3659
        %v3661 = vrot.slane %v3660, 1
        %v3662 = vadd.f32 %v3660, %v3661
        %v3663 = vsel %vm3347, %v2672, 0.0
        %v3664 = vrot.slane %v3663, 4
        %v3665 = vadd.f32 %v3663, %v3664
        %v3666 = vrot.slane %v3665, 2
        %v3667 = vadd.f32 %v3665, %v3666
        %v3668 = vrot.slane %v3667, 1
        %v3669 = vadd.f32 %v3667, %v3668
        %v3670 = vsel %vm3347, %v2673, 0.0
        %v3671 = vrot.slane %v3670, 4
        %v3672 = vadd.f32 %v3670, %v3671
        %v3673 = vrot.slane %v3672, 2
        %v3674 = vadd.f32 %v3672, %v3673
        %v3675 = vrot.slane %v3674, 1
        %v3676 = vadd.f32 %v3674, %v3675
        %v3677 = vsel %vm3347, %v2674, 0.0
        %v3678 = vrot.slane %v3677, 4
        %v3679 = vadd.f32 %v3677, %v3678
        %v3680 = vrot.slane %v3679, 2
        %v3681 = vadd.f32 %v3679, %v3680
        %v3682 = vrot.slane %v3681, 1
        %v3683 = vadd.f32 %v3681, %v3682
        %v3684 = vpack.c.bf16 %v3017, %v3017
        %v3685 = vpack.c.bf16 %v3024, %v3024
        %v3686 = vpack.c.bf16 %v3031, %v3031
        %v3687 = vpack.c.bf16 %v3038, %v3038
        %v3688 = vpack.c.bf16 %v3045, %v3045
        %v3689 = vpack.c.bf16 %v3052, %v3052
        %v3690 = vpack.c.bf16 %v3059, %v3059
        %v3691 = vpack.c.bf16 %v3066, %v3066
        %v3692 = vpack.c.bf16 %v3073, %v3073
        %v3693 = vpack.c.bf16 %v3080, %v3080
        %v3694 = vpack.c.bf16 %v3087, %v3087
        %v3695 = vpack.c.bf16 %v3094, %v3094
        %v3696 = vpack.c.bf16 %v3101, %v3101
        %v3697 = vpack.c.bf16 %v3108, %v3108
        %v3698 = vpack.c.bf16 %v3115, %v3115
        %v3699 = vpack.c.bf16 %v3122, %v3122
        %v3700 = vpack.c.bf16 %v3129, %v3129
        %v3701 = vpack.c.bf16 %v3136, %v3136
        %v3702 = vpack.c.bf16 %v3143, %v3143
        %v3703 = vpack.c.bf16 %v3150, %v3150
        %v3704 = vpack.c.bf16 %v3157, %v3157
        %v3705 = vpack.c.bf16 %v3164, %v3164
        %v3706 = vpack.c.bf16 %v3171, %v3171
        %v3707 = vpack.c.bf16 %v3178, %v3178
        %v3708 = vpack.c.bf16 %v3185, %v3185
        %v3709 = vpack.c.bf16 %v3192, %v3192
        %v3710 = vpack.c.bf16 %v3199, %v3199
        %v3711 = vpack.c.bf16 %v3206, %v3206
        %v3712 = vpack.c.bf16 %v3213, %v3213
        %v3713 = vpack.c.bf16 %v3220, %v3220
        %v3714 = vpack.c.bf16 %v3227, %v3227
        %v3715 = vpack.c.bf16 %v3234, %v3234
        %v3716 = vpack.c.bf16 %v3241, %v3241
        %v3717 = vpack.c.bf16 %v3248, %v3248
        %v3718 = vpack.c.bf16 %v3255, %v3255
        %v3719 = vpack.c.bf16 %v3262, %v3262
        %v3720 = vpack.c.bf16 %v3269, %v3269
        %v3721 = vpack.c.bf16 %v3276, %v3276
        %v3722 = vpack.c.bf16 %v3283, %v3283
        %v3723 = vpack.c.bf16 %v3290, %v3290
        %v3724 = vpack.c.bf16 %v3297, %v3297
        %v3725 = vpack.c.bf16 %v3304, %v3304
        %v3726 = vpack.c.bf16 %v3311, %v3311
        %v3727 = vpack.c.bf16 %v3318, %v3318
        %v3728 = vpack.c.bf16 %v3325, %v3325
        %v3729 = vpack.c.bf16 %v3332, %v3332
        %v3730 = vpack.c.bf16 %v3339, %v3339
        %v3731 = vpack.c.bf16 %v3346, %v3346
        %v3732 = vld [vmem:[%s9] sm:$0xf]
        %v3733 = vld [vmem:[%s9 + $0x4] sm:$0xf]
        %v3734 = vld [vmem:[%s9 + $0x8] sm:$0xf]
        %v3735 = vld [vmem:[%s9 + $0xc] sm:$0xf]
        %v3736 = vld [vmem:[%s10] sm:$0x1]
        %3738 = vset.pattern.permute.xlu0 0
        %3739 = vperm.xlu0 %3738, %v3354
        %v3740 = vpop.permute.xlu0 %3739
        %3743 = vset.pattern.permute.xlu0 0
        %3744 = vperm.xlu0 %3743, %v3361
        %v3745 = vpop.permute.xlu0 %3744
        %3748 = vset.pattern.permute.xlu0 0
        %3749 = vperm.xlu0 %3748, %v3368
        %v3750 = vpop.permute.xlu0 %3749
        %3753 = vset.pattern.permute.xlu0 0
        %3754 = vperm.xlu0 %3753, %v3375
        %v3755 = vpop.permute.xlu0 %3754
        %3758 = vset.pattern.permute.xlu0 0
        %3759 = vperm.xlu0 %3758, %v3382
        %v3760 = vpop.permute.xlu0 %3759
        %3763 = vset.pattern.permute.xlu0 0
        %3764 = vperm.xlu0 %3763, %v3389
        %v3765 = vpop.permute.xlu0 %3764
        %3768 = vset.pattern.permute.xlu0 0
        %3769 = vperm.xlu0 %3768, %v3396
        %v3770 = vpop.permute.xlu0 %3769
        %3773 = vset.pattern.permute.xlu0 0
        %3774 = vperm.xlu0 %3773, %v3403
        %v3775 = vpop.permute.xlu0 %3774
        %3778 = vset.pattern.permute.xlu0 0
        %3779 = vperm.xlu0 %3778, %v3410
        %v3780 = vpop.permute.xlu0 %3779
        %3783 = vset.pattern.permute.xlu0 0
        %3784 = vperm.xlu0 %3783, %v3417
        %v3785 = vpop.permute.xlu0 %3784
        %3788 = vset.pattern.permute.xlu0 0
        %3789 = vperm.xlu0 %3788, %v3424
        %v3790 = vpop.permute.xlu0 %3789
        %3793 = vset.pattern.permute.xlu0 0
        %3794 = vperm.xlu0 %3793, %v3431
        %v3795 = vpop.permute.xlu0 %3794
        %3798 = vset.pattern.permute.xlu0 0
        %3799 = vperm.xlu0 %3798, %v3438
        %v3800 = vpop.permute.xlu0 %3799
        %3803 = vset.pattern.permute.xlu0 0
        %3804 = vperm.xlu0 %3803, %v3445
        %v3805 = vpop.permute.xlu0 %3804
        %3808 = vset.pattern.permute.xlu0 0
        %3809 = vperm.xlu0 %3808, %v3452
        %v3810 = vpop.permute.xlu0 %3809
        %3813 = vset.pattern.permute.xlu0 0
        %3814 = vperm.xlu0 %3813, %v3459
        %v3815 = vpop.permute.xlu0 %3814
        %3818 = vset.pattern.permute.xlu0 0
        %3819 = vperm.xlu0 %3818, %v3466
        %v3820 = vpop.permute.xlu0 %3819
        %3823 = vset.pattern.permute.xlu0 0
        %3824 = vperm.xlu0 %3823, %v3473
        %v3825 = vpop.permute.xlu0 %3824
        %3828 = vset.pattern.permute.xlu0 0
        %3829 = vperm.xlu0 %3828, %v3480
        %v3830 = vpop.permute.xlu0 %3829
        %3833 = vset.pattern.permute.xlu0 0
        %3834 = vperm.xlu0 %3833, %v3487
        %v3835 = vpop.permute.xlu0 %3834
        %3838 = vset.pattern.permute.xlu0 0
        %3839 = vperm.xlu0 %3838, %v3494
        %v3840 = vpop.permute.xlu0 %3839
        %3843 = vset.pattern.permute.xlu0 0
        %3844 = vperm.xlu0 %3843, %v3501
        %v3845 = vpop.permute.xlu0 %3844
        %3848 = vset.pattern.permute.xlu0 0
        %3849 = vperm.xlu0 %3848, %v3508
        %v3850 = vpop.permute.xlu0 %3849
        %3853 = vset.pattern.permute.xlu0 0
        %3854 = vperm.xlu0 %3853, %v3515
        %v3855 = vpop.permute.xlu0 %3854
        %3858 = vset.pattern.permute.xlu0 0
        %3859 = vperm.xlu0 %3858, %v3522
        %v3860 = vpop.permute.xlu0 %3859
        %3863 = vset.pattern.permute.xlu0 0
        %3864 = vperm.xlu0 %3863, %v3529
        %v3865 = vpop.permute.xlu0 %3864
        %3868 = vset.pattern.permute.xlu0 0
        %3869 = vperm.xlu0 %3868, %v3536
        %v3870 = vpop.permute.xlu0 %3869
        %3873 = vset.pattern.permute.xlu0 0
        %3874 = vperm.xlu0 %3873, %v3543
        %v3875 = vpop.permute.xlu0 %3874
        %3878 = vset.pattern.permute.xlu0 0
        %3879 = vperm.xlu0 %3878, %v3550
        %v3880 = vpop.permute.xlu0 %3879
        %3883 = vset.pattern.permute.xlu0 0
        %3884 = vperm.xlu0 %3883, %v3557
        %v3885 = vpop.permute.xlu0 %3884
        %3888 = vset.pattern.permute.xlu0 0
        %3889 = vperm.xlu0 %3888, %v3564
        %v3890 = vpop.permute.xlu0 %3889
        %3893 = vset.pattern.permute.xlu0 0
        %3894 = vperm.xlu0 %3893, %v3571
        %v3895 = vpop.permute.xlu0 %3894
        %3898 = vset.pattern.permute.xlu0 0
        %3899 = vperm.xlu0 %3898, %v3578
        %v3900 = vpop.permute.xlu0 %3899
        %3903 = vset.pattern.permute.xlu0 0
        %3904 = vperm.xlu0 %3903, %v3585
        %v3905 = vpop.permute.xlu0 %3904
        %3908 = vset.pattern.permute.xlu0 0
        %3909 = vperm.xlu0 %3908, %v3592
        %v3910 = vpop.permute.xlu0 %3909
        %3913 = vset.pattern.permute.xlu0 0
        %3914 = vperm.xlu0 %3913, %v3599
        %v3915 = vpop.permute.xlu0 %3914
        %3918 = vset.pattern.permute.xlu0 0
        %3919 = vperm.xlu0 %3918, %v3606
        %v3920 = vpop.permute.xlu0 %3919
        %3923 = vset.pattern.permute.xlu0 0
        %3924 = vperm.xlu0 %3923, %v3613
        %v3925 = vpop.permute.xlu0 %3924
        %3928 = vset.pattern.permute.xlu0 0
        %3929 = vperm.xlu0 %3928, %v3620
        %v3930 = vpop.permute.xlu0 %3929
        %3933 = vset.pattern.permute.xlu0 0
        %3934 = vperm.xlu0 %3933, %v3627
        %v3935 = vpop.permute.xlu0 %3934
        %3938 = vset.pattern.permute.xlu0 0
        %3939 = vperm.xlu0 %3938, %v3634
        %v3940 = vpop.permute.xlu0 %3939
        %3943 = vset.pattern.permute.xlu0 0
        %3944 = vperm.xlu0 %3943, %v3641
        %v3945 = vpop.permute.xlu0 %3944
        %3948 = vset.pattern.permute.xlu0 0
        %3949 = vperm.xlu0 %3948, %v3648
        %v3950 = vpop.permute.xlu0 %3949
        %3953 = vset.pattern.permute.xlu0 0
        %3954 = vperm.xlu0 %3953, %v3655
        %v3955 = vpop.permute.xlu0 %3954
        %3958 = vset.pattern.permute.xlu0 0
        %3959 = vperm.xlu0 %3958, %v3662
        %v3960 = vpop.permute.xlu0 %3959
        %3963 = vset.pattern.permute.xlu0 0
        %3964 = vperm.xlu0 %3963, %v3669
        %v3965 = vpop.permute.xlu0 %3964
        %3968 = vset.pattern.permute.xlu0 0
        %3969 = vperm.xlu0 %3968, %v3676
        %v3970 = vpop.permute.xlu0 %3969
        %3973 = vset.pattern.permute.xlu0 0
        %3974 = vperm.xlu0 %3973, %v3683
        %v3975 = vpop.permute.xlu0 %3974
        %v3978 = vlaneseq
        %v3979 = vshrl.u32 %v3978, 7
        %v3980 = vsub.s32 0, %v3979
        %v3981 = vrot.slane %v3736, %v3980
        %v3983 = vmul.f32 %v3740, %v3981
        %v3984 = vmul.f32 %v3745, %v3981
        %v3985 = vmul.f32 %v3750, %v3981
        %v3986 = vmul.f32 %v3755, %v3981
        %v3987 = vmul.f32 %v3760, %v3981
        %v3988 = vmul.f32 %v3765, %v3981
        %v3989 = vmul.f32 %v3770, %v3981
        %v3990 = vmul.f32 %v3775, %v3981
        %v3991 = vmul.f32 %v3780, %v3981
        %v3992 = vmul.f32 %v3785, %v3981
        %v3993 = vmul.f32 %v3790, %v3981
        %v3994 = vmul.f32 %v3795, %v3981
        %v3995 = vmul.f32 %v3800, %v3981
        %v3996 = vmul.f32 %v3805, %v3981
        %v3997 = vmul.f32 %v3810, %v3981
        %v3998 = vmul.f32 %v3815, %v3981
        %v3999 = vmul.f32 %v3820, %v3981
        %v4000 = vmul.f32 %v3825, %v3981
        %v4001 = vmul.f32 %v3830, %v3981
        %v4002 = vmul.f32 %v3835, %v3981
        %v4003 = vmul.f32 %v3840, %v3981
        %v4004 = vmul.f32 %v3845, %v3981
        %v4005 = vmul.f32 %v3850, %v3981
        %v4006 = vmul.f32 %v3855, %v3981
        %v4007 = vmul.f32 %v3860, %v3981
        %v4008 = vmul.f32 %v3865, %v3981
        %v4009 = vmul.f32 %v3870, %v3981
        %v4010 = vmul.f32 %v3875, %v3981
        %v4011 = vmul.f32 %v3880, %v3981
        %v4012 = vmul.f32 %v3885, %v3981
        %v4013 = vmul.f32 %v3890, %v3981
        %v4014 = vmul.f32 %v3895, %v3981
        %v4015 = vmul.f32 %v3900, %v3981
        %v4016 = vmul.f32 %v3905, %v3981
        %v4017 = vmul.f32 %v3910, %v3981
        %v4018 = vmul.f32 %v3915, %v3981
        %v4019 = vmul.f32 %v3920, %v3981
        %v4020 = vmul.f32 %v3925, %v3981
        %v4021 = vmul.f32 %v3930, %v3981
        %v4022 = vmul.f32 %v3935, %v3981
        %v4023 = vmul.f32 %v3940, %v3981
        %v4024 = vmul.f32 %v3945, %v3981
        %v4025 = vmul.f32 %v3950, %v3981
        %v4026 = vmul.f32 %v3955, %v3981
        %v4027 = vmul.f32 %v3960, %v3981
        %v4028 = vmul.f32 %v3965, %v3981
        %v4029 = vmul.f32 %v3970, %v3981
        %v4030 = vmul.f32 %v3975, %v3981
        %v4079 = vunpack.c.l.b16 %v3684
        %v4080 = vunpack.c.l.b16 %v3685
        %v4081 = vunpack.c.l.b16 %v3686
        %v4082 = vunpack.c.l.b16 %v3687
        %v4083 = vunpack.c.l.b16 %v3688
        %v4084 = vunpack.c.l.b16 %v3689
        %v4085 = vunpack.c.l.b16 %v3690
        %v4086 = vunpack.c.l.b16 %v3691
        %v4087 = vunpack.c.l.b16 %v3692
        %v4088 = vunpack.c.l.b16 %v3693
        %v4089 = vunpack.c.l.b16 %v3694
        %v4090 = vunpack.c.l.b16 %v3695
        %v4091 = vunpack.c.l.b16 %v3696
        %v4092 = vunpack.c.l.b16 %v3697
        %v4093 = vunpack.c.l.b16 %v3698
        %v4094 = vunpack.c.l.b16 %v3699
        %v4095 = vunpack.c.l.b16 %v3700
        %v4096 = vunpack.c.l.b16 %v3701
        %v4097 = vunpack.c.l.b16 %v3702
        %v4098 = vunpack.c.l.b16 %v3703
        %v4099 = vunpack.c.l.b16 %v3704
        %v4100 = vunpack.c.l.b16 %v3705
        %v4101 = vunpack.c.l.b16 %v3706
        %v4102 = vunpack.c.l.b16 %v3707
        %v4103 = vunpack.c.l.b16 %v3708
        %v4104 = vunpack.c.l.b16 %v3709
        %v4105 = vunpack.c.l.b16 %v3710
        %v4106 = vunpack.c.l.b16 %v3711
        %v4107 = vunpack.c.l.b16 %v3712
        %v4108 = vunpack.c.l.b16 %v3713
        %v4109 = vunpack.c.l.b16 %v3714
        %v4110 = vunpack.c.l.b16 %v3715
        %v4111 = vunpack.c.l.b16 %v3716
        %v4112 = vunpack.c.l.b16 %v3717
        %v4113 = vunpack.c.l.b16 %v3718
        %v4114 = vunpack.c.l.b16 %v3719
        %v4115 = vunpack.c.l.b16 %v3720
        %v4116 = vunpack.c.l.b16 %v3721
        %v4117 = vunpack.c.l.b16 %v3722
        %v4118 = vunpack.c.l.b16 %v3723
        %v4119 = vunpack.c.l.b16 %v3724
        %v4120 = vunpack.c.l.b16 %v3725
        %v4121 = vunpack.c.l.b16 %v3726
        %v4122 = vunpack.c.l.b16 %v3727
        %v4123 = vunpack.c.l.b16 %v3728
        %v4124 = vunpack.c.l.b16 %v3729
        %v4125 = vunpack.c.l.b16 %v3730
        %v4126 = vunpack.c.l.b16 %v3731
        %vm4127 = vcmask 1041409
        %v4128 = vsel %vm4127, %v4080, %v4079
        %vm4129 = vcmask 1042434
        %v4130 = vsel %vm4129, %v4081, %v4128
        %vm4131 = vcmask 1043459
        %v4132 = vsel %vm4131, %v4082, %v4130
        %vm4133 = vcmask 1044484
        %v4134 = vsel %vm4133, %v4083, %v4132
        %vm4135 = vcmask 1045509
        %v4136 = vsel %vm4135, %v4084, %v4134
        %vm4137 = vcmask 1046534
        %v4138 = vsel %vm4137, %v4085, %v4136
        %vm4139 = vcmask 1047559
        %v4140 = vsel %vm4139, %v4086, %v4138
        %v4141 = vsel %vm4127, %v4088, %v4087
        %v4142 = vsel %vm4129, %v4089, %v4141
        %v4143 = vsel %vm4131, %v4090, %v4142
        %v4144 = vsel %vm4133, %v4091, %v4143
        %v4145 = vsel %vm4135, %v4092, %v4144
        %v4146 = vsel %vm4137, %v4093, %v4145
        %v4147 = vsel %vm4139, %v4094, %v4146
        %v4148 = vsel %vm4127, %v4096, %v4095
        %v4149 = vsel %vm4129, %v4097, %v4148
        %v4150 = vsel %vm4131, %v4098, %v4149
        %v4151 = vsel %vm4133, %v4099, %v4150
        %v4152 = vsel %vm4135, %v4100, %v4151
        %v4153 = vsel %vm4137, %v4101, %v4152
        %v4154 = vsel %vm4139, %v4102, %v4153
        %v4155 = vsel %vm4127, %v4104, %v4103
        %v4156 = vsel %vm4129, %v4105, %v4155
        %v4157 = vsel %vm4131, %v4106, %v4156
        %v4158 = vsel %vm4133, %v4107, %v4157
        %v4159 = vsel %vm4135, %v4108, %v4158
        %v4160 = vsel %vm4137, %v4109, %v4159
        %v4161 = vsel %vm4139, %v4110, %v4160
        %v4162 = vsel %vm4127, %v4112, %v4111
        %v4163 = vsel %vm4129, %v4113, %v4162
        %v4164 = vsel %vm4131, %v4114, %v4163
        %v4165 = vsel %vm4133, %v4115, %v4164
        %v4166 = vsel %vm4135, %v4116, %v4165
        %v4167 = vsel %vm4137, %v4117, %v4166
        %v4168 = vsel %vm4139, %v4118, %v4167
        %v4169 = vsel %vm4127, %v4120, %v4119
        %v4170 = vsel %vm4129, %v4121, %v4169
        %v4171 = vsel %vm4131, %v4122, %v4170
        %v4172 = vsel %vm4133, %v4123, %v4171
        %v4173 = vsel %vm4135, %v4124, %v4172
        %v4174 = vsel %vm4137, %v4125, %v4173
        %v4175 = vsel %vm4139, %v4126, %v4174
        %v4176 = vpack.c.b16 %v4147, %v4140
        %v4177 = vpack.c.b16 %v4161, %v4154
        %v4178 = vpack.c.b16 %v4175, %v4168
        %v4183 = vunpack.c.l.b16 %v3732
        %v4184 = vunpack.c.l.b16 %v3733
        %v4185 = vunpack.c.l.b16 %v3734
        %v4186 = vunpack.c.l.b16 %v3735
        %v4187 = vpack.c.b16 %v4184, %v4183
        %v4188 = vpack.c.b16 %v4186, %v4185
        %v4239 = vrot.slane %v3984, 7
        %v4240 = vsel %vm4127, %v4239, %v3983
        %v4241 = vrot.slane %v3985, 6
        %v4242 = vsel %vm4129, %v4241, %v4240
        %v4243 = vrot.slane %v3986, 5
        %v4244 = vsel %vm4131, %v4243, %v4242
        %v4245 = vrot.slane %v3987, 4
        %v4246 = vsel %vm4133, %v4245, %v4244
        %v4247 = vrot.slane %v3988, 3
        %v4248 = vsel %vm4135, %v4247, %v4246
        %v4249 = vrot.slane %v3989, 2
        %v4250 = vsel %vm4137, %v4249, %v4248
        %v4251 = vrot.slane %v3990, 1
        %v4252 = vsel %vm4139, %v4251, %v4250
        %v4253 = vrot.slane %v3992, 7
        %v4254 = vsel %vm4127, %v4253, %v3991
        %v4255 = vrot.slane %v3993, 6
        %v4256 = vsel %vm4129, %v4255, %v4254
        %v4257 = vrot.slane %v3994, 5
        %v4258 = vsel %vm4131, %v4257, %v4256
        %v4259 = vrot.slane %v3995, 4
        %v4260 = vsel %vm4133, %v4259, %v4258
        %v4261 = vrot.slane %v3996, 3
        %v4262 = vsel %vm4135, %v4261, %v4260
        %v4263 = vrot.slane %v3997, 2
        %v4264 = vsel %vm4137, %v4263, %v4262
        %v4265 = vrot.slane %v3998, 1
        %v4266 = vsel %vm4139, %v4265, %v4264
        %v4267 = vrot.slane %v4000, 7
        %v4268 = vsel %vm4127, %v4267, %v3999
        %v4269 = vrot.slane %v4001, 6
        %v4270 = vsel %vm4129, %v4269, %v4268
        %v4271 = vrot.slane %v4002, 5
        %v4272 = vsel %vm4131, %v4271, %v4270
        %v4273 = vrot.slane %v4003, 4
        %v4274 = vsel %vm4133, %v4273, %v4272
        %v4275 = vrot.slane %v4004, 3
        %v4276 = vsel %vm4135, %v4275, %v4274
        %v4277 = vrot.slane %v4005, 2
        %v4278 = vsel %vm4137, %v4277, %v4276
        %v4279 = vrot.slane %v4006, 1
        %v4280 = vsel %vm4139, %v4279, %v4278
        %v4281 = vrot.slane %v4008, 7
        %v4282 = vsel %vm4127, %v4281, %v4007
        %v4283 = vrot.slane %v4009, 6
        %v4284 = vsel %vm4129, %v4283, %v4282
        %v4285 = vrot.slane %v4010, 5
        %v4286 = vsel %vm4131, %v4285, %v4284
        %v4287 = vrot.slane %v4011, 4
        %v4288 = vsel %vm4133, %v4287, %v4286
        %v4289 = vrot.slane %v4012, 3
        %v4290 = vsel %vm4135, %v4289, %v4288
        %v4291 = vrot.slane %v4013, 2
        %v4292 = vsel %vm4137, %v4291, %v4290
        %v4293 = vrot.slane %v4014, 1
        %v4294 = vsel %vm4139, %v4293, %v4292
        %v4295 = vrot.slane %v4016, 7
        %v4296 = vsel %vm4127, %v4295, %v4015
        %v4297 = vrot.slane %v4017, 6
        %v4298 = vsel %vm4129, %v4297, %v4296
        %v4299 = vrot.slane %v4018, 5
        %v4300 = vsel %vm4131, %v4299, %v4298
        %v4301 = vrot.slane %v4019, 4
        %v4302 = vsel %vm4133, %v4301, %v4300
        %v4303 = vrot.slane %v4020, 3
        %v4304 = vsel %vm4135, %v4303, %v4302
        %v4305 = vrot.slane %v4021, 2
        %v4306 = vsel %vm4137, %v4305, %v4304
        %v4307 = vrot.slane %v4022, 1
        %v4308 = vsel %vm4139, %v4307, %v4306
        %v4309 = vrot.slane %v4024, 7
        %v4310 = vsel %vm4127, %v4309, %v4023
        %v4311 = vrot.slane %v4025, 6
        %v4312 = vsel %vm4129, %v4311, %v4310
        %v4313 = vrot.slane %v4026, 5
        %v4314 = vsel %vm4131, %v4313, %v4312
        %v4315 = vrot.slane %v4027, 4
        %v4316 = vsel %vm4133, %v4315, %v4314
        %v4317 = vrot.slane %v4028, 3
        %v4318 = vsel %vm4135, %v4317, %v4316
        %v4319 = vrot.slane %v4029, 2
        %v4320 = vsel %vm4137, %v4319, %v4318
        %v4321 = vrot.slane %v4030, 1
        %v4322 = vsel %vm4139, %v4321, %v4320
        %v4330 = vsel %vm835, %v4176, 0
        %v4333 = vsel %vm835, %v4177, 0
        %v4336 = vsel %vm835, %v4178, 0
        %4338 = vmatprep.subr.bf16.mxu0 0
        %4339 = vmatpush1.bf16.msra.mxu0 0
        %4340 = vmatprep.subr.bf16.mxu0 0
        %4341 = vmatpush1.bf16.msra.mxu0 0
        %4342 = vmatprep.subr.bf16.mxu0 0
        %4343 = vmatpush1.bf16.msra.mxu0 0
        %4344 = vmatprep.subr.bf16.mxu0 0
        %4345 = vmatpush1.bf16.msra.mxu0 0
        %4346 = vmatprep.subr.bf16.mxu0 0
        %4347 = vmatpush1.bf16.msra.mxu0 0
        %4348 = vmatprep.subr.bf16.mxu0 0
        %4349 = vmatpush1.bf16.msra.mxu0 0
        %4350 = vmatprep.subr.bf16.mxu0 0
        %4351 = vmatpush1.bf16.msra.mxu0 %v4188
        %4352 = vmatprep.subr.bf16.mxu0 0
        %4353 = vmatpush1.bf16.msra.mxu0 %v4187
        %4354 = vmatprep.subr.bf16.mxu0 0
        %4355 = vmatpush2.bf16.msra.mxu0 0
        %4356 = vmatprep.subr.bf16.mxu0 0
        %4357 = vmatpush2.bf16.msra.mxu0 0
        %4358 = vmatprep.subr.bf16.mxu0 0
        %4359 = vmatpush2.bf16.msra.mxu0 0
        %4360 = vmatprep.subr.bf16.mxu0 0
        %4361 = vmatpush2.bf16.msra.mxu0 0
        %4362 = vmatprep.subr.bf16.mxu0 0
        %4363 = vmatpush2.bf16.msra.mxu0 0
        %4364 = vmatprep.subr.bf16.mxu0 0
        %4365 = vmatpush2.bf16.msra.mxu0 0
        %4366 = vmatprep.subr.bf16.mxu0 0
        %4367 = vmatpush2.bf16.msra.mxu0 0
        %4368 = vmatprep.subr.bf16.mxu0 0
        %4369 = vmatpush2.bf16.msra.mxu0 0
        %4370 = vmatprep.mubr.bf16.mxu0 0
        %4371 = vmatmul.mubr.bf16.gmra.mxu0 %v4330
        %v4372 = vpop.f32.mrf.mxu0
        %v4373 = vadd.f32 %v4252, %v4372
        %v4374 = vpop.f32.mrf.mxu0
        %v4375 = vpop.f32.mrf.mxu0
        %v4376 = vadd.f32 %v4266, %v4375
        %v4377 = vpop.f32.mrf.mxu0
        %4378 = vmatprep.mubr.bf16.mxu0 0
        %4379 = vmatmul.mubr.bf16.gmra.mxu0 %v4333
        %v4380 = vpop.f32.mrf.mxu0
        %v4381 = vadd.f32 %v4280, %v4380
        %v4382 = vpop.f32.mrf.mxu0
        %v4383 = vpop.f32.mrf.mxu0
        %v4384 = vadd.f32 %v4294, %v4383
        %v4385 = vpop.f32.mrf.mxu0
        %4386 = vmatprep.mubr.bf16.mxu0 0
        %4387 = vmatmul.mubr.bf16.gmra.mxu0 %v4336
        %v4388 = vpop.f32.mrf.mxu0
        %v4389 = vadd.f32 %v4308, %v4388
        %v4390 = vpop.f32.mrf.mxu0
        %v4391 = vpop.f32.mrf.mxu0
        %v4392 = vadd.f32 %v4322, %v4391
        %v4393 = vpop.f32.mrf.mxu0
        %4394 = vdwg.mxu0
        %v4395 = vadd.f32 %v755, %v4373
        %v4396 = vadd.f32 %v756, %v4376
        %v4397 = vadd.f32 %v757, %v4381
        %v4398 = vadd.f32 %v758, %v4384
        %v4399 = vadd.f32 %v759, %v4389
        %v4400 = vadd.f32 %v760, %v4392
        %v4401 = vld [vmem:[%s11] sm:$0x1]
        %v4402 = vld [vmem:[%s12] sm:$0x1]
        %v4403 = vsel %vm835, %v4395, 0.0
        %4404 = vadd.xlane.f32.xlu0 %v4403
        %v4405 = vpop.xlane.xlu0 %4404
        %v4406 = vsel %vm835, %v4396, 0.0
        %4407 = vadd.xlane.f32.xlu0 %v4406
        %v4408 = vpop.xlane.xlu0 %4407
        %v4409 = vsel %vm835, %v4397, 0.0
        %4410 = vadd.xlane.f32.xlu0 %v4409
        %v4411 = vpop.xlane.xlu0 %4410
        %v4412 = vsel %vm835, %v4398, 0.0
        %4413 = vadd.xlane.f32.xlu0 %v4412
        %v4414 = vpop.xlane.xlu0 %4413
        %v4415 = vsel %vm835, %v4399, 0.0
        %4416 = vadd.xlane.f32.xlu0 %v4415
        %v4417 = vpop.xlane.xlu0 %4416
        %v4418 = vsel %vm835, %v4400, 0.0
        %4419 = vadd.xlane.f32.xlu0 %v4418
        %v4420 = vpop.xlane.xlu0 %4419
        %v4421 = vrcp.pop 32.0
        %v4422 = vmul.f32 %v4405, %v4421
        %v4423 = vmul.f32 %v4408, %v4421
        %v4424 = vmul.f32 %v4411, %v4421
        %v4425 = vmul.f32 %v4414, %v4421
        %v4426 = vmul.f32 %v4417, %v4421
        %v4427 = vmul.f32 %v4420, %v4421
        %v4428 = vsub.f32 %v4395, %v4422
        %v4429 = vsub.f32 %v4396, %v4423
        %v4430 = vsub.f32 %v4397, %v4424
        %v4431 = vsub.f32 %v4398, %v4425
        %v4432 = vsub.f32 %v4399, %v4426
        %v4433 = vsub.f32 %v4400, %v4427
        %v4434 = vmul.f32 %v4428, %v4428
        %v4435 = vmul.f32 %v4429, %v4429
        %v4436 = vmul.f32 %v4430, %v4430
        %v4437 = vmul.f32 %v4431, %v4431
        %v4438 = vmul.f32 %v4432, %v4432
        %v4439 = vmul.f32 %v4433, %v4433
        %v4440 = vsel %vm835, %v4434, 0.0
        %4441 = vadd.xlane.f32.xlu0 %v4440
        %v4442 = vpop.xlane.xlu0 %4441
        %v4443 = vsel %vm835, %v4435, 0.0
        %4444 = vadd.xlane.f32.xlu0 %v4443
        %v4445 = vpop.xlane.xlu0 %4444
        %v4446 = vsel %vm835, %v4436, 0.0
        %4447 = vadd.xlane.f32.xlu0 %v4446
        %v4448 = vpop.xlane.xlu0 %4447
        %v4449 = vsel %vm835, %v4437, 0.0
        %4450 = vadd.xlane.f32.xlu0 %v4449
        %v4451 = vpop.xlane.xlu0 %4450
        %v4452 = vsel %vm835, %v4438, 0.0
        %4453 = vadd.xlane.f32.xlu0 %v4452
        %v4454 = vpop.xlane.xlu0 %4453
        %v4455 = vsel %vm835, %v4439, 0.0
        %4456 = vadd.xlane.f32.xlu0 %v4455
        %v4457 = vpop.xlane.xlu0 %4456
        %v4458 = vmul.f32 %v4442, %v4421
        %v4459 = vmul.f32 %v4445, %v4421
        %v4460 = vmul.f32 %v4448, %v4421
        %v4461 = vmul.f32 %v4451, %v4421
        %v4462 = vmul.f32 %v4454, %v4421
        %v4463 = vmul.f32 %v4457, %v4421
        %v4464 = vadd.f32 %v4458, 1e-05
        %v4465 = vadd.f32 %v4459, 1e-05
        %v4466 = vadd.f32 %v4460, 1e-05
        %v4467 = vadd.f32 %v4461, 1e-05
        %v4468 = vadd.f32 %v4462, 1e-05
        %v4469 = vadd.f32 %v4463, 1e-05
        %v4470 = vrsqrt.pop %v4464
        %v4471 = vrsqrt.pop %v4465
        %v4472 = vrsqrt.pop %v4466
        %v4473 = vrsqrt.pop %v4467
        %v4474 = vrsqrt.pop %v4468
        %v4475 = vrsqrt.pop %v4469
        %v4476 = vmul.f32 %v4428, %v4470
        %v4477 = vmul.f32 %v4429, %v4471
        %v4478 = vmul.f32 %v4430, %v4472
        %v4479 = vmul.f32 %v4431, %v4473
        %v4480 = vmul.f32 %v4432, %v4474
        %v4481 = vmul.f32 %v4433, %v4475
        %v4483 = vlaneseq
        %v4484 = vshrl.u32 %v4483, 7
        %v4485 = vsub.s32 0, %v4484
        %v4486 = vrot.slane %v4401, %v4485
        %v4488 = vmul.f32 %v4476, %v4486
        %v4489 = vmul.f32 %v4477, %v4486
        %v4490 = vmul.f32 %v4478, %v4486
        %v4491 = vmul.f32 %v4479, %v4486
        %v4492 = vmul.f32 %v4480, %v4486
        %v4493 = vmul.f32 %v4481, %v4486
        %v4495 = vlaneseq
        %v4496 = vshrl.u32 %v4495, 7
        %v4497 = vsub.s32 0, %v4496
        %v4498 = vrot.slane %v4402, %v4497
        %v4500 = vadd.f32 %v4488, %v4498
        %v4501 = vadd.f32 %v4489, %v4498
        %v4502 = vadd.f32 %v4490, %v4498
        %v4503 = vadd.f32 %v4491, %v4498
        %v4504 = vadd.f32 %v4492, %v4498
        %v4505 = vadd.f32 %v4493, %v4498
        %v4506 = vpack.c.bf16 %v4501, %v4500
        %v4507 = vpack.c.bf16 %v4503, %v4502
        %v4508 = vpack.c.bf16 %v4505, %v4504
        %v4509 = vld [vmem:[%s13] sm:$0xf]
        %v4510 = vld [vmem:[%s13 + $0x4] sm:$0xf]
        %v4511 = vld [vmem:[%s13 + $0x8] sm:$0xf]
        %v4512 = vld [vmem:[%s13 + $0xc] sm:$0xf]
        %v4513 = vld [vmem:[%s14] sm:$0x1]
        %v4515 = vlaneseq
        %v4516 = vshrl.u32 %v4515, 7
        %v4517 = vsub.s32 0, %v4516
        %v4518 = vrot.slane %v4513, %v4517
        %v4524 = vunpack.c.l.b16 %v4509
        %v4525 = vunpack.c.l.b16 %v4510
        %v4526 = vunpack.c.l.b16 %v4511
        %v4527 = vunpack.c.l.b16 %v4512
        %v4528 = vpack.c.b16 %v4525, %v4524
        %v4529 = vpack.c.b16 %v4527, %v4526
        %v4533 = vsel %vm835, %v4506, 0
        %v4536 = vsel %vm835, %v4507, 0
        %v4539 = vsel %vm835, %v4508, 0
        %4541 = vmatprep.subr.bf16.mxu0 0
        %4542 = vmatpush1.bf16.msra.mxu0 0
        %4543 = vmatprep.subr.bf16.mxu0 0
        %4544 = vmatpush1.bf16.msra.mxu0 0
        %4545 = vmatprep.subr.bf16.mxu0 0
        %4546 = vmatpush1.bf16.msra.mxu0 0
        %4547 = vmatprep.subr.bf16.mxu0 0
        %4548 = vmatpush1.bf16.msra.mxu0 0
        %4549 = vmatprep.subr.bf16.mxu0 0
        %4550 = vmatpush1.bf16.msra.mxu0 0
        %4551 = vmatprep.subr.bf16.mxu0 0
        %4552 = vmatpush1.bf16.msra.mxu0 0
        %4553 = vmatprep.subr.bf16.mxu0 0
        %4554 = vmatpush1.bf16.msra.mxu0 %v4529
        %4555 = vmatprep.subr.bf16.mxu0 0
        %4556 = vmatpush1.bf16.msra.mxu0 %v4528
        %4557 = vmatprep.subr.bf16.mxu0 0
        %4558 = vmatpush2.bf16.msra.mxu0 0
        %4559 = vmatprep.subr.bf16.mxu0 0
        %4560 = vmatpush2.bf16.msra.mxu0 0
        %4561 = vmatprep.subr.bf16.mxu0 0
        %4562 = vmatpush2.bf16.msra.mxu0 0
        %4563 = vmatprep.subr.bf16.mxu0 0
        %4564 = vmatpush2.bf16.msra.mxu0 0
        %4565 = vmatprep.subr.bf16.mxu0 0
        %4566 = vmatpush2.bf16.msra.mxu0 0
        %4567 = vmatprep.subr.bf16.mxu0 0
        %4568 = vmatpush2.bf16.msra.mxu0 0
        %4569 = vmatprep.subr.bf16.mxu0 0
        %4570 = vmatpush2.bf16.msra.mxu0 0
        %4571 = vmatprep.subr.bf16.mxu0 0
        %4572 = vmatpush2.bf16.msra.mxu0 0
        %4573 = vmatprep.mubr.bf16.mxu0 0
        %4574 = vmatmul.mubr.bf16.gmra.mxu0 %v4533
        %v4575 = vpop.f32.mrf.mxu0
        %v4576 = vadd.f32 %v4518, %v4575
        %v4577 = vpop.f32.mrf.mxu0
        %v4578 = vpop.f32.mrf.mxu0
        %v4579 = vadd.f32 %v4518, %v4578
        %v4580 = vpop.f32.mrf.mxu0
        %4581 = vmatprep.mubr.bf16.mxu0 0
        %4582 = vmatmul.mubr.bf16.gmra.mxu0 %v4536
        %v4583 = vpop.f32.mrf.mxu0
        %v4584 = vadd.f32 %v4518, %v4583
        %v4585 = vpop.f32.mrf.mxu0
        %v4586 = vpop.f32.mrf.mxu0
        %v4587 = vadd.f32 %v4518, %v4586
        %v4588 = vpop.f32.mrf.mxu0
        %4589 = vmatprep.mubr.bf16.mxu0 0
        %4590 = vmatmul.mubr.bf16.gmra.mxu0 %v4539
        %v4591 = vpop.f32.mrf.mxu0
        %v4592 = vadd.f32 %v4518, %v4591
        %v4593 = vpop.f32.mrf.mxu0
        %v4594 = vpop.f32.mrf.mxu0
        %v4595 = vadd.f32 %v4518, %v4594
        %v4596 = vpop.f32.mrf.mxu0
        %4597 = vdwg.mxu0
        %v4598 = vpack.c.bf16 %v4579, %v4576
        %v4599 = vpack.c.bf16 %v4587, %v4584
        %v4600 = vpack.c.bf16 %v4595, %v4592
        %v4601 = vmul.bf16 %v4598, 1056980736
        %v4602 = vmul.bf16 %v4599, 1056980736
        %v4603 = vmul.bf16 %v4600, 1056980736
        %v4604 = vmul.bf16 %v4598, %v4598
        %v4605 = vmul.bf16 %v4599, %v4599
        %v4606 = vmul.bf16 %v4600, %v4600
        %v4607 = vmul.bf16 %v4604, %v4598
        %v4608 = vmul.bf16 %v4605, %v4599
        %v4609 = vmul.bf16 %v4606, %v4600
        %v4610 = vmul.bf16 %v4607, 1027030327
        %v4611 = vmul.bf16 %v4608, 1027030327
        %v4612 = vmul.bf16 %v4609, 1027030327
        %v4613 = vadd.bf16 %v4598, %v4610
        %v4614 = vadd.bf16 %v4599, %v4611
        %v4615 = vadd.bf16 %v4600, %v4612
        %v4616 = vmul.bf16 %v4613, 1061961548
        %v4617 = vmul.bf16 %v4614, 1061961548
        %v4618 = vmul.bf16 %v4615, 1061961548
        %v4619 = vtanh.bf16.pop %v4616
        %v4620 = vtanh.bf16.pop %v4617
        %v4621 = vtanh.bf16.pop %v4618
        %v4622 = vadd.bf16 %v4619, 1065369472
        %v4623 = vadd.bf16 %v4620, 1065369472
        %v4624 = vadd.bf16 %v4621, 1065369472
        %v4625 = vmul.bf16 %v4601, %v4622
        %v4626 = vmul.bf16 %v4602, %v4623
        %v4627 = vmul.bf16 %v4603, %v4624
        %v4628 = vld [vmem:[%s15] sm:$0xf]
        %v4629 = vld [vmem:[%s15 + $0x4] sm:$0xf]
        %v4630 = vld [vmem:[%s15 + $0x8] sm:$0xf]
        %v4631 = vld [vmem:[%s15 + $0xc] sm:$0xf]
        %v4632 = vld [vmem:[%s15 + $0x10] sm:$0xf]
        %v4633 = vld [vmem:[%s15 + $0x14] sm:$0xf]
        %v4634 = vld [vmem:[%s15 + $0x18] sm:$0xf]
        %v4635 = vld [vmem:[%s15 + $0x1c] sm:$0xf]
        %v4636 = vld [vmem:[%s15 + $0x20] sm:$0xf]
        %v4637 = vld [vmem:[%s15 + $0x24] sm:$0xf]
        %v4638 = vld [vmem:[%s15 + $0x28] sm:$0xf]
        %v4639 = vld [vmem:[%s15 + $0x2c] sm:$0xf]
        %v4640 = vld [vmem:[%s15 + $0x30] sm:$0xf]
        %v4641 = vld [vmem:[%s15 + $0x34] sm:$0xf]
        %v4642 = vld [vmem:[%s15 + $0x38] sm:$0xf]
        %v4643 = vld [vmem:[%s15 + $0x3c] sm:$0xf]
        %v4644 = vld [vmem:[%s16] sm:$0x1]
        %v4646 = vlaneseq
        %v4647 = vshrl.u32 %v4646, 7
        %v4648 = vsub.s32 0, %v4647
        %v4649 = vrot.slane %v4644, %v4648
        %v4667 = vunpack.c.l.b16 %v4628
        %v4668 = vunpack.c.l.b16 %v4629
        %v4669 = vunpack.c.l.b16 %v4630
        %v4670 = vunpack.c.l.b16 %v4631
        %v4671 = vunpack.c.l.b16 %v4632
        %v4672 = vunpack.c.l.b16 %v4633
        %v4673 = vunpack.c.l.b16 %v4634
        %v4674 = vunpack.c.l.b16 %v4635
        %v4675 = vunpack.c.l.b16 %v4636
        %v4676 = vunpack.c.l.b16 %v4637
        %v4677 = vunpack.c.l.b16 %v4638
        %v4678 = vunpack.c.l.b16 %v4639
        %v4679 = vunpack.c.l.b16 %v4640
        %v4680 = vunpack.c.l.b16 %v4641
        %v4681 = vunpack.c.l.b16 %v4642
        %v4682 = vunpack.c.l.b16 %v4643
        %v4683 = vpack.c.b16 %v4668, %v4667
        %v4684 = vpack.c.b16 %v4670, %v4669
        %v4685 = vpack.c.b16 %v4672, %v4671
        %v4686 = vpack.c.b16 %v4674, %v4673
        %v4687 = vpack.c.b16 %v4676, %v4675
        %v4688 = vpack.c.b16 %v4678, %v4677
        %v4689 = vpack.c.b16 %v4680, %v4679
        %v4690 = vpack.c.b16 %v4682, %v4681
        %4699 = vmatprep.subr.bf16.mxu0 0
        %4700 = vmatpush1.bf16.msra.mxu0 %v4690
        %4701 = vmatprep.subr.bf16.mxu0 0
        %4702 = vmatpush1.bf16.msra.mxu0 %v4689
        %4703 = vmatprep.subr.bf16.mxu0 0
        %4704 = vmatpush1.bf16.msra.mxu0 %v4688
        %4705 = vmatprep.subr.bf16.mxu0 0
        %4706 = vmatpush1.bf16.msra.mxu0 %v4687
        %4707 = vmatprep.subr.bf16.mxu0 0
        %4708 = vmatpush1.bf16.msra.mxu0 %v4686
        %4709 = vmatprep.subr.bf16.mxu0 0
        %4710 = vmatpush1.bf16.msra.mxu0 %v4685
        %4711 = vmatprep.subr.bf16.mxu0 0
        %4712 = vmatpush1.bf16.msra.mxu0 %v4684
        %4713 = vmatprep.subr.bf16.mxu0 0
        %4714 = vmatpush1.bf16.msra.mxu0 %v4683
        %4715 = vmatprep.subr.bf16.mxu0 0
        %4716 = vmatpush2.bf16.msra.mxu0 0
        %4717 = vmatprep.subr.bf16.mxu0 0
        %4718 = vmatpush2.bf16.msra.mxu0 0
        %4719 = vmatprep.subr.bf16.mxu0 0
        %4720 = vmatpush2.bf16.msra.mxu0 0
        %4721 = vmatprep.subr.bf16.mxu0 0
        %4722 = vmatpush2.bf16.msra.mxu0 0
        %4723 = vmatprep.subr.bf16.mxu0 0
        %4724 = vmatpush2.bf16.msra.mxu0 0
        %4725 = vmatprep.subr.bf16.mxu0 0
        %4726 = vmatpush2.bf16.msra.mxu0 0
        %4727 = vmatprep.subr.bf16.mxu0 0
        %4728 = vmatpush2.bf16.msra.mxu0 0
        %4729 = vmatprep.subr.bf16.mxu0 0
        %4730 = vmatpush2.bf16.msra.mxu0 0
        %4731 = vmatprep.mubr.bf16.mxu0 0
        %4732 = vmatmul.mubr.bf16.gmra.mxu0 %v4625
        %v4733 = vpop.f32.mrf.mxu0
        %v4734 = vadd.f32 %v4649, %v4733
        %v4735 = vpop.f32.mrf.mxu0
        %v4736 = vpop.f32.mrf.mxu0
        %v4737 = vadd.f32 %v4649, %v4736
        %v4738 = vpop.f32.mrf.mxu0
        %4739 = vmatprep.mubr.bf16.mxu0 0
        %4740 = vmatmul.mubr.bf16.gmra.mxu0 %v4626
        %v4741 = vpop.f32.mrf.mxu0
        %v4742 = vadd.f32 %v4649, %v4741
        %v4743 = vpop.f32.mrf.mxu0
        %v4744 = vpop.f32.mrf.mxu0
        %v4745 = vadd.f32 %v4649, %v4744
        %v4746 = vpop.f32.mrf.mxu0
        %4747 = vmatprep.mubr.bf16.mxu0 0
        %4748 = vmatmul.mubr.bf16.gmra.mxu0 %v4627
        %v4749 = vpop.f32.mrf.mxu0
        %v4750 = vadd.f32 %v4649, %v4749
        %v4751 = vpop.f32.mrf.mxu0
        %v4752 = vpop.f32.mrf.mxu0
        %v4753 = vadd.f32 %v4649, %v4752
        %v4754 = vpop.f32.mrf.mxu0
        %4755 = vdwg.mxu0
        %v4756 = vadd.f32 %v4500, %v4734
        %v4757 = vadd.f32 %v4501, %v4737
        %v4758 = vadd.f32 %v4502, %v4742
        %v4759 = vadd.f32 %v4503, %v4745
        %v4760 = vadd.f32 %v4504, %v4750
        %v4761 = vadd.f32 %v4505, %v4753
        %v4762 = vld [vmem:[%s17] sm:$0x1]
        %v4763 = vld [vmem:[%s18] sm:$0x1]
        %v4764 = vsel %vm835, %v4756, 0.0
        %4765 = vadd.xlane.f32.xlu0 %v4764
        %v4766 = vpop.xlane.xlu0 %4765
        %v4767 = vsel %vm835, %v4757, 0.0
        %4768 = vadd.xlane.f32.xlu0 %v4767
        %v4769 = vpop.xlane.xlu0 %4768
        %v4770 = vsel %vm835, %v4758, 0.0
        %4771 = vadd.xlane.f32.xlu0 %v4770
        %v4772 = vpop.xlane.xlu0 %4771
        %v4773 = vsel %vm835, %v4759, 0.0
        %4774 = vadd.xlane.f32.xlu0 %v4773
        %v4775 = vpop.xlane.xlu0 %4774
        %v4776 = vsel %vm835, %v4760, 0.0
        %4777 = vadd.xlane.f32.xlu0 %v4776
        %v4778 = vpop.xlane.xlu0 %4777
        %v4779 = vsel %vm835, %v4761, 0.0
        %4780 = vadd.xlane.f32.xlu0 %v4779
        %v4781 = vpop.xlane.xlu0 %4780
        %v4782 = vmul.f32 %v4766, %v4421
        %v4783 = vmul.f32 %v4769, %v4421
        %v4784 = vmul.f32 %v4772, %v4421
        %v4785 = vmul.f32 %v4775, %v4421
        %v4786 = vmul.f32 %v4778, %v4421
        %v4787 = vmul.f32 %v4781, %v4421
        %v4788 = vsub.f32 %v4756, %v4782
        %v4789 = vsub.f32 %v4757, %v4783
        %v4790 = vsub.f32 %v4758, %v4784
        %v4791 = vsub.f32 %v4759, %v4785
        %v4792 = vsub.f32 %v4760, %v4786
        %v4793 = vsub.f32 %v4761, %v4787
        %v4794 = vmul.f32 %v4788, %v4788
        %v4795 = vmul.f32 %v4789, %v4789
        %v4796 = vmul.f32 %v4790, %v4790
        %v4797 = vmul.f32 %v4791, %v4791
        %v4798 = vmul.f32 %v4792, %v4792
        %v4799 = vmul.f32 %v4793, %v4793
        %v4800 = vsel %vm835, %v4794, 0.0
        %4801 = vadd.xlane.f32.xlu0 %v4800
        %v4802 = vpop.xlane.xlu0 %4801
        %v4803 = vsel %vm835, %v4795, 0.0
        %4804 = vadd.xlane.f32.xlu0 %v4803
        %v4805 = vpop.xlane.xlu0 %4804
        %v4806 = vsel %vm835, %v4796, 0.0
        %4807 = vadd.xlane.f32.xlu0 %v4806
        %v4808 = vpop.xlane.xlu0 %4807
        %v4809 = vsel %vm835, %v4797, 0.0
        %4810 = vadd.xlane.f32.xlu0 %v4809
        %v4811 = vpop.xlane.xlu0 %4810
        %v4812 = vsel %vm835, %v4798, 0.0
        %4813 = vadd.xlane.f32.xlu0 %v4812
        %v4814 = vpop.xlane.xlu0 %4813
        %v4815 = vsel %vm835, %v4799, 0.0
        %4816 = vadd.xlane.f32.xlu0 %v4815
        %v4817 = vpop.xlane.xlu0 %4816
        %v4818 = vmul.f32 %v4802, %v4421
        %v4819 = vmul.f32 %v4805, %v4421
        %v4820 = vmul.f32 %v4808, %v4421
        %v4821 = vmul.f32 %v4811, %v4421
        %v4822 = vmul.f32 %v4814, %v4421
        %v4823 = vmul.f32 %v4817, %v4421
        %v4824 = vadd.f32 %v4818, 1e-05
        %v4825 = vadd.f32 %v4819, 1e-05
        %v4826 = vadd.f32 %v4820, 1e-05
        %v4827 = vadd.f32 %v4821, 1e-05
        %v4828 = vadd.f32 %v4822, 1e-05
        %v4829 = vadd.f32 %v4823, 1e-05
        %v4830 = vrsqrt.pop %v4824
        %v4831 = vrsqrt.pop %v4825
        %v4832 = vrsqrt.pop %v4826
        %v4833 = vrsqrt.pop %v4827
        %v4834 = vrsqrt.pop %v4828
        %v4835 = vrsqrt.pop %v4829
        %v4836 = vmul.f32 %v4788, %v4830
        %v4837 = vmul.f32 %v4789, %v4831
        %v4838 = vmul.f32 %v4790, %v4832
        %v4839 = vmul.f32 %v4791, %v4833
        %v4840 = vmul.f32 %v4792, %v4834
        %v4841 = vmul.f32 %v4793, %v4835
        %v4843 = vlaneseq
        %v4844 = vshrl.u32 %v4843, 7
        %v4845 = vsub.s32 0, %v4844
        %v4846 = vrot.slane %v4762, %v4845
        %v4848 = vmul.f32 %v4836, %v4846
        %v4849 = vmul.f32 %v4837, %v4846
        %v4850 = vmul.f32 %v4838, %v4846
        %v4851 = vmul.f32 %v4839, %v4846
        %v4852 = vmul.f32 %v4840, %v4846
        %v4853 = vmul.f32 %v4841, %v4846
        %v4855 = vlaneseq
        %v4856 = vshrl.u32 %v4855, 7
        %v4857 = vsub.s32 0, %v4856
        %v4858 = vrot.slane %v4763, %v4857
        %v4860 = vadd.f32 %v4848, %v4858
        %v4861 = vadd.f32 %v4849, %v4858
        %v4862 = vadd.f32 %v4850, %v4858
        %v4863 = vadd.f32 %v4851, %v4858
        %v4864 = vadd.f32 %v4852, %v4858
        %v4865 = vadd.f32 %v4853, %v4858
        %v4866 = vld [vmem:[%s739] sm:$0xff]
        %v4867 = vld [vmem:[%s739 + $0x8] sm:$0xff]
        %v4868 = vld [vmem:[%s739 + $0x10] sm:$0xff]
        %v4869 = vld [vmem:[%s739 + $0x18] sm:$0xff]
        %v4870 = vld [vmem:[%s739 + $0x20] sm:$0xff]
        %v4871 = vld [vmem:[%s739 + $0x28] sm:$0xff]
        %4873 = vset.pattern.permute.xlu0 0
        %4874 = vperm.xlu0 %4873, %v4866
        %v4875 = vpop.permute.xlu0 %4874
        %4878 = vset.pattern.permute.xlu0 0
        %4879 = vperm.xlu0 %4878, %v4867
        %v4880 = vpop.permute.xlu0 %4879
        %4883 = vset.pattern.permute.xlu0 0
        %4884 = vperm.xlu0 %4883, %v4868
        %v4885 = vpop.permute.xlu0 %4884
        %4888 = vset.pattern.permute.xlu0 0
        %4889 = vperm.xlu0 %4888, %v4869
        %v4890 = vpop.permute.xlu0 %4889
        %4893 = vset.pattern.permute.xlu0 0
        %4894 = vperm.xlu0 %4893, %v4870
        %v4895 = vpop.permute.xlu0 %4894
        %4898 = vset.pattern.permute.xlu0 0
        %4899 = vperm.xlu0 %4898, %v4871
        %v4900 = vpop.permute.xlu0 %4899
        %v4902 = vmul.f32 %v4860, %v4875
        %v4903 = vmul.f32 %v4861, %v4880
        %v4904 = vmul.f32 %v4862, %v4885
        %v4905 = vmul.f32 %v4863, %v4890
        %v4906 = vmul.f32 %v4864, %v4895
        %v4907 = vmul.f32 %v4865, %v4900
        %4908 = vst.msk [vmem:[%s688] sm:$0xff] %vm835, %v4902
        %4909 = vst.msk [vmem:[%s688 + $0x8] sm:$0xff] %vm835, %v4903
        %4910 = vst.msk [vmem:[%s688 + $0x10] sm:$0xff] %vm835, %v4904
        %4911 = vst.msk [vmem:[%s688 + $0x18] sm:$0xff] %vm835, %v4905
        %4912 = vst.msk [vmem:[%s688 + $0x20] sm:$0xff] %vm835, %v4906
        %4913 = vst.msk [vmem:[%s688 + $0x28] sm:$0xff] %vm835, %v4907
        %s4914 = sand.u32 %s457, 1
        %s4915 = sand.u32 %s457, 1
        %s4916 = smul.addr %s4915, 48
        %s4917 = scalar_lea.vmem [#allocation2], %s4916
        // Predicated region
        $region97: #{tpu_custom_call.1} parent=95 // pred_check
          %p4918 = pneg %p467
        $region98: #{tpu_custom_call.1} parent=95 // pred_check_branch
          %4920 = sbr.rel (%p4918) target = $region100
        $region99: #{tpu_custom_call.1} parent=95 // pred_region
          %s4921 = smul.u32 6, %s30
          %s4922 = ssub.s32 25, %s4921
          %p4923 = scmp.lt.s32.totalorder %s4922, 6
          %s4924 = scalar_select %p4923, %s4922, 6
          %s4925 = smul.u32 128, %s4924
          %p4926 = scmp.ne.s32.totalorder 0, %s4925
          %s4927 = smul.addr %s4921, 8
          %s4928 = scalar_lea.vmem %s19, %s4927
          // Predicated region
          $region101: #{tpu_custom_call.1} parent=99 // pred_check
            %p4929 = pneg %p4926
          $region102: #{tpu_custom_call.1} parent=99 // pred_check_branch
            %4931 = sbr.rel (%p4929) target = $region104
          $region103: #{tpu_custom_call.1} parent=99 // pred_region
            // Predicated region
            $region105: #{tpu_custom_call.1} parent=103 // pred_check
              _
            $region106: #{tpu_custom_call.1} parent=103 // pred_check_branch
              %4933 = sbr.rel (0) target = $region108
            $region107: #{tpu_custom_call.1} parent=103 // pred_region
              // Predicated region
              $region127: #{tpu_custom_call.1} parent=107 // pred_check
                _
              $region128: #{tpu_custom_call.1} parent=107 // pred_check_branch
                %4994 = sbr.rel (0) target = $region130
              $region129: #{tpu_custom_call.1} parent=107 // pred_region
                %s4995 = sdiv.u32.pop %s4924, 6
                %s4996 = srem.u32.pop %s4924, 6
                // While loop
                $region131: #{tpu_custom_call.1} parent=129 // loop_pre_header
                  _
                $region132: #{tpu_custom_call.1} parent=129 // loop_header
                  %s4998 = sphi 0, %s5000
                  %p4999 = scmp.ge.s32.totalorder %s4998, %s4995
                  %s5003 = sphi 0, %s5020
                  %s5004 = sphi %s4917, %s5023
                  %s5005 = sphi %s4928, %s5024
                $region133: #{tpu_custom_call.1} parent=129 // loop_header_branch
                  %5002 = sbr.rel (%p4999) target = $region137
                $region134: #{tpu_custom_call.1} parent=129 // loop_body
                  %v5006 = vld [vmem:[%s5004] sm:$0xff]
                  %5007 = vst [vmem:[%s5005] sm:$0xff] %v5006
                  %v5008 = vld [vmem:[%s5004 + $0x8] sm:$0xff]
                  %5009 = vst [vmem:[%s5005 + $0x8] sm:$0xff] %v5008
                  %v5010 = vld [vmem:[%s5004 + $0x10] sm:$0xff]
                  %5011 = vst [vmem:[%s5005 + $0x10] sm:$0xff] %v5010
                  %v5012 = vld [vmem:[%s5004 + $0x18] sm:$0xff]
                  %5013 = vst [vmem:[%s5005 + $0x18] sm:$0xff] %v5012
                  %v5014 = vld [vmem:[%s5004 + $0x20] sm:$0xff]
                  %5015 = vst [vmem:[%s5005 + $0x20] sm:$0xff] %v5014
                  %v5016 = vld [vmem:[%s5004 + $0x28] sm:$0xff]
                  %5017 = vst [vmem:[%s5005 + $0x28] sm:$0xff] %v5016
                  %s5018 = sadd.s32 1, %s5003
                  %p5019 = scmp.ge.s32.totalorder %s5018, %s4995
                  %s5020 = scalar_select %p5019, 0, %s5018
                  %s5021 = smul.u32 %s5020, 48
                  %s5022 = smul.u32 %s5020, 48
                  %s5023 = scalar_lea.vmem %s4917, %s5021 [#allocation2]
                  %s5024 = scalar_lea.vmem %s4928, %s5022
                $region135: #{tpu_custom_call.1} parent=129 // loop_footer
                  %s5000 = sadd.s32 %s4998, 1
                $region136: #{tpu_custom_call.1} parent=129 // loop_footer_branch
                  %4997 = sbr.rel target = $region132
                $region137: #{tpu_custom_call.1} parent=129 // loop_exit
                  _
                %s5025 = sdiv.u32.pop %s4924, 6
                %s5026 = srem.u32.pop %s4924, 6
                %s5027 = smul.u32 %s5025, 6
                %s5028 = smul.u32 8, %s5027
                %s5029 = scalar_lea.vmem %s4917, %s5028 [#allocation2]
                %s5030 = smul.u32 8, %s5027
                %s5031 = scalar_lea.vmem %s4928, %s5030
                // While loop
                $region138: #{tpu_custom_call.1} parent=129 // loop_pre_header
                  _
                $region139: #{tpu_custom_call.1} parent=129 // loop_header
                  %s5033 = sphi 0, %s5035
                  %p5034 = scmp.ge.s32.totalorder %s5033, %s5026
                  %s5038 = sphi 0, %s5045
                  %s5039 = sphi %s5029, %s5048
                  %s5040 = sphi %s5031, %s5049
                $region140: #{tpu_custom_call.1} parent=129 // loop_header_branch
                  %5037 = sbr.rel (%p5034) target = $region144
                $region141: #{tpu_custom_call.1} parent=129 // loop_body
                  %v5041 = vld [vmem:[%s5039] sm:$0xff]
                  %5042 = vst [vmem:[%s5040] sm:$0xff] %v5041
                  %s5043 = sadd.s32 1, %s5038
                  %p5044 = scmp.ge.s32.totalorder %s5043, %s5026
                  %s5045 = scalar_select %p5044, 0, %s5043
                  %s5046 = smul.u32 %s5045, 8
                  %s5047 = smul.u32 %s5045, 8
                  %s5048 = scalar_lea.vmem %s5029, %s5046 [#allocation2]
                  %s5049 = scalar_lea.vmem %s5031, %s5047
                $region142: #{tpu_custom_call.1} parent=129 // loop_footer
                  %s5035 = sadd.s32 %s5033, 1
                $region143: #{tpu_custom_call.1} parent=129 // loop_footer_branch
                  %5032 = sbr.rel target = $region139
                $region144: #{tpu_custom_call.1} parent=129 // loop_exit
                  _
              $region130: #{tpu_custom_call.1} parent=107 // pred_fallthru
                _
              // Predicated region
              $region145: #{tpu_custom_call.1} parent=107 // pred_check
                _
              $region146: #{tpu_custom_call.1} parent=107 // pred_check_branch
                %5051 = sbr.rel target = $region148
              $region147: #{tpu_custom_call.1} parent=107 // pred_region
                _
              $region148: #{tpu_custom_call.1} parent=107 // pred_fallthru
                _
            $region108: #{tpu_custom_call.1} parent=103 // pred_fallthru
              _
            // Predicated region
            $region109: #{tpu_custom_call.1} parent=103 // pred_check
              _
            $region110: #{tpu_custom_call.1} parent=103 // pred_check_branch
              %4935 = sbr.rel target = $region112
            $region111: #{tpu_custom_call.1} parent=103 // pred_region
              %s4937 = ssub.s32 256, 1
              %s4938 = sdiv.u32.pop %s4924, 6
              %s4939 = srem.u32.pop %s4924, 6
              // While loop
              $region113: #{tpu_custom_call.1} parent=111 // loop_pre_header
                _
              $region114: #{tpu_custom_call.1} parent=111 // loop_header
                %s4941 = sphi 0, %s4943
                %p4942 = scmp.ge.s32.totalorder %s4941, %s4938
                %s4946 = sphi 0, %s4963
                %s4947 = sphi %s4917, %s4966
                %s4948 = sphi %s4928, %s4967
              $region115: #{tpu_custom_call.1} parent=111 // loop_header_branch
                %4945 = sbr.rel (%p4942) target = $region119
              $region116: #{tpu_custom_call.1} parent=111 // loop_body
                %v4949 = vld [vmem:[%s4947] sm:%s4937]
                %4950 = vst [vmem:[%s4948] sm:%s4937] %v4949
                %v4951 = vld [vmem:[%s4947 + $0x8] sm:%s4937]
                %4952 = vst [vmem:[%s4948 + $0x8] sm:%s4937] %v4951
                %v4953 = vld [vmem:[%s4947 + $0x10] sm:%s4937]
                %4954 = vst [vmem:[%s4948 + $0x10] sm:%s4937] %v4953
                %v4955 = vld [vmem:[%s4947 + $0x18] sm:%s4937]
                %4956 = vst [vmem:[%s4948 + $0x18] sm:%s4937] %v4955
                %v4957 = vld [vmem:[%s4947 + $0x20] sm:%s4937]
                %4958 = vst [vmem:[%s4948 + $0x20] sm:%s4937] %v4957
                %v4959 = vld [vmem:[%s4947 + $0x28] sm:%s4937]
                %4960 = vst [vmem:[%s4948 + $0x28] sm:%s4937] %v4959
                %s4961 = sadd.s32 1, %s4946
                %p4962 = scmp.ge.s32.totalorder %s4961, %s4938
                %s4963 = scalar_select %p4962, 0, %s4961
                %s4964 = smul.u32 %s4963, 48
                %s4965 = smul.u32 %s4963, 48
                %s4966 = scalar_lea.vmem %s4917, %s4964 [#allocation2]
                %s4967 = scalar_lea.vmem %s4928, %s4965
              $region117: #{tpu_custom_call.1} parent=111 // loop_footer
                %s4943 = sadd.s32 %s4941, 1
              $region118: #{tpu_custom_call.1} parent=111 // loop_footer_branch
                %4940 = sbr.rel target = $region114
              $region119: #{tpu_custom_call.1} parent=111 // loop_exit
                _
              %s4968 = sdiv.u32.pop %s4924, 6
              %s4969 = srem.u32.pop %s4924, 6
              %s4970 = smul.u32 %s4968, 6
              %s4971 = smul.u32 8, %s4970
              %s4972 = scalar_lea.vmem %s4917, %s4971 [#allocation2]
              %s4973 = smul.u32 8, %s4970
              %s4974 = scalar_lea.vmem %s4928, %s4973
              // While loop
              $region120: #{tpu_custom_call.1} parent=111 // loop_pre_header
                _
              $region121: #{tpu_custom_call.1} parent=111 // loop_header
                %s4976 = sphi 0, %s4978
                %p4977 = scmp.ge.s32.totalorder %s4976, %s4969
                %s4981 = sphi 0, %s4988
                %s4982 = sphi %s4972, %s4991
                %s4983 = sphi %s4974, %s4992
              $region122: #{tpu_custom_call.1} parent=111 // loop_header_branch
                %4980 = sbr.rel (%p4977) target = $region126
              $region123: #{tpu_custom_call.1} parent=111 // loop_body
                %v4984 = vld [vmem:[%s4982] sm:%s4937]
                %4985 = vst [vmem:[%s4983] sm:%s4937] %v4984
                %s4986 = sadd.s32 1, %s4981
                %p4987 = scmp.ge.s32.totalorder %s4986, %s4969
                %s4988 = scalar_select %p4987, 0, %s4986
                %s4989 = smul.u32 %s4988, 8
                %s4990 = smul.u32 %s4988, 8
                %s4991 = scalar_lea.vmem %s4972, %s4989 [#allocation2]
                %s4992 = scalar_lea.vmem %s4974, %s4990
              $region124: #{tpu_custom_call.1} parent=111 // loop_footer
                %s4978 = sadd.s32 %s4976, 1
              $region125: #{tpu_custom_call.1} parent=111 // loop_footer_branch
                %4975 = sbr.rel target = $region121
              $region126: #{tpu_custom_call.1} parent=111 // loop_exit
                _
            $region112: #{tpu_custom_call.1} parent=103 // pred_fallthru
              _
          $region104: #{tpu_custom_call.1} parent=99 // pred_fallthru
            _
          %5052 = vnop
        $region100: #{tpu_custom_call.1} parent=95 // pred_fallthru
          _
      $region96: #{tpu_custom_call.1} parent=5 // pred_fallthru
        _
      %p5053 = scmp.le.s32.totalorder 2, %s25
      // Predicated region
      $region149: #{tpu_custom_call.1} parent=5 // pred_check
        %p5054 = pneg %p5053
      $region150: #{tpu_custom_call.1} parent=5 // pred_check_branch
        %5056 = sbr.rel (%p5054) target = $region152
      $region151: #{tpu_custom_call.1} parent=5 // pred_region
        %s5057 = ssub.s32 %s25, 2
        // Predicated region
        $region153: #{tpu_custom_call.1} parent=151 // pred_check
          %p5058 = pneg %p473
        $region154: #{tpu_custom_call.1} parent=151 // pred_check_branch
          %5060 = sbr.rel (%p5058) target = $region156
        $region155: #{tpu_custom_call.1} parent=151 // pred_region
          %s5061 = sand.u32 %s458, 1
          %s5062 = sand.u32 %s458, 1
          %s5063 = smul.addr %s5062, 48
          %s5064 = scalar_lea.vmem [#allocation2], %s5063
        $region156: #{tpu_custom_call.1} parent=151 // pred_fallthru
          _
      $region152: #{tpu_custom_call.1} parent=5 // pred_fallthru
        _
    $region6: #{tpu_custom_call.1} parent=1 // loop_footer
      %s29 = sadd.s32 1, %s25
    $region7: #{tpu_custom_call.1} parent=1 // loop_footer_branch
      %24 = sbr.rel target = $region3
    $region8: #{tpu_custom_call.1} parent=1 // loop_exit
      _

</llo_original>
